<compile_context>
chip_gen: v7x
topology: tpu7x:2x2x1
jax: 0.10.0
libtpu: 0.0.40
codegen_flags: <defaults>
</compile_context>

<pallas_src>
import functools

import jax
import jax.numpy as jnp
from jax.experimental import pallas as pl
from jax.experimental.pallas import tpu as pltpu


_SPATIAL_ALIGN = 16   # sublane-tile alignment that covers both f32 (8) and bf16 (16)


def _round_up(x, m):
    return ((x + m - 1) // m) * m


def _conv_shift_gemm_kernel(x_ref, w_ref, b_ref, o_ref, acc_ref, *, K, Wq):
    """One image: out = relu(bias + sum_ki shift(x, ki*Wq) @ W[ki]).

    x_ref  : [S, K*Cin_p]          flattened padded image (compute dtype)
    w_ref  : [K, K*Cin_p, Cout_p]  per-ki weight matrices (compute dtype)
    b_ref  : [1, Cout_p]           float32 bias
    o_ref  : [M, Cout_p]           M = H1 * Wq   (stride-1 rows x aligned width)
    acc_ref: VMEM scratch [M, Cout_p] float32 accumulator
    """
    M = o_ref.shape[0]
    for ki in range(K):
        d = ki * Wq                          # static, tile-aligned sublane offset
        x_win = x_ref[d:d + M, :]            # [M, K*Cin_p]
        prod = jnp.dot(x_win, w_ref[ki], preferred_element_type=jnp.float32)
        if ki == 0:
            acc_ref[...] = prod
        else:
            acc_ref[...] += prod
    # Epilogue exactly once: bias + ReLU in f32, cast, lane-dense store.
    o_ref[...] = jnp.maximum(acc_ref[...] + b_ref[...], 0.0).astype(o_ref.dtype)


def _conv_layer_pallas(x_flat, w_col, bias_p, *, K, Wq, M, out_dtype):
    """x_flat: [N, S, K*Cin_p], w_col: [K, K*Cin_p, Cout_p], bias_p: [1, Cout_p]."""
    N, S, KC = x_flat.shape
    _, _, Cout_p = w_col.shape

    kernel = functools.partial(_conv_shift_gemm_kernel, K=K, Wq=Wq)

    flops = 2 * N * K * M * KC * Cout_p
    bytes_accessed = (int(x_flat.size) * x_flat.dtype.itemsize
                      + int(w_col.size) * w_col.dtype.itemsize
                      + int(bias_p.size) * bias_p.dtype.itemsize
                      + N * M * Cout_p * jnp.dtype(out_dtype).itemsize)

    return pl.pallas_call(
        kernel,
        out_shape=jax.ShapeDtypeStruct((N, M, Cout_p), out_dtype),
        grid_spec=pltpu.PrefetchScalarGridSpec(
            num_scalar_prefetch=0,
            grid=(N,),
            in_specs=[
                # per-image flattened activation (re-fetched only when n changes)
                pl.BlockSpec((None, S, KC), lambda n: (n, 0, 0)),
                # full weight stack, constant block index -> fetched once
                pl.BlockSpec((K, KC, Cout_p), lambda n: (0, 0, 0)),
                pl.BlockSpec((1, Cout_p), lambda n: (0, 0)),
            ],
            out_specs=pl.BlockSpec((None, M, Cout_p), lambda n: (n, 0, 0)),
            scratch_shapes=[pltpu.VMEM((M, Cout_p), jnp.float32)],
        ),
        compiler_params=pltpu.CompilerParams(
            dimension_semantics=("parallel",),   # shard batch across v7x cores
        ),
        cost_estimate=pl.CostEstimate(
            flops=flops, transcendentals=0, bytes_accessed=bytes_accessed),
    )(x_flat, w_col, bias_p)


def _conv2d_relu_nhwc(x, weight, bias, *, stride, pad, compute_dtype):
    """One Conv2d(bias=True)+ReLU on a channels-padded NHWC activation.

    x      : [N, H, W, Cin_p] (compute dtype, channels already zero-padded)
    weight : [Cout, Cin, K, K] (true channel counts), bias: [Cout]
    Returns ([N, H_out, W_out, Cout_p] NHWC, true Cout).
    """
    N, H, W, Cin_p = x.shape
    Cout, Cin, K, _ = weight.shape
    Cout_p = _round_up(Cout, 128)

    Hp, Wp = H + 2 * pad, W + 2 * pad
    H1, W1 = Hp - K + 1, Wp - K + 1          # stride-1 output extents
    Wq = _round_up(W1, _SPATIAL_ALIGN)       # aligned width -> aligned row shifts
    M = H1 * Wq
    S = Hp * Wq

    # Spatial zero pad (NHWC), fold the kj shifts into the channel dim.
    xp = jnp.pad(x, ((0, 0), (pad, pad), (pad, pad), (0, 0)))
    cols = [xp[:, :, kj:kj + W1, :] for kj in range(K)]      # each [N, Hp, W1, Cin_p]
    x_wide = jnp.concatenate(cols, axis=-1)                  # [N, Hp, W1, K*Cin_p]
    x_wide = jnp.pad(x_wide, ((0, 0), (0, 0), (0, Wq - W1), (0, 0)))
    x_flat = x_wide.reshape(N, S, K * Cin_p)

    # [Cout, Cin, K, K] -> [K(ki), K(kj), Cin_p, Cout_p] -> [K, K*Cin_p, Cout_p].
    w_col = jnp.transpose(weight, (2, 3, 1, 0))              # [K, K, Cin, Cout]
    w_col = jnp.pad(w_col, ((0, 0), (0, 0),
                            (0, Cin_p - Cin), (0, Cout_p - Cout)))
    w_col = w_col.reshape(K, K * Cin_p, Cout_p).astype(compute_dtype)
    b_p = jnp.pad(bias, (0, Cout_p - Cout)).astype(jnp.float32).reshape(1, Cout_p)

    out_flat = _conv_layer_pallas(x_flat, w_col, b_p, K=K, Wq=Wq, M=M,
                                  out_dtype=compute_dtype)   # [N, M, Cout_p]

    y = out_flat.reshape(N, H1, Wq, Cout_p)[:, :, :W1, :]    # drop width padding
    if stride > 1:
        y = y[:, ::stride, ::stride, :]                      # exact subsample
    return y, Cout


def conv_block_forward(x_nchw, params, *, stride, pad, compute_dtype=jnp.bfloat16):
    """ConvBlock forward: NCHW in, NCHW out (matches the PyTorch module)."""
    # Single NCHW -> NHWC transpose at block entry.
    x = jnp.transpose(x_nchw, (0, 2, 3, 1)).astype(compute_dtype)
    cin = x.shape[-1]
    cin_p = _round_up(cin, 8)                # align the first contraction group
    if cin_p != cin:
        x = jnp.pad(x, ((0, 0), (0, 0), (0, 0), (0, cin_p - cin)))

    true_cout = cin
    for w, b in params:
        x, true_cout = _conv2d_relu_nhwc(x, w, b, stride=stride, pad=pad,
                                         compute_dtype=compute_dtype)

    out = x[..., :true_cout]                 # drop channel padding at block exit
    return jnp.transpose(out, (0, 3, 1, 2)).astype(x_nchw.dtype)   # NHWC -> NCHW once


def init_conv_block_params(key, kernel_size, prev_channel, channel_list):
    """Deterministic parameter init (uniform, PyTorch-like fan-in bound)."""
    params = []
    cin = prev_channel
    for cout in channel_list:
        key, kw, kb = jax.random.split(key, 3)
        fan_in = cin * kernel_size * kernel_size
        bound = 1.0 / jnp.sqrt(fan_in)
        w = jax.random.uniform(kw, (cout, cin, kernel_size, kernel_size),
                               jnp.float32, -bound, bound)
        b = jax.random.uniform(kb, (cout,), jnp.float32, -bound, bound)
        params.append((w, b))
        cin = cout
    return params


def _reference_forward(x, params, *, stride, pad):
    # Pure-XLA reference for correctness checks.
    out = x
    for w, b in params:
        out = jax.lax.conv_general_dilated(
            out, w, window_strides=(stride, stride),
            padding=[(pad, pad), (pad, pad)],
            dimension_numbers=("NCHW", "OIHW", "NCHW"))
        out = jnp.maximum(out + b[None, :, None, None], 0.0)
    return out


if __name__ == "__main__":
    kernel_size, stride, pad = 3, 1, 1
    prev_channel = 4
    channel_list = [8, 16]

    key = jax.random.PRNGKey(0)
    key, kx = jax.random.split(key)
    x = jax.random.normal(kx, (2, prev_channel, 16, 16), jnp.float32)
    params = init_conv_block_params(key, kernel_size, prev_channel, channel_list)

    ref = _reference_forward(x, params, stride=stride, pad=pad)

    # float32 mode: exactness check of the fused shifted-GEMM algorithm.
    fwd_f32 = jax.jit(functools.partial(conv_block_forward, stride=stride, pad=pad,
                                        compute_dtype=jnp.float32))
    out_f32 = fwd_f32(x, params)
    jax.block_until_ready(out_f32)
    assert out_f32.shape == (2, channel_list[-1], 16, 16)
    assert jnp.allclose(out_f32, ref, atol=1e-4, rtol=1e-4)

    # bf16 operands / f32 accumulation: the performance configuration.
    fwd_bf16 = jax.jit(functools.partial(conv_block_forward, stride=stride, pad=pad,
                                         compute_dtype=jnp.bfloat16))
    out_bf16 = fwd_bf16(x, params)
    jax.block_until_ready(out_bf16)
    assert out_bf16.shape == (2, channel_list[-1], 16, 16)
    assert jnp.allclose(out_bf16.astype(jnp.float32), ref, atol=5e-2, rtol=5e-2)

    print("KERNEL_OK")
</pallas_src>

<mosaic_0001>
module attributes {stable_mosaic.version = 11 : i64} {
  func.func @_conv_shift_gemm_kernel(%arg0: i32, %arg1: memref<1x288x24xf32, #tpu.memory_space<vmem>>, %arg2: memref<3x24x128xf32, #tpu.memory_space<vmem>>, %arg3: memref<1x128xf32, #tpu.memory_space<vmem>>, %arg4: memref<1x256x128xf32, #tpu.memory_space<vmem>>, %arg5: memref<256x128xf32, #tpu.memory_space<vmem>>) attributes {dimension_semantics = [#tpu.dimension_semantics<parallel>], iteration_bounds = array<i64: 2>, scalar_prefetch = 0 : i64, scratch_operands = 1 : i64, tpu.core_type = #tpu.core_type<tc>, window_params = [{transform_indices = @transform_0, window_bounds = array<i64: 1, 288, 24>}, {pipeline_mode = #tpu.pipeline_mode<synchronous>, transform_indices = @transform_1, window_bounds = array<i64: 3, 24, 128>}, {pipeline_mode = #tpu.pipeline_mode<synchronous>, transform_indices = @transform_2, window_bounds = array<i64: 1, 128>}, {transform_indices = @transform_3, window_bounds = array<i64: 1, 256, 128>}]} {
    %c0 = arith.constant 0 : index
    %c0_0 = arith.constant 0 : index
    %c0_1 = arith.constant 0 : index
    %0 = vector.load %arg1[%c0, %c0_0, %c0_1] : memref<1x288x24xf32, #tpu.memory_space<vmem>>, vector<1x256x24xf32>
    %1 = vector.shape_cast %0 : vector<1x256x24xf32> to vector<256x24xf32>
    %c0_2 = arith.constant 0 : index
    %c0_3 = arith.constant 0 : index
    %c0_4 = arith.constant 0 : index
    %2 = vector.load %arg2[%c0_2, %c0_3, %c0_4] : memref<3x24x128xf32, #tpu.memory_space<vmem>>, vector<1x24x128xf32>
    %3 = vector.shape_cast %2 : vector<1x24x128xf32> to vector<24x128xf32>
    %cst = arith.constant dense<0.000000e+00> : vector<256x128xf32>
    %4 = tpu.matmul %1, %3, %cst {dimension_numbers = #tpu.dot_dimension_numbers<[1], [0], [0], [1], [0, 0, 1, 1], [], []>} : vector<256x24xf32>, vector<24x128xf32>, vector<256x128xf32> -> vector<256x128xf32>
    %c0_5 = arith.constant 0 : index
    %c0_6 = arith.constant 0 : index
    %5 = vector.load %arg5[%c0_5, %c0_6] : memref<256x128xf32, #tpu.memory_space<vmem>>, vector<256x128xf32>
    tpu.vector_store %arg5[%c0_5, %c0_6], %4 {strides = array<i32>} : memref<256x128xf32, #tpu.memory_space<vmem>>, vector<256x128xf32>,
    %c0_7 = arith.constant 0 : index
    %c16 = arith.constant 16 : index
    %c0_8 = arith.constant 0 : index
    %6 = vector.load %arg1[%c0_7, %c16, %c0_8] : memref<1x288x24xf32, #tpu.memory_space<vmem>>, vector<1x256x24xf32>
    %7 = vector.shape_cast %6 : vector<1x256x24xf32> to vector<256x24xf32>
    %c1 = arith.constant 1 : index
    %c0_9 = arith.constant 0 : index
    %c0_10 = arith.constant 0 : index
    %8 = vector.load %arg2[%c1, %c0_9, %c0_10] : memref<3x24x128xf32, #tpu.memory_space<vmem>>, vector<1x24x128xf32>
    %9 = vector.shape_cast %8 : vector<1x24x128xf32> to vector<24x128xf32>
    %cst_11 = arith.constant dense<0.000000e+00> : vector<256x128xf32>
    %10 = tpu.matmul %7, %9, %cst_11 {dimension_numbers = #tpu.dot_dimension_numbers<[1], [0], [0], [1], [0, 0, 1, 1], [], []>} : vector<256x24xf32>, vector<24x128xf32>, vector<256x128xf32> -> vector<256x128xf32>
    %c0_12 = arith.constant 0 : index
    %c0_13 = arith.constant 0 : index
    %11 = vector.load %arg5[%c0_12, %c0_13] : memref<256x128xf32, #tpu.memory_space<vmem>>, vector<256x128xf32>
    %12 = arith.addf %11, %10 : vector<256x128xf32>
    %c0_14 = arith.constant 0 : index
    %c0_15 = arith.constant 0 : index
    %13 = vector.load %arg5[%c0_14, %c0_15] : memref<256x128xf32, #tpu.memory_space<vmem>>, vector<256x128xf32>
    tpu.vector_store %arg5[%c0_14, %c0_15], %12 {strides = array<i32>} : memref<256x128xf32, #tpu.memory_space<vmem>>, vector<256x128xf32>,
    %c0_16 = arith.constant 0 : index
    %c32 = arith.constant 32 : index
    %c0_17 = arith.constant 0 : index
    %14 = vector.load %arg1[%c0_16, %c32, %c0_17] : memref<1x288x24xf32, #tpu.memory_space<vmem>>, vector<1x256x24xf32>
    %15 = vector.shape_cast %14 : vector<1x256x24xf32> to vector<256x24xf32>
    %c2 = arith.constant 2 : index
    %c0_18 = arith.constant 0 : index
    %c0_19 = arith.constant 0 : index
    %16 = vector.load %arg2[%c2, %c0_18, %c0_19] : memref<3x24x128xf32, #tpu.memory_space<vmem>>, vector<1x24x128xf32>
    %17 = vector.shape_cast %16 : vector<1x24x128xf32> to vector<24x128xf32>
    %cst_20 = arith.constant dense<0.000000e+00> : vector<256x128xf32>
    %18 = tpu.matmul %15, %17, %cst_20 {dimension_numbers = #tpu.dot_dimension_numbers<[1], [0], [0], [1], [0, 0, 1, 1], [], []>} : vector<256x24xf32>, vector<24x128xf32>, vector<256x128xf32> -> vector<256x128xf32>
    %c0_21 = arith.constant 0 : index
    %c0_22 = arith.constant 0 : index
    %19 = vector.load %arg5[%c0_21, %c0_22] : memref<256x128xf32, #tpu.memory_space<vmem>>, vector<256x128xf32>
    %20 = arith.addf %19, %18 : vector<256x128xf32>
    %c0_23 = arith.constant 0 : index
    %c0_24 = arith.constant 0 : index
    %21 = vector.load %arg5[%c0_23, %c0_24] : memref<256x128xf32, #tpu.memory_space<vmem>>, vector<256x128xf32>
    tpu.vector_store %arg5[%c0_23, %c0_24], %20 {strides = array<i32>} : memref<256x128xf32, #tpu.memory_space<vmem>>, vector<256x128xf32>,
    %c0_25 = arith.constant 0 : index
    %c0_26 = arith.constant 0 : index
    %22 = vector.load %arg5[%c0_25, %c0_26] : memref<256x128xf32, #tpu.memory_space<vmem>>, vector<256x128xf32>
    %c0_27 = arith.constant 0 : index
    %c0_28 = arith.constant 0 : index
    %23 = vector.load %arg3[%c0_27, %c0_28] : memref<1x128xf32, #tpu.memory_space<vmem>>, vector<1x128xf32>
    %24 = vector.broadcast %23 : vector<1x128xf32> to vector<256x128xf32>
    %25 = arith.addf %22, %24 : vector<256x128xf32>
    %cst_29 = arith.constant 0.000000e+00 : f32
    %26 = vector.broadcast %cst_29 : f32 to vector<256x128xf32>
    %27 = arith.maximumf %25, %26 : vector<256x128xf32>
    %c0_30 = arith.constant 0 : index
    %c0_31 = arith.constant 0 : index
    %c0_32 = arith.constant 0 : index
    %28 = vector.load %arg4[%c0_30, %c0_31, %c0_32] : memref<1x256x128xf32, #tpu.memory_space<vmem>>, vector<1x256x128xf32>
    %29 = vector.shape_cast %28 : vector<1x256x128xf32> to vector<256x128xf32>
    %30 = vector.shape_cast %27 : vector<256x128xf32> to vector<1x256x128xf32>
    tpu.vector_store %arg4[%c0_30, %c0_31, %c0_32], %30 {strides = array<i32>} : memref<1x256x128xf32, #tpu.memory_space<vmem>>, vector<1x256x128xf32>,
    return
  }
  func.func @transform_0(%arg0: i32) -> (i32, i32, i32) {
    %c0_i32 = arith.constant 0 : i32
    %c0_i32_0 = arith.constant 0 : i32
    %c0_i32_1 = arith.constant 0 : i32
    return %arg0, %c0_i32, %c0_i32_0 : i32, i32, i32
  }
  func.func @transform_1(%arg0: i32) -> (i32, i32, i32) {
    %c0_i32 = arith.constant 0 : i32
    %c0_i32_0 = arith.constant 0 : i32
    %c0_i32_1 = arith.constant 0 : i32
    %c0_i32_2 = arith.constant 0 : i32
    return %c0_i32, %c0_i32_0, %c0_i32_1 : i32, i32, i32
  }
  func.func @transform_2(%arg0: i32) -> (i32, i32) {
    %c0_i32 = arith.constant 0 : i32
    %c0_i32_0 = arith.constant 0 : i32
    %c0_i32_1 = arith.constant 0 : i32
    return %c0_i32, %c0_i32_0 : i32, i32
  }
  func.func @transform_3(%arg0: i32) -> (i32, i32, i32) {
    %c0_i32 = arith.constant 0 : i32
    %c0_i32_0 = arith.constant 0 : i32
    %c0_i32_1 = arith.constant 0 : i32
    return %arg0, %c0_i32, %c0_i32_0 : i32, i32, i32
  }
}

module attributes {stable_mosaic.version = 11 : i64} {
  func.func @_conv_shift_gemm_kernel(%arg0: i32, %arg1: memref<1x288x384xf32, #tpu.memory_space<vmem>>, %arg2: memref<3x384x128xf32, #tpu.memory_space<vmem>>, %arg3: memref<1x128xf32, #tpu.memory_space<vmem>>, %arg4: memref<1x256x128xf32, #tpu.memory_space<vmem>>, %arg5: memref<256x128xf32, #tpu.memory_space<vmem>>) attributes {dimension_semantics = [#tpu.dimension_semantics<parallel>], iteration_bounds = array<i64: 2>, scalar_prefetch = 0 : i64, scratch_operands = 1 : i64, tpu.core_type = #tpu.core_type<tc>, window_params = [{transform_indices = @transform_0, window_bounds = array<i64: 1, 288, 384>}, {pipeline_mode = #tpu.pipeline_mode<synchronous>, transform_indices = @transform_1, window_bounds = array<i64: 3, 384, 128>}, {pipeline_mode = #tpu.pipeline_mode<synchronous>, transform_indices = @transform_2, window_bounds = array<i64: 1, 128>}, {transform_indices = @transform_3, window_bounds = array<i64: 1, 256, 128>}]} {
    %c0 = arith.constant 0 : index
    %c0_0 = arith.constant 0 : index
    %c0_1 = arith.constant 0 : index
    %0 = vector.load %arg1[%c0, %c0_0, %c0_1] : memref<1x288x384xf32, #tpu.memory_space<vmem>>, vector<1x256x384xf32>
    %1 = vector.shape_cast %0 : vector<1x256x384xf32> to vector<256x384xf32>
    %c0_2 = arith.constant 0 : index
    %c0_3 = arith.constant 0 : index
    %c0_4 = arith.constant 0 : index
    %2 = vector.load %arg2[%c0_2, %c0_3, %c0_4] : memref<3x384x128xf32, #tpu.memory_space<vmem>>, vector<1x384x128xf32>
    %3 = vector.shape_cast %2 : vector<1x384x128xf32> to vector<384x128xf32>
    %cst = arith.constant dense<0.000000e+00> : vector<256x128xf32>
    %4 = tpu.matmul %1, %3, %cst {dimension_numbers = #tpu.dot_dimension_numbers<[1], [0], [0], [1], [0, 0, 1, 1], [], []>} : vector<256x384xf32>, vector<384x128xf32>, vector<256x128xf32> -> vector<256x128xf32>
    %c0_5 = arith.constant 0 : index
    %c0_6 = arith.constant 0 : index
    %5 = vector.load %arg5[%c0_5, %c0_6] : memref<256x128xf32, #tpu.memory_space<vmem>>, vector<256x128xf32>
    tpu.vector_store %arg5[%c0_5, %c0_6], %4 {strides = array<i32>} : memref<256x128xf32, #tpu.memory_space<vmem>>, vector<256x128xf32>,
    %c0_7 = arith.constant 0 : index
    %c16 = arith.constant 16 : index
    %c0_8 = arith.constant 0 : index
    %6 = vector.load %arg1[%c0_7, %c16, %c0_8] : memref<1x288x384xf32, #tpu.memory_space<vmem>>, vector<1x256x384xf32>
    %7 = vector.shape_cast %6 : vector<1x256x384xf32> to vector<256x384xf32>
    %c1 = arith.constant 1 : index
    %c0_9 = arith.constant 0 : index
    %c0_10 = arith.constant 0 : index
    %8 = vector.load %arg2[%c1, %c0_9, %c0_10] : memref<3x384x128xf32, #tpu.memory_space<vmem>>, vector<1x384x128xf32>
    %9 = vector.shape_cast %8 : vector<1x384x128xf32> to vector<384x128xf32>
    %cst_11 = arith.constant dense<0.000000e+00> : vector<256x128xf32>
    %10 = tpu.matmul %7, %9, %cst_11 {dimension_numbers = #tpu.dot_dimension_numbers<[1], [0], [0], [1], [0, 0, 1, 1], [], []>} : vector<256x384xf32>, vector<384x128xf32>, vector<256x128xf32> -> vector<256x128xf32>
    %c0_12 = arith.constant 0 : index
    %c0_13 = arith.constant 0 : index
    %11 = vector.load %arg5[%c0_12, %c0_13] : memref<256x128xf32, #tpu.memory_space<vmem>>, vector<256x128xf32>
    %12 = arith.addf %11, %10 : vector<256x128xf32>
    %c0_14 = arith.constant 0 : index
    %c0_15 = arith.constant 0 : index
    %13 = vector.load %arg5[%c0_14, %c0_15] : memref<256x128xf32, #tpu.memory_space<vmem>>, vector<256x128xf32>
    tpu.vector_store %arg5[%c0_14, %c0_15], %12 {strides = array<i32>} : memref<256x128xf32, #tpu.memory_space<vmem>>, vector<256x128xf32>,
    %c0_16 = arith.constant 0 : index
    %c32 = arith.constant 32 : index
    %c0_17 = arith.constant 0 : index
    %14 = vector.load %arg1[%c0_16, %c32, %c0_17] : memref<1x288x384xf32, #tpu.memory_space<vmem>>, vector<1x256x384xf32>
    %15 = vector.shape_cast %14 : vector<1x256x384xf32> to vector<256x384xf32>
    %c2 = arith.constant 2 : index
    %c0_18 = arith.constant 0 : index
    %c0_19 = arith.constant 0 : index
    %16 = vector.load %arg2[%c2, %c0_18, %c0_19] : memref<3x384x128xf32, #tpu.memory_space<vmem>>, vector<1x384x128xf32>
    %17 = vector.shape_cast %16 : vector<1x384x128xf32> to vector<384x128xf32>
    %cst_20 = arith.constant dense<0.000000e+00> : vector<256x128xf32>
    %18 = tpu.matmul %15, %17, %cst_20 {dimension_numbers = #tpu.dot_dimension_numbers<[1], [0], [0], [1], [0, 0, 1, 1], [], []>} : vector<256x384xf32>, vector<384x128xf32>, vector<256x128xf32> -> vector<256x128xf32>
    %c0_21 = arith.constant 0 : index
    %c0_22 = arith.constant 0 : index
    %19 = vector.load %arg5[%c0_21, %c0_22] : memref<256x128xf32, #tpu.memory_space<vmem>>, vector<256x128xf32>
    %20 = arith.addf %19, %18 : vector<256x128xf32>
    %c0_23 = arith.constant 0 : index
    %c0_24 = arith.constant 0 : index
    %21 = vector.load %arg5[%c0_23, %c0_24] : memref<256x128xf32, #tpu.memory_space<vmem>>, vector<256x128xf32>
    tpu.vector_store %arg5[%c0_23, %c0_24], %20 {strides = array<i32>} : memref<256x128xf32, #tpu.memory_space<vmem>>, vector<256x128xf32>,
    %c0_25 = arith.constant 0 : index
    %c0_26 = arith.constant 0 : index
    %22 = vector.load %arg5[%c0_25, %c0_26] : memref<256x128xf32, #tpu.memory_space<vmem>>, vector<256x128xf32>
    %c0_27 = arith.constant 0 : index
    %c0_28 = arith.constant 0 : index
    %23 = vector.load %arg3[%c0_27, %c0_28] : memref<1x128xf32, #tpu.memory_space<vmem>>, vector<1x128xf32>
    %24 = vector.broadcast %23 : vector<1x128xf32> to vector<256x128xf32>
    %25 = arith.addf %22, %24 : vector<256x128xf32>
    %cst_29 = arith.constant 0.000000e+00 : f32
    %26 = vector.broadcast %cst_29 : f32 to vector<256x128xf32>
    %27 = arith.maximumf %25, %26 : vector<256x128xf32>
    %c0_30 = arith.constant 0 : index
    %c0_31 = arith.constant 0 : index
    %c0_32 = arith.constant 0 : index
    %28 = vector.load %arg4[%c0_30, %c0_31, %c0_32] : memref<1x256x128xf32, #tpu.memory_space<vmem>>, vector<1x256x128xf32>
    %29 = vector.shape_cast %28 : vector<1x256x128xf32> to vector<256x128xf32>
    %30 = vector.shape_cast %27 : vector<256x128xf32> to vector<1x256x128xf32>
    tpu.vector_store %arg4[%c0_30, %c0_31, %c0_32], %30 {strides = array<i32>} : memref<1x256x128xf32, #tpu.memory_space<vmem>>, vector<1x256x128xf32>,
    return
  }
  func.func @transform_0(%arg0: i32) -> (i32, i32, i32) {
    %c0_i32 = arith.constant 0 : i32
    %c0_i32_0 = arith.constant 0 : i32
    %c0_i32_1 = arith.constant 0 : i32
    return %arg0, %c0_i32, %c0_i32_0 : i32, i32, i32
  }
  func.func @transform_1(%arg0: i32) -> (i32, i32, i32) {
    %c0_i32 = arith.constant 0 : i32
    %c0_i32_0 = arith.constant 0 : i32
    %c0_i32_1 = arith.constant 0 : i32
    %c0_i32_2 = arith.constant 0 : i32
    return %c0_i32, %c0_i32_0, %c0_i32_1 : i32, i32, i32
  }
  func.func @transform_2(%arg0: i32) -> (i32, i32) {
    %c0_i32 = arith.constant 0 : i32
    %c0_i32_0 = arith.constant 0 : i32
    %c0_i32_1 = arith.constant 0 : i32
    return %c0_i32, %c0_i32_0 : i32, i32
  }
  func.func @transform_3(%arg0: i32) -> (i32, i32, i32) {
    %c0_i32 = arith.constant 0 : i32
    %c0_i32_0 = arith.constant 0 : i32
    %c0_i32_1 = arith.constant 0 : i32
    return %arg0, %c0_i32, %c0_i32_0 : i32, i32, i32
  }
}

</mosaic_0001>

<llo_original>
// kernel: conv_block_forward.2
$region0: #{conv_block_forward.2}
  #allocation0 [shape = 'u32[]', space=smem, size = 0x4, offset = 0x4, fixed_abs, tag = 'smem constant byte address 0x4 - core index']
  #allocation1 [shape = 'u32[144,128]{1,0:T(1,128)}', space=vmem, size = 0x12000, scoped, tag = 'internal scratch']
  #allocation2 [shape = 'f32[256,128]{1,0:T(8,128)}', space=vmem, size = 0x20000, scoped, tag = 'scratch operand']
  %s0 = inlined_call_operand.vmem [shape: f32[2,288,24], index: 0, kind: input, shape index: {}]
  %s1 = inlined_call_operand.vmem [shape: f32[3,24,128], index: 1, kind: input, shape index: {}]
  %s2 = inlined_call_operand.vmem [shape: f32[1,128], index: 2, kind: input, shape index: {}]
  %s3 = inlined_call_operand.vmem [shape: f32[2,256,128], index: 3, kind: output, shape index: {}]
  %s4 = sld [smem:[#allocation0]]
  $region45: #{conv_block_forward.2} parent=0
    _
  %s6 = ssub.s32 1, %s4
  %s7 = scalar_select 0, %s6, %s4
  loop: start=0, step=1, limit=4
  $region2: #{conv_block_forward.2} parent=0 // loop_pre_header
    _
  $region3: #{conv_block_forward.2} parent=0 // loop_header
    %s9 = sphi 0, %s13
    %p10 = scmp.ge.s32.totalorder %s9, 4
    %s19 = sphi 0, %s21
    %s22 = sphi 0, %s19
    %s23 = sphi 0, %s22
    %s39 = sphi 0, %s23
    %s43 = sphi 0, %s43
    %s45 = sphi 0, %s43
    %s46 = sphi 0, %s45
    %s60 = sphi 0, %s46
    %s64 = sphi 0, %s64
    %s66 = sphi 0, %s64
    %s67 = sphi 0, %s66
    %s81 = sphi 0, %s67
    %s87 = sphi 0, %s89
    %s90 = sphi 0, %s87
    %s91 = sphi 0, %s90
    %s107 = sphi 0, %s91
  $region4: #{conv_block_forward.2} parent=0 // loop_header_branch
    %12 = sbr.rel (%p10) target = $region8
  $region5: #{conv_block_forward.2} parent=0 // loop_body
    %s14 = ssub.s32 %s9, 1
    %s15 = ssub.s32 %s9, 2
    %s16 = sadd.s32 %s9, 1
    %s17 = ssub.s32 %s9, %s16
    %p18 = scmp.eq.s32.totalorder %s17, 0
    %s20 = sadd.s32 %s19, 1
    %s21 = scalar_select %p18, %s19, %s20
    %p24 = pneg %p18
    %p25 = scmp.eq.s32.totalorder %s9, 1
    %p26 = por %p24, %p25
    %p27 = scmp.ne.s32.totalorder %s19, %s22
    %p28 = scmp.eq.s32.totalorder %s9, 0
    %p29 = por %p27, %p28
    %p30 = scmp.ne.s32.totalorder %s19, %s22
    %p31 = scmp.eq.s32.totalorder %s14, 1
    %p32 = por %p30, %p31
    %p33 = scmp.ne.s32.totalorder %s22, %s23
    %p34 = scmp.eq.s32.totalorder %s14, 0
    %p35 = por %p33, %p34
    %p36 = scmp.ne.s32.totalorder %s22, %s23
    %p37 = scmp.eq.s32.totalorder %s15, 1
    %p38 = por %p36, %p37
    %p40 = scmp.ne.s32.totalorder %s23, %s39
    %p41 = scmp.eq.s32.totalorder %s15, 0
    %p42 = por %p40, %p41
    %s44 = sadd.s32 %s43, 1
    %p47 = scmp.eq.s32.totalorder %s9, 1
    %p48 = scmp.ne.s32.totalorder %s43, %s45
    %p49 = scmp.eq.s32.totalorder %s9, 0
    %p50 = por %p48, %p49
    %p51 = scmp.ne.s32.totalorder %s43, %s45
    %p52 = scmp.eq.s32.totalorder %s14, 1
    %p53 = por %p51, %p52
    %p54 = scmp.ne.s32.totalorder %s45, %s46
    %p55 = scmp.eq.s32.totalorder %s14, 0
    %p56 = por %p54, %p55
    %p57 = scmp.ne.s32.totalorder %s45, %s46
    %p58 = scmp.eq.s32.totalorder %s15, 1
    %p59 = por %p57, %p58
    %p61 = scmp.ne.s32.totalorder %s46, %s60
    %p62 = scmp.eq.s32.totalorder %s15, 0
    %p63 = por %p61, %p62
    %s65 = sadd.s32 %s64, 1
    %p68 = scmp.eq.s32.totalorder %s9, 1
    %p69 = scmp.ne.s32.totalorder %s64, %s66
    %p70 = scmp.eq.s32.totalorder %s9, 0
    %p71 = por %p69, %p70
    %p72 = scmp.ne.s32.totalorder %s64, %s66
    %p73 = scmp.eq.s32.totalorder %s14, 1
    %p74 = por %p72, %p73
    %p75 = scmp.ne.s32.totalorder %s66, %s67
    %p76 = scmp.eq.s32.totalorder %s14, 0
    %p77 = por %p75, %p76
    %p78 = scmp.ne.s32.totalorder %s66, %s67
    %p79 = scmp.eq.s32.totalorder %s15, 1
    %p80 = por %p78, %p79
    %p82 = scmp.ne.s32.totalorder %s67, %s81
    %p83 = scmp.eq.s32.totalorder %s15, 0
    %p84 = por %p82, %p83
    %s85 = ssub.s32 %s9, %s16
    %p86 = scmp.eq.s32.totalorder %s85, 0
    %s88 = sadd.s32 %s87, 1
    %s89 = scalar_select %p86, %s87, %s88
    %p92 = pneg %p86
    %p93 = scmp.eq.s32.totalorder %s9, 1
    %p94 = por %p92, %p93
    %p95 = scmp.ne.s32.totalorder %s87, %s90
    %p96 = scmp.eq.s32.totalorder %s9, 0
    %p97 = por %p95, %p96
    %p98 = scmp.ne.s32.totalorder %s87, %s90
    %p99 = scmp.eq.s32.totalorder %s14, 1
    %p100 = por %p98, %p99
    %p101 = scmp.ne.s32.totalorder %s90, %s91
    %p102 = scmp.eq.s32.totalorder %s14, 0
    %p103 = por %p101, %p102
    %p104 = scmp.ne.s32.totalorder %s90, %s91
    %p105 = scmp.eq.s32.totalorder %s15, 1
    %p106 = por %p104, %p105
    %p108 = scmp.ne.s32.totalorder %s91, %s107
    %p109 = scmp.eq.s32.totalorder %s15, 0
    %p110 = por %p108, %p109
    %p111 = scmp.le.s32.totalorder 1, %s9
    %p112 = scmp.lt.s32.totalorder %s9, 3
    %p113 = pnand %p111, %p112
    %p114 = pneg %p113
    // Predicated region
    $region9: #{conv_block_forward.2} parent=5 // pred_check
      _
    $region10: #{conv_block_forward.2} parent=5 // pred_check_branch
      %116 = sbr.rel (%p113) target = $region12
    $region11: #{conv_block_forward.2} parent=5 // pred_region
      %s117 = ssub.s32 %s9, 1
      // Predicated region
      $region13: #{conv_block_forward.2} parent=11 // pred_check
        %p118 = pneg %p56
      $region14: #{conv_block_forward.2} parent=11 // pred_check_branch
        %120 = sbr.rel (%p118) target = $region16
      $region15: #{conv_block_forward.2} parent=11 // pred_region
        _
      $region16: #{conv_block_forward.2} parent=11 // pred_fallthru
        _
      // Predicated region
      $region17: #{conv_block_forward.2} parent=11 // pred_check
        %p121 = pneg %p77
      $region18: #{conv_block_forward.2} parent=11 // pred_check_branch
        %123 = sbr.rel (%p121) target = $region20
      $region19: #{conv_block_forward.2} parent=11 // pred_region
        _
      $region20: #{conv_block_forward.2} parent=11 // pred_fallthru
        _
    $region12: #{conv_block_forward.2} parent=5 // pred_fallthru
      _
    %p124 = scmp.lt.s32.totalorder %s9, 2
    // Predicated region
    $region21: #{conv_block_forward.2} parent=5 // pred_check
      %p125 = pneg %p124
    $region22: #{conv_block_forward.2} parent=5 // pred_check_branch
      %127 = sbr.rel (%p125) target = $region24
    $region23: #{conv_block_forward.2} parent=5 // pred_region
      // Predicated region
      $region25: #{conv_block_forward.2} parent=23 // pred_check
        %p128 = pneg %p29
      $region26: #{conv_block_forward.2} parent=23 // pred_check_branch
        %130 = sbr.rel (%p128) target = $region28
      $region27: #{conv_block_forward.2} parent=23 // pred_region
        %p131 = scmp.lt.s32.totalorder %s9, 1
        %s132 = scalar_select %p131, %s9, 1
        %s133 = smul.addr %s132, 36
        %s134 = smul.addr %s133, 8
        %s135 = scalar_lea.vmem %s0, %s134
      $region28: #{conv_block_forward.2} parent=23 // pred_fallthru
        _
    $region24: #{conv_block_forward.2} parent=5 // pred_fallthru
      _
    %p136 = scmp.le.s32.totalorder 1, %s9
    %p137 = scmp.lt.s32.totalorder %s9, 3
    %p138 = pnand %p136, %p137
    %p139 = pneg %p138
    // Predicated region
    $region29: #{conv_block_forward.2} parent=5 // pred_check
      _
    $region30: #{conv_block_forward.2} parent=5 // pred_check_branch
      %141 = sbr.rel (%p138) target = $region32
    $region31: #{conv_block_forward.2} parent=5 // pred_region
      %s142 = ssub.s32 %s9, 1
      %p143 = scmp.lt.s32.totalorder %s14, 1
      %s144 = scalar_select %p143, %s14, 1
      %s145 = smul.addr %s144, 36
      %s146 = smul.addr %s145, 8
      %s147 = scalar_lea.vmem %s0, %s146
      %p148 = pneg %p35
      %p149 = pneg %p32
      %p150 = pneg %p56
      %p151 = pneg %p53
      %p152 = pneg %p77
      %p153 = pneg %p74
      %p154 = pneg %p103
      %p155 = pneg %p100
      %p156 = scmp.lt.s32.totalorder %s14, 1
      %s157 = scalar_select %p156, %s14, 1
      %s158 = smul.addr %s157, 32
      %s159 = smul.addr %s158, 8
      %s160 = scalar_lea.vmem %s3, %s159
      %p161 = scmp.lt.s32.totalorder %s14, 1
      %s162 = scalar_select %p161, %s14, 1
      %s163 = smul.addr %s162, 36
      %s164 = smul.addr %s163, 8
      %s165 = scalar_lea.vmem %s0, %s164
      %p166 = scmp.lt.s32.totalorder %s14, 1
      %s167 = scalar_select %p166, %s14, 1
      %s168 = smul.addr %s167, 32
      %s169 = smul.addr %s168, 8
      %s170 = scalar_lea.vmem %s3, %s169
      %v171 = vld [vmem:[%s165] sm:$0xff]
      %v172 = vld [vmem:[%s165 + $0x8] sm:$0xff]
      %v173 = vld [vmem:[%s165 + $0x10] sm:$0xff]
      %v174 = vld [vmem:[%s165 + $0x18] sm:$0xff]
      %v175 = vld [vmem:[%s165 + $0x20] sm:$0xff]
      %v176 = vld [vmem:[%s165 + $0x28] sm:$0xff]
      %v177 = vld [vmem:[%s165 + $0x30] sm:$0xff]
      %v178 = vld [vmem:[%s165 + $0x38] sm:$0xff]
      %v179 = vld [vmem:[%s165 + $0x40] sm:$0xff]
      %v180 = vld [vmem:[%s165 + $0x48] sm:$0xff]
      %v181 = vld [vmem:[%s165 + $0x50] sm:$0xff]
      %v182 = vld [vmem:[%s165 + $0x58] sm:$0xff]
      %v183 = vld [vmem:[%s165 + $0x60] sm:$0xff]
      %v184 = vld [vmem:[%s165 + $0x68] sm:$0xff]
      %v185 = vld [vmem:[%s165 + $0x70] sm:$0xff]
      %v186 = vld [vmem:[%s165 + $0x78] sm:$0xff]
      %v187 = vld [vmem:[%s165 + $0x80] sm:$0xff]
      %v188 = vld [vmem:[%s165 + $0x88] sm:$0xff]
      %v189 = vld [vmem:[%s165 + $0x90] sm:$0xff]
      %v190 = vld [vmem:[%s165 + $0x98] sm:$0xff]
      %v191 = vld [vmem:[%s165 + $0xa0] sm:$0xff]
      %v192 = vld [vmem:[%s165 + $0xa8] sm:$0xff]
      %v193 = vld [vmem:[%s165 + $0xb0] sm:$0xff]
      %v194 = vld [vmem:[%s165 + $0xb8] sm:$0xff]
      %v195 = vld [vmem:[%s165 + $0xc0] sm:$0xff]
      %v196 = vld [vmem:[%s165 + $0xc8] sm:$0xff]
      %v197 = vld [vmem:[%s165 + $0xd0] sm:$0xff]
      %v198 = vld [vmem:[%s165 + $0xd8] sm:$0xff]
      %v199 = vld [vmem:[%s165 + $0xe0] sm:$0xff]
      %v200 = vld [vmem:[%s165 + $0xe8] sm:$0xff]
      %v201 = vld [vmem:[%s165 + $0xf0] sm:$0xff]
      %v202 = vld [vmem:[%s165 + $0xf8] sm:$0xff]
      %v203 = vld [vmem:[%s1] sm:$0xff]
      %v204 = vld [vmem:[%s1 + $0x8] sm:$0xff]
      %v205 = vld [vmem:[%s1 + $0x10] sm:$0xff]
      %vm206 = vcmask 195584
      %v208 = vsel %vm206, %v171, 0
      %v211 = vsel %vm206, %v172, 0
      %v214 = vsel %vm206, %v173, 0
      %v217 = vsel %vm206, %v174, 0
      %v220 = vsel %vm206, %v175, 0
      %v223 = vsel %vm206, %v176, 0
      %v226 = vsel %vm206, %v177, 0
      %v229 = vsel %vm206, %v178, 0
      %v232 = vsel %vm206, %v179, 0
      %v235 = vsel %vm206, %v180, 0
      %v238 = vsel %vm206, %v181, 0
      %v241 = vsel %vm206, %v182, 0
      %v244 = vsel %vm206, %v183, 0
      %v247 = vsel %vm206, %v184, 0
      %v250 = vsel %vm206, %v185, 0
      %v253 = vsel %vm206, %v186, 0
      %v256 = vsel %vm206, %v187, 0
      %v259 = vsel %vm206, %v188, 0
      %v262 = vsel %vm206, %v189, 0
      %v265 = vsel %vm206, %v190, 0
      %v268 = vsel %vm206, %v191, 0
      %v271 = vsel %vm206, %v192, 0
      %v274 = vsel %vm206, %v193, 0
      %v277 = vsel %vm206, %v194, 0
      %v280 = vsel %vm206, %v195, 0
      %v283 = vsel %vm206, %v196, 0
      %v286 = vsel %vm206, %v197, 0
      %v289 = vsel %vm206, %v198, 0
      %v292 = vsel %vm206, %v199, 0
      %v295 = vsel %vm206, %v200, 0
      %v298 = vsel %vm206, %v201, 0
      %v301 = vsel %vm206, %v202, 0
      %303 = vmatprep.subr.mxu0 0.0
      %304 = vmatpush1.msra.mxu0 %v203
      %305 = vmatprep.subr.mxu0 0.0
      %306 = vmatpush1.msra.mxu0 %v204
      %307 = vmatprep.subr.mxu0 0.0
      %308 = vmatpush1.msra.mxu0 %v205
      %309 = vmatprep.subr.mxu0 0.0
      %310 = vmatpush1.msra.mxu0 0.0
      %311 = vmatprep.subr.mxu0 0.0
      %312 = vmatpush1.msra.mxu0 0.0
      %313 = vmatprep.subr.mxu0 0.0
      %314 = vmatpush1.msra.mxu0 0.0
      %315 = vmatprep.subr.mxu0 0.0
      %316 = vmatpush1.msra.mxu0 0.0
      %317 = vmatprep.subr.mxu0 0.0
      %318 = vmatpush1.msra.mxu0 0.0
      %319 = vmatprep.subr.mxu0 0.0
      %320 = vmatpush1.msra.mxu0 0.0
      %321 = vmatprep.subr.mxu0 0.0
      %322 = vmatpush1.msra.mxu0 0.0
      %323 = vmatprep.subr.mxu0 0.0
      %324 = vmatpush1.msra.mxu0 0.0
      %325 = vmatprep.subr.mxu0 0.0
      %326 = vmatpush1.msra.mxu0 0.0
      %327 = vmatprep.subr.mxu0 0.0
      %328 = vmatpush1.msra.mxu0 0.0
      %329 = vmatprep.subr.mxu0 0.0
      %330 = vmatpush1.msra.mxu0 0.0
      %331 = vmatprep.subr.mxu0 0.0
      %332 = vmatpush1.msra.mxu0 0.0
      %333 = vmatprep.subr.mxu0 0.0
      %334 = vmatpush1.msra.mxu0 0.0
      %335 = vmatprep.subr.mxu0 0.0
      %336 = vmatpush1.msra.mxu0 0.0
      %337 = vmatprep.subr.mxu0 0.0
      %338 = vmatpush1.msra.mxu0 0.0
      %339 = vmatprep.subr.mxu0 0.0
      %340 = vmatpush1.msra.mxu0 0.0
      %341 = vmatprep.subr.mxu0 0.0
      %342 = vmatpush1.msra.mxu0 0.0
      %343 = vmatprep.subr.mxu0 0.0
      %344 = vmatpush1.msra.mxu0 0.0
      %345 = vmatprep.subr.mxu0 0.0
      %346 = vmatpush1.msra.mxu0 0.0
      %347 = vmatprep.subr.mxu0 0.0
      %348 = vmatpush1.msra.mxu0 0.0
      %349 = vmatprep.subr.mxu0 0.0
      %350 = vmatpush1.msra.mxu0 0.0
      %351 = vmatprep.subr.mxu0 0.0
      %352 = vmatpush1.msra.mxu0 0.0
      %353 = vmatprep.subr.mxu0 0.0
      %354 = vmatpush1.msra.mxu0 0.0
      %355 = vmatprep.subr.mxu0 0.0
      %356 = vmatpush1.msra.mxu0 0.0
      %357 = vmatprep.subr.mxu0 0.0
      %358 = vmatpush1.msra.mxu0 0.0
      %359 = vmatprep.subr.mxu0 0.0
      %360 = vmatpush1.msra.mxu0 0.0
      %361 = vmatprep.subr.mxu0 0.0
      %362 = vmatpush1.msra.mxu0 0.0
      %363 = vmatprep.subr.mxu0 0.0
      %364 = vmatpush1.msra.mxu0 0.0
      %365 = vmatprep.subr.mxu0 0.0
      %366 = vmatpush1.msra.mxu0 0.0
      %367 = vmatprep.mubr.f32.mxu0 0.0
      %368 = vmatmul.mubr.f32.gmra.mrb[0].mxu0 %v208
      %v369 = vpop.f32.mrb[0].mxu0
      %v370 = vadd.f32 0.0, %v369
      %v371 = vpop.f32.mrb[0].mxu0
      %372 = vmatprep.mubr.f32.mxu0 0.0
      %373 = vmatmul.mubr.f32.gmra.mrb[0].mxu0 %v211
      %v374 = vpop.f32.mrb[0].mxu0
      %v375 = vadd.f32 0.0, %v374
      %v376 = vpop.f32.mrb[0].mxu0
      %377 = vmatprep.mubr.f32.mxu0 0.0
      %378 = vmatmul.mubr.f32.gmra.mrb[0].mxu0 %v214
      %v379 = vpop.f32.mrb[0].mxu0
      %v380 = vadd.f32 0.0, %v379
      %v381 = vpop.f32.mrb[0].mxu0
      %382 = vmatprep.mubr.f32.mxu0 0.0
      %383 = vmatmul.mubr.f32.gmra.mrb[0].mxu0 %v217
      %v384 = vpop.f32.mrb[0].mxu0
      %v385 = vadd.f32 0.0, %v384
      %v386 = vpop.f32.mrb[0].mxu0
      %387 = vmatprep.mubr.f32.mxu0 0.0
      %388 = vmatmul.mubr.f32.gmra.mrb[0].mxu0 %v220
      %v389 = vpop.f32.mrb[0].mxu0
      %v390 = vadd.f32 0.0, %v389
      %v391 = vpop.f32.mrb[0].mxu0
      %392 = vmatprep.mubr.f32.mxu0 0.0
      %393 = vmatmul.mubr.f32.gmra.mrb[0].mxu0 %v223
      %v394 = vpop.f32.mrb[0].mxu0
      %v395 = vadd.f32 0.0, %v394
      %v396 = vpop.f32.mrb[0].mxu0
      %397 = vmatprep.mubr.f32.mxu0 0.0
      %398 = vmatmul.mubr.f32.gmra.mrb[0].mxu0 %v226
      %v399 = vpop.f32.mrb[0].mxu0
      %v400 = vadd.f32 0.0, %v399
      %v401 = vpop.f32.mrb[0].mxu0
      %402 = vmatprep.mubr.f32.mxu0 0.0
      %403 = vmatmul.mubr.f32.gmra.mrb[0].mxu0 %v229
      %v404 = vpop.f32.mrb[0].mxu0
      %v405 = vadd.f32 0.0, %v404
      %v406 = vpop.f32.mrb[0].mxu0
      %407 = vmatprep.mubr.f32.mxu0 0.0
      %408 = vmatmul.mubr.f32.gmra.mrb[0].mxu0 %v232
      %v409 = vpop.f32.mrb[0].mxu0
      %v410 = vadd.f32 0.0, %v409
      %v411 = vpop.f32.mrb[0].mxu0
      %412 = vmatprep.mubr.f32.mxu0 0.0
      %413 = vmatmul.mubr.f32.gmra.mrb[0].mxu0 %v235
      %v414 = vpop.f32.mrb[0].mxu0
      %v415 = vadd.f32 0.0, %v414
      %v416 = vpop.f32.mrb[0].mxu0
      %417 = vmatprep.mubr.f32.mxu0 0.0
      %418 = vmatmul.mubr.f32.gmra.mrb[0].mxu0 %v238
      %v419 = vpop.f32.mrb[0].mxu0
      %v420 = vadd.f32 0.0, %v419
      %v421 = vpop.f32.mrb[0].mxu0
      %422 = vmatprep.mubr.f32.mxu0 0.0
      %423 = vmatmul.mubr.f32.gmra.mrb[0].mxu0 %v241
      %v424 = vpop.f32.mrb[0].mxu0
      %v425 = vadd.f32 0.0, %v424
      %v426 = vpop.f32.mrb[0].mxu0
      %427 = vmatprep.mubr.f32.mxu0 0.0
      %428 = vmatmul.mubr.f32.gmra.mrb[0].mxu0 %v244
      %v429 = vpop.f32.mrb[0].mxu0
      %v430 = vadd.f32 0.0, %v429
      %v431 = vpop.f32.mrb[0].mxu0
      %432 = vmatprep.mubr.f32.mxu0 0.0
      %433 = vmatmul.mubr.f32.gmra.mrb[0].mxu0 %v247
      %v434 = vpop.f32.mrb[0].mxu0
      %v435 = vadd.f32 0.0, %v434
      %v436 = vpop.f32.mrb[0].mxu0
      %437 = vmatprep.mubr.f32.mxu0 0.0
      %438 = vmatmul.mubr.f32.gmra.mrb[0].mxu0 %v250
      %v439 = vpop.f32.mrb[0].mxu0
      %v440 = vadd.f32 0.0, %v439
      %v441 = vpop.f32.mrb[0].mxu0
      %442 = vmatprep.mubr.f32.mxu0 0.0
      %443 = vmatmul.mubr.f32.gmra.mrb[0].mxu0 %v253
      %v444 = vpop.f32.mrb[0].mxu0
      %v445 = vadd.f32 0.0, %v444
      %v446 = vpop.f32.mrb[0].mxu0
      %447 = vmatprep.mubr.f32.mxu0 0.0
      %448 = vmatmul.mubr.f32.gmra.mrb[0].mxu0 %v256
      %v449 = vpop.f32.mrb[0].mxu0
      %v450 = vadd.f32 0.0, %v449
      %v451 = vpop.f32.mrb[0].mxu0
      %452 = vmatprep.mubr.f32.mxu0 0.0
      %453 = vmatmul.mubr.f32.gmra.mrb[0].mxu0 %v259
      %v454 = vpop.f32.mrb[0].mxu0
      %v455 = vadd.f32 0.0, %v454
      %v456 = vpop.f32.mrb[0].mxu0
      %457 = vmatprep.mubr.f32.mxu0 0.0
      %458 = vmatmul.mubr.f32.gmra.mrb[0].mxu0 %v262
      %v459 = vpop.f32.mrb[0].mxu0
      %v460 = vadd.f32 0.0, %v459
      %v461 = vpop.f32.mrb[0].mxu0
      %462 = vmatprep.mubr.f32.mxu0 0.0
      %463 = vmatmul.mubr.f32.gmra.mrb[0].mxu0 %v265
      %v464 = vpop.f32.mrb[0].mxu0
      %v465 = vadd.f32 0.0, %v464
      %v466 = vpop.f32.mrb[0].mxu0
      %467 = vmatprep.mubr.f32.mxu0 0.0
      %468 = vmatmul.mubr.f32.gmra.mrb[0].mxu0 %v268
      %v469 = vpop.f32.mrb[0].mxu0
      %v470 = vadd.f32 0.0, %v469
      %v471 = vpop.f32.mrb[0].mxu0
      %472 = vmatprep.mubr.f32.mxu0 0.0
      %473 = vmatmul.mubr.f32.gmra.mrb[0].mxu0 %v271
      %v474 = vpop.f32.mrb[0].mxu0
      %v475 = vadd.f32 0.0, %v474
      %v476 = vpop.f32.mrb[0].mxu0
      %477 = vmatprep.mubr.f32.mxu0 0.0
      %478 = vmatmul.mubr.f32.gmra.mrb[0].mxu0 %v274
      %v479 = vpop.f32.mrb[0].mxu0
      %v480 = vadd.f32 0.0, %v479
      %v481 = vpop.f32.mrb[0].mxu0
      %482 = vmatprep.mubr.f32.mxu0 0.0
      %483 = vmatmul.mubr.f32.gmra.mrb[0].mxu0 %v277
      %v484 = vpop.f32.mrb[0].mxu0
      %v485 = vadd.f32 0.0, %v484
      %v486 = vpop.f32.mrb[0].mxu0
      %487 = vmatprep.mubr.f32.mxu0 0.0
      %488 = vmatmul.mubr.f32.gmra.mrb[0].mxu0 %v280
      %v489 = vpop.f32.mrb[0].mxu0
      %v490 = vadd.f32 0.0, %v489
      %v491 = vpop.f32.mrb[0].mxu0
      %492 = vmatprep.mubr.f32.mxu0 0.0
      %493 = vmatmul.mubr.f32.gmra.mrb[0].mxu0 %v283
      %v494 = vpop.f32.mrb[0].mxu0
      %v495 = vadd.f32 0.0, %v494
      %v496 = vpop.f32.mrb[0].mxu0
      %497 = vmatprep.mubr.f32.mxu0 0.0
      %498 = vmatmul.mubr.f32.gmra.mrb[0].mxu0 %v286
      %v499 = vpop.f32.mrb[0].mxu0
      %v500 = vadd.f32 0.0, %v499
      %v501 = vpop.f32.mrb[0].mxu0
      %502 = vmatprep.mubr.f32.mxu0 0.0
      %503 = vmatmul.mubr.f32.gmra.mrb[0].mxu0 %v289
      %v504 = vpop.f32.mrb[0].mxu0
      %v505 = vadd.f32 0.0, %v504
      %v506 = vpop.f32.mrb[0].mxu0
      %507 = vmatprep.mubr.f32.mxu0 0.0
      %508 = vmatmul.mubr.f32.gmra.mrb[0].mxu0 %v292
      %v509 = vpop.f32.mrb[0].mxu0
      %v510 = vadd.f32 0.0, %v509
      %v511 = vpop.f32.mrb[0].mxu0
      %512 = vmatprep.mubr.f32.mxu0 0.0
      %513 = vmatmul.mubr.f32.gmra.mrb[0].mxu0 %v295
      %v514 = vpop.f32.mrb[0].mxu0
      %v515 = vadd.f32 0.0, %v514
      %v516 = vpop.f32.mrb[0].mxu0
      %517 = vmatprep.mubr.f32.mxu0 0.0
      %518 = vmatmul.mubr.f32.gmra.mrb[0].mxu0 %v298
      %v519 = vpop.f32.mrb[0].mxu0
      %v520 = vadd.f32 0.0, %v519
      %v521 = vpop.f32.mrb[0].mxu0
      %522 = vmatprep.mubr.f32.mxu0 0.0
      %523 = vmatmul.mubr.f32.gmra.mrb[0].mxu0 %v301
      %v524 = vpop.f32.mrb[0].mxu0
      %v525 = vadd.f32 0.0, %v524
      %v526 = vpop.f32.mrb[0].mxu0
      %527 = vdwg.mxu0
      %528 = vst [vmem:[#allocation2] sm:$0xff] %v370
      %529 = vst [vmem:[#allocation2 + $0x8] sm:$0xff] %v375
      %530 = vst [vmem:[#allocation2 + $0x10] sm:$0xff] %v380
      %531 = vst [vmem:[#allocation2 + $0x18] sm:$0xff] %v385
      %532 = vst [vmem:[#allocation2 + $0x20] sm:$0xff] %v390
      %533 = vst [vmem:[#allocation2 + $0x28] sm:$0xff] %v395
      %534 = vst [vmem:[#allocation2 + $0x30] sm:$0xff] %v400
      %535 = vst [vmem:[#allocation2 + $0x38] sm:$0xff] %v405
      %536 = vst [vmem:[#allocation2 + $0x40] sm:$0xff] %v410
      %537 = vst [vmem:[#allocation2 + $0x48] sm:$0xff] %v415
      %538 = vst [vmem:[#allocation2 + $0x50] sm:$0xff] %v420
      %539 = vst [vmem:[#allocation2 + $0x58] sm:$0xff] %v425
      %540 = vst [vmem:[#allocation2 + $0x60] sm:$0xff] %v430
      %541 = vst [vmem:[#allocation2 + $0x68] sm:$0xff] %v435
      %542 = vst [vmem:[#allocation2 + $0x70] sm:$0xff] %v440
      %543 = vst [vmem:[#allocation2 + $0x78] sm:$0xff] %v445
      %544 = vst [vmem:[#allocation2 + $0x80] sm:$0xff] %v450
      %545 = vst [vmem:[#allocation2 + $0x88] sm:$0xff] %v455
      %546 = vst [vmem:[#allocation2 + $0x90] sm:$0xff] %v460
      %547 = vst [vmem:[#allocation2 + $0x98] sm:$0xff] %v465
      %548 = vst [vmem:[#allocation2 + $0xa0] sm:$0xff] %v470
      %549 = vst [vmem:[#allocation2 + $0xa8] sm:$0xff] %v475
      %550 = vst [vmem:[#allocation2 + $0xb0] sm:$0xff] %v480
      %551 = vst [vmem:[#allocation2 + $0xb8] sm:$0xff] %v485
      %552 = vst [vmem:[#allocation2 + $0xc0] sm:$0xff] %v490
      %553 = vst [vmem:[#allocation2 + $0xc8] sm:$0xff] %v495
      %554 = vst [vmem:[#allocation2 + $0xd0] sm:$0xff] %v500
      %555 = vst [vmem:[#allocation2 + $0xd8] sm:$0xff] %v505
      %556 = vst [vmem:[#allocation2 + $0xe0] sm:$0xff] %v510
      %557 = vst [vmem:[#allocation2 + $0xe8] sm:$0xff] %v515
      %558 = vst [vmem:[#allocation2 + $0xf0] sm:$0xff] %v520
      %559 = vst [vmem:[#allocation2 + $0xf8] sm:$0xff] %v525
      %v560 = vld [vmem:[%s165 + $0x10] sm:$0xff]
      %v561 = vld [vmem:[%s165 + $0x18] sm:$0xff]
      %v562 = vld [vmem:[%s165 + $0x20] sm:$0xff]
      %v563 = vld [vmem:[%s165 + $0x28] sm:$0xff]
      %v564 = vld [vmem:[%s165 + $0x30] sm:$0xff]
      %v565 = vld [vmem:[%s165 + $0x38] sm:$0xff]
      %v566 = vld [vmem:[%s165 + $0x40] sm:$0xff]
      %v567 = vld [vmem:[%s165 + $0x48] sm:$0xff]
      %v568 = vld [vmem:[%s165 + $0x50] sm:$0xff]
      %v569 = vld [vmem:[%s165 + $0x58] sm:$0xff]
      %v570 = vld [vmem:[%s165 + $0x60] sm:$0xff]
      %v571 = vld [vmem:[%s165 + $0x68] sm:$0xff]
      %v572 = vld [vmem:[%s165 + $0x70] sm:$0xff]
      %v573 = vld [vmem:[%s165 + $0x78] sm:$0xff]
      %v574 = vld [vmem:[%s165 + $0x80] sm:$0xff]
      %v575 = vld [vmem:[%s165 + $0x88] sm:$0xff]
      %v576 = vld [vmem:[%s165 + $0x90] sm:$0xff]
      %v577 = vld [vmem:[%s165 + $0x98] sm:$0xff]
      %v578 = vld [vmem:[%s165 + $0xa0] sm:$0xff]
      %v579 = vld [vmem:[%s165 + $0xa8] sm:$0xff]
      %v580 = vld [vmem:[%s165 + $0xb0] sm:$0xff]
      %v581 = vld [vmem:[%s165 + $0xb8] sm:$0xff]
      %v582 = vld [vmem:[%s165 + $0xc0] sm:$0xff]
      %v583 = vld [vmem:[%s165 + $0xc8] sm:$0xff]
      %v584 = vld [vmem:[%s165 + $0xd0] sm:$0xff]
      %v585 = vld [vmem:[%s165 + $0xd8] sm:$0xff]
      %v586 = vld [vmem:[%s165 + $0xe0] sm:$0xff]
      %v587 = vld [vmem:[%s165 + $0xe8] sm:$0xff]
      %v588 = vld [vmem:[%s165 + $0xf0] sm:$0xff]
      %v589 = vld [vmem:[%s165 + $0xf8] sm:$0xff]
      %v590 = vld [vmem:[%s165 + $0x100] sm:$0xff]
      %v591 = vld [vmem:[%s165 + $0x108] sm:$0xff]
      %s592 = scalar_lea.vmem %s1, 24
      %v593 = vld [vmem:[%s592] sm:$0xff]
      %v594 = vld [vmem:[%s592 + $0x8] sm:$0xff]
      %v595 = vld [vmem:[%s592 + $0x10] sm:$0xff]
      %v597 = vsel %vm206, %v560, 0
      %v600 = vsel %vm206, %v561, 0
      %v603 = vsel %vm206, %v562, 0
      %v606 = vsel %vm206, %v563, 0
      %v609 = vsel %vm206, %v564, 0
      %v612 = vsel %vm206, %v565, 0
      %v615 = vsel %vm206, %v566, 0
      %v618 = vsel %vm206, %v567, 0
      %v621 = vsel %vm206, %v568, 0
      %v624 = vsel %vm206, %v569, 0
      %v627 = vsel %vm206, %v570, 0
      %v630 = vsel %vm206, %v571, 0
      %v633 = vsel %vm206, %v572, 0
      %v636 = vsel %vm206, %v573, 0
      %v639 = vsel %vm206, %v574, 0
      %v642 = vsel %vm206, %v575, 0
      %v645 = vsel %vm206, %v576, 0
      %v648 = vsel %vm206, %v577, 0
      %v651 = vsel %vm206, %v578, 0
      %v654 = vsel %vm206, %v579, 0
      %v657 = vsel %vm206, %v580, 0
      %v660 = vsel %vm206, %v581, 0
      %v663 = vsel %vm206, %v582, 0
      %v666 = vsel %vm206, %v583, 0
      %v669 = vsel %vm206, %v584, 0
      %v672 = vsel %vm206, %v585, 0
      %v675 = vsel %vm206, %v586, 0
      %v678 = vsel %vm206, %v587, 0
      %v681 = vsel %vm206, %v588, 0
      %v684 = vsel %vm206, %v589, 0
      %v687 = vsel %vm206, %v590, 0
      %v690 = vsel %vm206, %v591, 0
      %692 = vmatprep.subr.mxu0 0.0
      %693 = vmatpush1.msra.mxu0 %v593
      %694 = vmatprep.subr.mxu0 0.0
      %695 = vmatpush1.msra.mxu0 %v594
      %696 = vmatprep.subr.mxu0 0.0
      %697 = vmatpush1.msra.mxu0 %v595
      %698 = vmatprep.subr.mxu0 0.0
      %699 = vmatpush1.msra.mxu0 0.0
      %700 = vmatprep.subr.mxu0 0.0
      %701 = vmatpush1.msra.mxu0 0.0
      %702 = vmatprep.subr.mxu0 0.0
      %703 = vmatpush1.msra.mxu0 0.0
      %704 = vmatprep.subr.mxu0 0.0
      %705 = vmatpush1.msra.mxu0 0.0
      %706 = vmatprep.subr.mxu0 0.0
      %707 = vmatpush1.msra.mxu0 0.0
      %708 = vmatprep.subr.mxu0 0.0
      %709 = vmatpush1.msra.mxu0 0.0
      %710 = vmatprep.subr.mxu0 0.0
      %711 = vmatpush1.msra.mxu0 0.0
      %712 = vmatprep.subr.mxu0 0.0
      %713 = vmatpush1.msra.mxu0 0.0
      %714 = vmatprep.subr.mxu0 0.0
      %715 = vmatpush1.msra.mxu0 0.0
      %716 = vmatprep.subr.mxu0 0.0
      %717 = vmatpush1.msra.mxu0 0.0
      %718 = vmatprep.subr.mxu0 0.0
      %719 = vmatpush1.msra.mxu0 0.0
      %720 = vmatprep.subr.mxu0 0.0
      %721 = vmatpush1.msra.mxu0 0.0
      %722 = vmatprep.subr.mxu0 0.0
      %723 = vmatpush1.msra.mxu0 0.0
      %724 = vmatprep.subr.mxu0 0.0
      %725 = vmatpush1.msra.mxu0 0.0
      %726 = vmatprep.subr.mxu0 0.0
      %727 = vmatpush1.msra.mxu0 0.0
      %728 = vmatprep.subr.mxu0 0.0
      %729 = vmatpush1.msra.mxu0 0.0
      %730 = vmatprep.subr.mxu0 0.0
      %731 = vmatpush1.msra.mxu0 0.0
      %732 = vmatprep.subr.mxu0 0.0
      %733 = vmatpush1.msra.mxu0 0.0
      %734 = vmatprep.subr.mxu0 0.0
      %735 = vmatpush1.msra.mxu0 0.0
      %736 = vmatprep.subr.mxu0 0.0
      %737 = vmatpush1.msra.mxu0 0.0
      %738 = vmatprep.subr.mxu0 0.0
      %739 = vmatpush1.msra.mxu0 0.0
      %740 = vmatprep.subr.mxu0 0.0
      %741 = vmatpush1.msra.mxu0 0.0
      %742 = vmatprep.subr.mxu0 0.0
      %743 = vmatpush1.msra.mxu0 0.0
      %744 = vmatprep.subr.mxu0 0.0
      %745 = vmatpush1.msra.mxu0 0.0
      %746 = vmatprep.subr.mxu0 0.0
      %747 = vmatpush1.msra.mxu0 0.0
      %748 = vmatprep.subr.mxu0 0.0
      %749 = vmatpush1.msra.mxu0 0.0
      %750 = vmatprep.subr.mxu0 0.0
      %751 = vmatpush1.msra.mxu0 0.0
      %752 = vmatprep.subr.mxu0 0.0
      %753 = vmatpush1.msra.mxu0 0.0
      %754 = vmatprep.subr.mxu0 0.0
      %755 = vmatpush1.msra.mxu0 0.0
      %756 = vmatprep.mubr.f32.mxu0 0.0
      %757 = vmatmul.mubr.f32.gmra.mrb[0].mxu0 %v597
      %v758 = vpop.f32.mrb[0].mxu0
      %v759 = vadd.f32 0.0, %v758
      %v760 = vpop.f32.mrb[0].mxu0
      %761 = vmatprep.mubr.f32.mxu0 0.0
      %762 = vmatmul.mubr.f32.gmra.mrb[0].mxu0 %v600
      %v763 = vpop.f32.mrb[0].mxu0
      %v764 = vadd.f32 0.0, %v763
      %v765 = vpop.f32.mrb[0].mxu0
      %766 = vmatprep.mubr.f32.mxu0 0.0
      %767 = vmatmul.mubr.f32.gmra.mrb[0].mxu0 %v603
      %v768 = vpop.f32.mrb[0].mxu0
      %v769 = vadd.f32 0.0, %v768
      %v770 = vpop.f32.mrb[0].mxu0
      %771 = vmatprep.mubr.f32.mxu0 0.0
      %772 = vmatmul.mubr.f32.gmra.mrb[0].mxu0 %v606
      %v773 = vpop.f32.mrb[0].mxu0
      %v774 = vadd.f32 0.0, %v773
      %v775 = vpop.f32.mrb[0].mxu0
      %776 = vmatprep.mubr.f32.mxu0 0.0
      %777 = vmatmul.mubr.f32.gmra.mrb[0].mxu0 %v609
      %v778 = vpop.f32.mrb[0].mxu0
      %v779 = vadd.f32 0.0, %v778
      %v780 = vpop.f32.mrb[0].mxu0
      %781 = vmatprep.mubr.f32.mxu0 0.0
      %782 = vmatmul.mubr.f32.gmra.mrb[0].mxu0 %v612
      %v783 = vpop.f32.mrb[0].mxu0
      %v784 = vadd.f32 0.0, %v783
      %v785 = vpop.f32.mrb[0].mxu0
      %786 = vmatprep.mubr.f32.mxu0 0.0
      %787 = vmatmul.mubr.f32.gmra.mrb[0].mxu0 %v615
      %v788 = vpop.f32.mrb[0].mxu0
      %v789 = vadd.f32 0.0, %v788
      %v790 = vpop.f32.mrb[0].mxu0
      %791 = vmatprep.mubr.f32.mxu0 0.0
      %792 = vmatmul.mubr.f32.gmra.mrb[0].mxu0 %v618
      %v793 = vpop.f32.mrb[0].mxu0
      %v794 = vadd.f32 0.0, %v793
      %v795 = vpop.f32.mrb[0].mxu0
      %796 = vmatprep.mubr.f32.mxu0 0.0
      %797 = vmatmul.mubr.f32.gmra.mrb[0].mxu0 %v621
      %v798 = vpop.f32.mrb[0].mxu0
      %v799 = vadd.f32 0.0, %v798
      %v800 = vpop.f32.mrb[0].mxu0
      %801 = vmatprep.mubr.f32.mxu0 0.0
      %802 = vmatmul.mubr.f32.gmra.mrb[0].mxu0 %v624
      %v803 = vpop.f32.mrb[0].mxu0
      %v804 = vadd.f32 0.0, %v803
      %v805 = vpop.f32.mrb[0].mxu0
      %806 = vmatprep.mubr.f32.mxu0 0.0
      %807 = vmatmul.mubr.f32.gmra.mrb[0].mxu0 %v627
      %v808 = vpop.f32.mrb[0].mxu0
      %v809 = vadd.f32 0.0, %v808
      %v810 = vpop.f32.mrb[0].mxu0
      %811 = vmatprep.mubr.f32.mxu0 0.0
      %812 = vmatmul.mubr.f32.gmra.mrb[0].mxu0 %v630
      %v813 = vpop.f32.mrb[0].mxu0
      %v814 = vadd.f32 0.0, %v813
      %v815 = vpop.f32.mrb[0].mxu0
      %816 = vmatprep.mubr.f32.mxu0 0.0
      %817 = vmatmul.mubr.f32.gmra.mrb[0].mxu0 %v633
      %v818 = vpop.f32.mrb[0].mxu0
      %v819 = vadd.f32 0.0, %v818
      %v820 = vpop.f32.mrb[0].mxu0
      %821 = vmatprep.mubr.f32.mxu0 0.0
      %822 = vmatmul.mubr.f32.gmra.mrb[0].mxu0 %v636
      %v823 = vpop.f32.mrb[0].mxu0
      %v824 = vadd.f32 0.0, %v823
      %v825 = vpop.f32.mrb[0].mxu0
      %826 = vmatprep.mubr.f32.mxu0 0.0
      %827 = vmatmul.mubr.f32.gmra.mrb[0].mxu0 %v639
      %v828 = vpop.f32.mrb[0].mxu0
      %v829 = vadd.f32 0.0, %v828
      %v830 = vpop.f32.mrb[0].mxu0
      %831 = vmatprep.mubr.f32.mxu0 0.0
      %832 = vmatmul.mubr.f32.gmra.mrb[0].mxu0 %v642
      %v833 = vpop.f32.mrb[0].mxu0
      %v834 = vadd.f32 0.0, %v833
      %v835 = vpop.f32.mrb[0].mxu0
      %836 = vmatprep.mubr.f32.mxu0 0.0
      %837 = vmatmul.mubr.f32.gmra.mrb[0].mxu0 %v645
      %v838 = vpop.f32.mrb[0].mxu0
      %v839 = vadd.f32 0.0, %v838
      %v840 = vpop.f32.mrb[0].mxu0
      %841 = vmatprep.mubr.f32.mxu0 0.0
      %842 = vmatmul.mubr.f32.gmra.mrb[0].mxu0 %v648
      %v843 = vpop.f32.mrb[0].mxu0
      %v844 = vadd.f32 0.0, %v843
      %v845 = vpop.f32.mrb[0].mxu0
      %846 = vmatprep.mubr.f32.mxu0 0.0
      %847 = vmatmul.mubr.f32.gmra.mrb[0].mxu0 %v651
      %v848 = vpop.f32.mrb[0].mxu0
      %v849 = vadd.f32 0.0, %v848
      %v850 = vpop.f32.mrb[0].mxu0
      %851 = vmatprep.mubr.f32.mxu0 0.0
      %852 = vmatmul.mubr.f32.gmra.mrb[0].mxu0 %v654
      %v853 = vpop.f32.mrb[0].mxu0
      %v854 = vadd.f32 0.0, %v853
      %v855 = vpop.f32.mrb[0].mxu0
      %856 = vmatprep.mubr.f32.mxu0 0.0
      %857 = vmatmul.mubr.f32.gmra.mrb[0].mxu0 %v657
      %v858 = vpop.f32.mrb[0].mxu0
      %v859 = vadd.f32 0.0, %v858
      %v860 = vpop.f32.mrb[0].mxu0
      %861 = vmatprep.mubr.f32.mxu0 0.0
      %862 = vmatmul.mubr.f32.gmra.mrb[0].mxu0 %v660
      %v863 = vpop.f32.mrb[0].mxu0
      %v864 = vadd.f32 0.0, %v863
      %v865 = vpop.f32.mrb[0].mxu0
      %866 = vmatprep.mubr.f32.mxu0 0.0
      %867 = vmatmul.mubr.f32.gmra.mrb[0].mxu0 %v663
      %v868 = vpop.f32.mrb[0].mxu0
      %v869 = vadd.f32 0.0, %v868
      %v870 = vpop.f32.mrb[0].mxu0
      %871 = vmatprep.mubr.f32.mxu0 0.0
      %872 = vmatmul.mubr.f32.gmra.mrb[0].mxu0 %v666
      %v873 = vpop.f32.mrb[0].mxu0
      %v874 = vadd.f32 0.0, %v873
      %v875 = vpop.f32.mrb[0].mxu0
      %876 = vmatprep.mubr.f32.mxu0 0.0
      %877 = vmatmul.mubr.f32.gmra.mrb[0].mxu0 %v669
      %v878 = vpop.f32.mrb[0].mxu0
      %v879 = vadd.f32 0.0, %v878
      %v880 = vpop.f32.mrb[0].mxu0
      %881 = vmatprep.mubr.f32.mxu0 0.0
      %882 = vmatmul.mubr.f32.gmra.mrb[0].mxu0 %v672
      %v883 = vpop.f32.mrb[0].mxu0
      %v884 = vadd.f32 0.0, %v883
      %v885 = vpop.f32.mrb[0].mxu0
      %886 = vmatprep.mubr.f32.mxu0 0.0
      %887 = vmatmul.mubr.f32.gmra.mrb[0].mxu0 %v675
      %v888 = vpop.f32.mrb[0].mxu0
      %v889 = vadd.f32 0.0, %v888
      %v890 = vpop.f32.mrb[0].mxu0
      %891 = vmatprep.mubr.f32.mxu0 0.0
      %892 = vmatmul.mubr.f32.gmra.mrb[0].mxu0 %v678
      %v893 = vpop.f32.mrb[0].mxu0
      %v894 = vadd.f32 0.0, %v893
      %v895 = vpop.f32.mrb[0].mxu0
      %896 = vmatprep.mubr.f32.mxu0 0.0
      %897 = vmatmul.mubr.f32.gmra.mrb[0].mxu0 %v681
      %v898 = vpop.f32.mrb[0].mxu0
      %v899 = vadd.f32 0.0, %v898
      %v900 = vpop.f32.mrb[0].mxu0
      %901 = vmatprep.mubr.f32.mxu0 0.0
      %902 = vmatmul.mubr.f32.gmra.mrb[0].mxu0 %v684
      %v903 = vpop.f32.mrb[0].mxu0
      %v904 = vadd.f32 0.0, %v903
      %v905 = vpop.f32.mrb[0].mxu0
      %906 = vmatprep.mubr.f32.mxu0 0.0
      %907 = vmatmul.mubr.f32.gmra.mrb[0].mxu0 %v687
      %v908 = vpop.f32.mrb[0].mxu0
      %v909 = vadd.f32 0.0, %v908
      %v910 = vpop.f32.mrb[0].mxu0
      %911 = vmatprep.mubr.f32.mxu0 0.0
      %912 = vmatmul.mubr.f32.gmra.mrb[0].mxu0 %v690
      %v913 = vpop.f32.mrb[0].mxu0
      %v914 = vadd.f32 0.0, %v913
      %v915 = vpop.f32.mrb[0].mxu0
      %916 = vdwg.mxu0
      %v917 = vld [vmem:[#allocation2] sm:$0xff]
      %v918 = vld [vmem:[#allocation2 + $0x8] sm:$0xff]
      %v919 = vld [vmem:[#allocation2 + $0x10] sm:$0xff]
      %v920 = vld [vmem:[#allocation2 + $0x18] sm:$0xff]
      %v921 = vld [vmem:[#allocation2 + $0x20] sm:$0xff]
      %v922 = vld [vmem:[#allocation2 + $0x28] sm:$0xff]
      %v923 = vld [vmem:[#allocation2 + $0x30] sm:$0xff]
      %v924 = vld [vmem:[#allocation2 + $0x38] sm:$0xff]
      %v925 = vld [vmem:[#allocation2 + $0x40] sm:$0xff]
      %v926 = vld [vmem:[#allocation2 + $0x48] sm:$0xff]
      %v927 = vld [vmem:[#allocation2 + $0x50] sm:$0xff]
      %v928 = vld [vmem:[#allocation2 + $0x58] sm:$0xff]
      %v929 = vld [vmem:[#allocation2 + $0x60] sm:$0xff]
      %v930 = vld [vmem:[#allocation2 + $0x68] sm:$0xff]
      %v931 = vld [vmem:[#allocation2 + $0x70] sm:$0xff]
      %v932 = vld [vmem:[#allocation2 + $0x78] sm:$0xff]
      %v933 = vld [vmem:[#allocation2 + $0x80] sm:$0xff]
      %v934 = vld [vmem:[#allocation2 + $0x88] sm:$0xff]
      %v935 = vld [vmem:[#allocation2 + $0x90] sm:$0xff]
      %v936 = vld [vmem:[#allocation2 + $0x98] sm:$0xff]
      %v937 = vld [vmem:[#allocation2 + $0xa0] sm:$0xff]
      %v938 = vld [vmem:[#allocation2 + $0xa8] sm:$0xff]
      %v939 = vld [vmem:[#allocation2 + $0xb0] sm:$0xff]
      %v940 = vld [vmem:[#allocation2 + $0xb8] sm:$0xff]
      %v941 = vld [vmem:[#allocation2 + $0xc0] sm:$0xff]
      %v942 = vld [vmem:[#allocation2 + $0xc8] sm:$0xff]
      %v943 = vld [vmem:[#allocation2 + $0xd0] sm:$0xff]
      %v944 = vld [vmem:[#allocation2 + $0xd8] sm:$0xff]
      %v945 = vld [vmem:[#allocation2 + $0xe0] sm:$0xff]
      %v946 = vld [vmem:[#allocation2 + $0xe8] sm:$0xff]
      %v947 = vld [vmem:[#allocation2 + $0xf0] sm:$0xff]
      %v948 = vld [vmem:[#allocation2 + $0xf8] sm:$0xff]
      %v949 = vadd.f32 %v917, %v759
      %v950 = vadd.f32 %v918, %v764
      %v951 = vadd.f32 %v919, %v769
      %v952 = vadd.f32 %v920, %v774
      %v953 = vadd.f32 %v921, %v779
      %v954 = vadd.f32 %v922, %v784
      %v955 = vadd.f32 %v923, %v789
      %v956 = vadd.f32 %v924, %v794
      %v957 = vadd.f32 %v925, %v799
      %v958 = vadd.f32 %v926, %v804
      %v959 = vadd.f32 %v927, %v809
      %v960 = vadd.f32 %v928, %v814
      %v961 = vadd.f32 %v929, %v819
      %v962 = vadd.f32 %v930, %v824
      %v963 = vadd.f32 %v931, %v829
      %v964 = vadd.f32 %v932, %v834
      %v965 = vadd.f32 %v933, %v839
      %v966 = vadd.f32 %v934, %v844
      %v967 = vadd.f32 %v935, %v849
      %v968 = vadd.f32 %v936, %v854
      %v969 = vadd.f32 %v937, %v859
      %v970 = vadd.f32 %v938, %v864
      %v971 = vadd.f32 %v939, %v869
      %v972 = vadd.f32 %v940, %v874
      %v973 = vadd.f32 %v941, %v879
      %v974 = vadd.f32 %v942, %v884
      %v975 = vadd.f32 %v943, %v889
      %v976 = vadd.f32 %v944, %v894
      %v977 = vadd.f32 %v945, %v899
      %v978 = vadd.f32 %v946, %v904
      %v979 = vadd.f32 %v947, %v909
      %v980 = vadd.f32 %v948, %v914
      %981 = vst [vmem:[#allocation2] sm:$0xff] %v949
      %982 = vst [vmem:[#allocation2 + $0x8] sm:$0xff] %v950
      %983 = vst [vmem:[#allocation2 + $0x10] sm:$0xff] %v951
      %984 = vst [vmem:[#allocation2 + $0x18] sm:$0xff] %v952
      %985 = vst [vmem:[#allocation2 + $0x20] sm:$0xff] %v953
      %986 = vst [vmem:[#allocation2 + $0x28] sm:$0xff] %v954
      %987 = vst [vmem:[#allocation2 + $0x30] sm:$0xff] %v955
      %988 = vst [vmem:[#allocation2 + $0x38] sm:$0xff] %v956
      %989 = vst [vmem:[#allocation2 + $0x40] sm:$0xff] %v957
      %990 = vst [vmem:[#allocation2 + $0x48] sm:$0xff] %v958
      %991 = vst [vmem:[#allocation2 + $0x50] sm:$0xff] %v959
      %992 = vst [vmem:[#allocation2 + $0x58] sm:$0xff] %v960
      %993 = vst [vmem:[#allocation2 + $0x60] sm:$0xff] %v961
      %994 = vst [vmem:[#allocation2 + $0x68] sm:$0xff] %v962
      %995 = vst [vmem:[#allocation2 + $0x70] sm:$0xff] %v963
      %996 = vst [vmem:[#allocation2 + $0x78] sm:$0xff] %v964
      %997 = vst [vmem:[#allocation2 + $0x80] sm:$0xff] %v965
      %998 = vst [vmem:[#allocation2 + $0x88] sm:$0xff] %v966
      %999 = vst [vmem:[#allocation2 + $0x90] sm:$0xff] %v967
      %1000 = vst [vmem:[#allocation2 + $0x98] sm:$0xff] %v968
      %1001 = vst [vmem:[#allocation2 + $0xa0] sm:$0xff] %v969
      %1002 = vst [vmem:[#allocation2 + $0xa8] sm:$0xff] %v970
      %1003 = vst [vmem:[#allocation2 + $0xb0] sm:$0xff] %v971
      %1004 = vst [vmem:[#allocation2 + $0xb8] sm:$0xff] %v972
      %1005 = vst [vmem:[#allocation2 + $0xc0] sm:$0xff] %v973
      %1006 = vst [vmem:[#allocation2 + $0xc8] sm:$0xff] %v974
      %1007 = vst [vmem:[#allocation2 + $0xd0] sm:$0xff] %v975
      %1008 = vst [vmem:[#allocation2 + $0xd8] sm:$0xff] %v976
      %1009 = vst [vmem:[#allocation2 + $0xe0] sm:$0xff] %v977
      %1010 = vst [vmem:[#allocation2 + $0xe8] sm:$0xff] %v978
      %1011 = vst [vmem:[#allocation2 + $0xf0] sm:$0xff] %v979
      %1012 = vst [vmem:[#allocation2 + $0xf8] sm:$0xff] %v980
      %v1013 = vld [vmem:[%s165 + $0x20] sm:$0xff]
      %v1014 = vld [vmem:[%s165 + $0x28] sm:$0xff]
      %v1015 = vld [vmem:[%s165 + $0x30] sm:$0xff]
      %v1016 = vld [vmem:[%s165 + $0x38] sm:$0xff]
      %v1017 = vld [vmem:[%s165 + $0x40] sm:$0xff]
      %v1018 = vld [vmem:[%s165 + $0x48] sm:$0xff]
      %v1019 = vld [vmem:[%s165 + $0x50] sm:$0xff]
      %v1020 = vld [vmem:[%s165 + $0x58] sm:$0xff]
      %v1021 = vld [vmem:[%s165 + $0x60] sm:$0xff]
      %v1022 = vld [vmem:[%s165 + $0x68] sm:$0xff]
      %v1023 = vld [vmem:[%s165 + $0x70] sm:$0xff]
      %v1024 = vld [vmem:[%s165 + $0x78] sm:$0xff]
      %v1025 = vld [vmem:[%s165 + $0x80] sm:$0xff]
      %v1026 = vld [vmem:[%s165 + $0x88] sm:$0xff]
      %v1027 = vld [vmem:[%s165 + $0x90] sm:$0xff]
      %v1028 = vld [vmem:[%s165 + $0x98] sm:$0xff]
      %v1029 = vld [vmem:[%s165 + $0xa0] sm:$0xff]
      %v1030 = vld [vmem:[%s165 + $0xa8] sm:$0xff]
      %v1031 = vld [vmem:[%s165 + $0xb0] sm:$0xff]
      %v1032 = vld [vmem:[%s165 + $0xb8] sm:$0xff]
      %v1033 = vld [vmem:[%s165 + $0xc0] sm:$0xff]
      %v1034 = vld [vmem:[%s165 + $0xc8] sm:$0xff]
      %v1035 = vld [vmem:[%s165 + $0xd0] sm:$0xff]
      %v1036 = vld [vmem:[%s165 + $0xd8] sm:$0xff]
      %v1037 = vld [vmem:[%s165 + $0xe0] sm:$0xff]
      %v1038 = vld [vmem:[%s165 + $0xe8] sm:$0xff]
      %v1039 = vld [vmem:[%s165 + $0xf0] sm:$0xff]
      %v1040 = vld [vmem:[%s165 + $0xf8] sm:$0xff]
      %v1041 = vld [vmem:[%s165 + $0x100] sm:$0xff]
      %v1042 = vld [vmem:[%s165 + $0x108] sm:$0xff]
      %v1043 = vld [vmem:[%s165 + $0x110] sm:$0xff]
      %v1044 = vld [vmem:[%s165 + $0x118] sm:$0xff]
      %s1045 = scalar_lea.vmem %s1, 48
      %v1046 = vld [vmem:[%s1045] sm:$0xff]
      %v1047 = vld [vmem:[%s1045 + $0x8] sm:$0xff]
      %v1048 = vld [vmem:[%s1045 + $0x10] sm:$0xff]
      %v1050 = vsel %vm206, %v1013, 0
      %v1053 = vsel %vm206, %v1014, 0
      %v1056 = vsel %vm206, %v1015, 0
      %v1059 = vsel %vm206, %v1016, 0
      %v1062 = vsel %vm206, %v1017, 0
      %v1065 = vsel %vm206, %v1018, 0
      %v1068 = vsel %vm206, %v1019, 0
      %v1071 = vsel %vm206, %v1020, 0
      %v1074 = vsel %vm206, %v1021, 0
      %v1077 = vsel %vm206, %v1022, 0
      %v1080 = vsel %vm206, %v1023, 0
      %v1083 = vsel %vm206, %v1024, 0
      %v1086 = vsel %vm206, %v1025, 0
      %v1089 = vsel %vm206, %v1026, 0
      %v1092 = vsel %vm206, %v1027, 0
      %v1095 = vsel %vm206, %v1028, 0
      %v1098 = vsel %vm206, %v1029, 0
      %v1101 = vsel %vm206, %v1030, 0
      %v1104 = vsel %vm206, %v1031, 0
      %v1107 = vsel %vm206, %v1032, 0
      %v1110 = vsel %vm206, %v1033, 0
      %v1113 = vsel %vm206, %v1034, 0
      %v1116 = vsel %vm206, %v1035, 0
      %v1119 = vsel %vm206, %v1036, 0
      %v1122 = vsel %vm206, %v1037, 0
      %v1125 = vsel %vm206, %v1038, 0
      %v1128 = vsel %vm206, %v1039, 0
      %v1131 = vsel %vm206, %v1040, 0
      %v1134 = vsel %vm206, %v1041, 0
      %v1137 = vsel %vm206, %v1042, 0
      %v1140 = vsel %vm206, %v1043, 0
      %v1143 = vsel %vm206, %v1044, 0
      %1145 = vmatprep.subr.mxu0 0.0
      %1146 = vmatpush1.msra.mxu0 %v1046
      %1147 = vmatprep.subr.mxu0 0.0
      %1148 = vmatpush1.msra.mxu0 %v1047
      %1149 = vmatprep.subr.mxu0 0.0
      %1150 = vmatpush1.msra.mxu0 %v1048
      %1151 = vmatprep.subr.mxu0 0.0
      %1152 = vmatpush1.msra.mxu0 0.0
      %1153 = vmatprep.subr.mxu0 0.0
      %1154 = vmatpush1.msra.mxu0 0.0
      %1155 = vmatprep.subr.mxu0 0.0
      %1156 = vmatpush1.msra.mxu0 0.0
      %1157 = vmatprep.subr.mxu0 0.0
      %1158 = vmatpush1.msra.mxu0 0.0
      %1159 = vmatprep.subr.mxu0 0.0
      %1160 = vmatpush1.msra.mxu0 0.0
      %1161 = vmatprep.subr.mxu0 0.0
      %1162 = vmatpush1.msra.mxu0 0.0
      %1163 = vmatprep.subr.mxu0 0.0
      %1164 = vmatpush1.msra.mxu0 0.0
      %1165 = vmatprep.subr.mxu0 0.0
      %1166 = vmatpush1.msra.mxu0 0.0
      %1167 = vmatprep.subr.mxu0 0.0
      %1168 = vmatpush1.msra.mxu0 0.0
      %1169 = vmatprep.subr.mxu0 0.0
      %1170 = vmatpush1.msra.mxu0 0.0
      %1171 = vmatprep.subr.mxu0 0.0
      %1172 = vmatpush1.msra.mxu0 0.0
      %1173 = vmatprep.subr.mxu0 0.0
      %1174 = vmatpush1.msra.mxu0 0.0
      %1175 = vmatprep.subr.mxu0 0.0
      %1176 = vmatpush1.msra.mxu0 0.0
      %1177 = vmatprep.subr.mxu0 0.0
      %1178 = vmatpush1.msra.mxu0 0.0
      %1179 = vmatprep.subr.mxu0 0.0
      %1180 = vmatpush1.msra.mxu0 0.0
      %1181 = vmatprep.subr.mxu0 0.0
      %1182 = vmatpush1.msra.mxu0 0.0
      %1183 = vmatprep.subr.mxu0 0.0
      %1184 = vmatpush1.msra.mxu0 0.0
      %1185 = vmatprep.subr.mxu0 0.0
      %1186 = vmatpush1.msra.mxu0 0.0
      %1187 = vmatprep.subr.mxu0 0.0
      %1188 = vmatpush1.msra.mxu0 0.0
      %1189 = vmatprep.subr.mxu0 0.0
      %1190 = vmatpush1.msra.mxu0 0.0
      %1191 = vmatprep.subr.mxu0 0.0
      %1192 = vmatpush1.msra.mxu0 0.0
      %1193 = vmatprep.subr.mxu0 0.0
      %1194 = vmatpush1.msra.mxu0 0.0
      %1195 = vmatprep.subr.mxu0 0.0
      %1196 = vmatpush1.msra.mxu0 0.0
      %1197 = vmatprep.subr.mxu0 0.0
      %1198 = vmatpush1.msra.mxu0 0.0
      %1199 = vmatprep.subr.mxu0 0.0
      %1200 = vmatpush1.msra.mxu0 0.0
      %1201 = vmatprep.subr.mxu0 0.0
      %1202 = vmatpush1.msra.mxu0 0.0
      %1203 = vmatprep.subr.mxu0 0.0
      %1204 = vmatpush1.msra.mxu0 0.0
      %1205 = vmatprep.subr.mxu0 0.0
      %1206 = vmatpush1.msra.mxu0 0.0
      %1207 = vmatprep.subr.mxu0 0.0
      %1208 = vmatpush1.msra.mxu0 0.0
      %1209 = vmatprep.mubr.f32.mxu0 0.0
      %1210 = vmatmul.mubr.f32.gmra.mrb[0].mxu0 %v1050
      %v1211 = vpop.f32.mrb[0].mxu0
      %v1212 = vadd.f32 0.0, %v1211
      %v1213 = vpop.f32.mrb[0].mxu0
      %1214 = vmatprep.mubr.f32.mxu0 0.0
      %1215 = vmatmul.mubr.f32.gmra.mrb[0].mxu0 %v1053
      %v1216 = vpop.f32.mrb[0].mxu0
      %v1217 = vadd.f32 0.0, %v1216
      %v1218 = vpop.f32.mrb[0].mxu0
      %1219 = vmatprep.mubr.f32.mxu0 0.0
      %1220 = vmatmul.mubr.f32.gmra.mrb[0].mxu0 %v1056
      %v1221 = vpop.f32.mrb[0].mxu0
      %v1222 = vadd.f32 0.0, %v1221
      %v1223 = vpop.f32.mrb[0].mxu0
      %1224 = vmatprep.mubr.f32.mxu0 0.0
      %1225 = vmatmul.mubr.f32.gmra.mrb[0].mxu0 %v1059
      %v1226 = vpop.f32.mrb[0].mxu0
      %v1227 = vadd.f32 0.0, %v1226
      %v1228 = vpop.f32.mrb[0].mxu0
      %1229 = vmatprep.mubr.f32.mxu0 0.0
      %1230 = vmatmul.mubr.f32.gmra.mrb[0].mxu0 %v1062
      %v1231 = vpop.f32.mrb[0].mxu0
      %v1232 = vadd.f32 0.0, %v1231
      %v1233 = vpop.f32.mrb[0].mxu0
      %1234 = vmatprep.mubr.f32.mxu0 0.0
      %1235 = vmatmul.mubr.f32.gmra.mrb[0].mxu0 %v1065
      %v1236 = vpop.f32.mrb[0].mxu0
      %v1237 = vadd.f32 0.0, %v1236
      %v1238 = vpop.f32.mrb[0].mxu0
      %1239 = vmatprep.mubr.f32.mxu0 0.0
      %1240 = vmatmul.mubr.f32.gmra.mrb[0].mxu0 %v1068
      %v1241 = vpop.f32.mrb[0].mxu0
      %v1242 = vadd.f32 0.0, %v1241
      %v1243 = vpop.f32.mrb[0].mxu0
      %1244 = vmatprep.mubr.f32.mxu0 0.0
      %1245 = vmatmul.mubr.f32.gmra.mrb[0].mxu0 %v1071
      %v1246 = vpop.f32.mrb[0].mxu0
      %v1247 = vadd.f32 0.0, %v1246
      %v1248 = vpop.f32.mrb[0].mxu0
      %1249 = vmatprep.mubr.f32.mxu0 0.0
      %1250 = vmatmul.mubr.f32.gmra.mrb[0].mxu0 %v1074
      %v1251 = vpop.f32.mrb[0].mxu0
      %v1252 = vadd.f32 0.0, %v1251
      %v1253 = vpop.f32.mrb[0].mxu0
      %1254 = vmatprep.mubr.f32.mxu0 0.0
      %1255 = vmatmul.mubr.f32.gmra.mrb[0].mxu0 %v1077
      %v1256 = vpop.f32.mrb[0].mxu0
      %v1257 = vadd.f32 0.0, %v1256
      %v1258 = vpop.f32.mrb[0].mxu0
      %1259 = vmatprep.mubr.f32.mxu0 0.0
      %1260 = vmatmul.mubr.f32.gmra.mrb[0].mxu0 %v1080
      %v1261 = vpop.f32.mrb[0].mxu0
      %v1262 = vadd.f32 0.0, %v1261
      %v1263 = vpop.f32.mrb[0].mxu0
      %1264 = vmatprep.mubr.f32.mxu0 0.0
      %1265 = vmatmul.mubr.f32.gmra.mrb[0].mxu0 %v1083
      %v1266 = vpop.f32.mrb[0].mxu0
      %v1267 = vadd.f32 0.0, %v1266
      %v1268 = vpop.f32.mrb[0].mxu0
      %1269 = vmatprep.mubr.f32.mxu0 0.0
      %1270 = vmatmul.mubr.f32.gmra.mrb[0].mxu0 %v1086
      %v1271 = vpop.f32.mrb[0].mxu0
      %v1272 = vadd.f32 0.0, %v1271
      %v1273 = vpop.f32.mrb[0].mxu0
      %1274 = vmatprep.mubr.f32.mxu0 0.0
      %1275 = vmatmul.mubr.f32.gmra.mrb[0].mxu0 %v1089
      %v1276 = vpop.f32.mrb[0].mxu0
      %v1277 = vadd.f32 0.0, %v1276
      %v1278 = vpop.f32.mrb[0].mxu0
      %1279 = vmatprep.mubr.f32.mxu0 0.0
      %1280 = vmatmul.mubr.f32.gmra.mrb[0].mxu0 %v1092
      %v1281 = vpop.f32.mrb[0].mxu0
      %v1282 = vadd.f32 0.0, %v1281
      %v1283 = vpop.f32.mrb[0].mxu0
      %1284 = vmatprep.mubr.f32.mxu0 0.0
      %1285 = vmatmul.mubr.f32.gmra.mrb[0].mxu0 %v1095
      %v1286 = vpop.f32.mrb[0].mxu0
      %v1287 = vadd.f32 0.0, %v1286
      %v1288 = vpop.f32.mrb[0].mxu0
      %1289 = vmatprep.mubr.f32.mxu0 0.0
      %1290 = vmatmul.mubr.f32.gmra.mrb[0].mxu0 %v1098
      %v1291 = vpop.f32.mrb[0].mxu0
      %v1292 = vadd.f32 0.0, %v1291
      %v1293 = vpop.f32.mrb[0].mxu0
      %1294 = vmatprep.mubr.f32.mxu0 0.0
      %1295 = vmatmul.mubr.f32.gmra.mrb[0].mxu0 %v1101
      %v1296 = vpop.f32.mrb[0].mxu0
      %v1297 = vadd.f32 0.0, %v1296
      %v1298 = vpop.f32.mrb[0].mxu0
      %1299 = vmatprep.mubr.f32.mxu0 0.0
      %1300 = vmatmul.mubr.f32.gmra.mrb[0].mxu0 %v1104
      %v1301 = vpop.f32.mrb[0].mxu0
      %v1302 = vadd.f32 0.0, %v1301
      %v1303 = vpop.f32.mrb[0].mxu0
      %1304 = vmatprep.mubr.f32.mxu0 0.0
      %1305 = vmatmul.mubr.f32.gmra.mrb[0].mxu0 %v1107
      %v1306 = vpop.f32.mrb[0].mxu0
      %v1307 = vadd.f32 0.0, %v1306
      %v1308 = vpop.f32.mrb[0].mxu0
      %1309 = vmatprep.mubr.f32.mxu0 0.0
      %1310 = vmatmul.mubr.f32.gmra.mrb[0].mxu0 %v1110
      %v1311 = vpop.f32.mrb[0].mxu0
      %v1312 = vadd.f32 0.0, %v1311
      %v1313 = vpop.f32.mrb[0].mxu0
      %1314 = vmatprep.mubr.f32.mxu0 0.0
      %1315 = vmatmul.mubr.f32.gmra.mrb[0].mxu0 %v1113
      %v1316 = vpop.f32.mrb[0].mxu0
      %v1317 = vadd.f32 0.0, %v1316
      %v1318 = vpop.f32.mrb[0].mxu0
      %1319 = vmatprep.mubr.f32.mxu0 0.0
      %1320 = vmatmul.mubr.f32.gmra.mrb[0].mxu0 %v1116
      %v1321 = vpop.f32.mrb[0].mxu0
      %v1322 = vadd.f32 0.0, %v1321
      %v1323 = vpop.f32.mrb[0].mxu0
      %1324 = vmatprep.mubr.f32.mxu0 0.0
      %1325 = vmatmul.mubr.f32.gmra.mrb[0].mxu0 %v1119
      %v1326 = vpop.f32.mrb[0].mxu0
      %v1327 = vadd.f32 0.0, %v1326
      %v1328 = vpop.f32.mrb[0].mxu0
      %1329 = vmatprep.mubr.f32.mxu0 0.0
      %1330 = vmatmul.mubr.f32.gmra.mrb[0].mxu0 %v1122
      %v1331 = vpop.f32.mrb[0].mxu0
      %v1332 = vadd.f32 0.0, %v1331
      %v1333 = vpop.f32.mrb[0].mxu0
      %1334 = vmatprep.mubr.f32.mxu0 0.0
      %1335 = vmatmul.mubr.f32.gmra.mrb[0].mxu0 %v1125
      %v1336 = vpop.f32.mrb[0].mxu0
      %v1337 = vadd.f32 0.0, %v1336
      %v1338 = vpop.f32.mrb[0].mxu0
      %1339 = vmatprep.mubr.f32.mxu0 0.0
      %1340 = vmatmul.mubr.f32.gmra.mrb[0].mxu0 %v1128
      %v1341 = vpop.f32.mrb[0].mxu0
      %v1342 = vadd.f32 0.0, %v1341
      %v1343 = vpop.f32.mrb[0].mxu0
      %1344 = vmatprep.mubr.f32.mxu0 0.0
      %1345 = vmatmul.mubr.f32.gmra.mrb[0].mxu0 %v1131
      %v1346 = vpop.f32.mrb[0].mxu0
      %v1347 = vadd.f32 0.0, %v1346
      %v1348 = vpop.f32.mrb[0].mxu0
      %1349 = vmatprep.mubr.f32.mxu0 0.0
      %1350 = vmatmul.mubr.f32.gmra.mrb[0].mxu0 %v1134
      %v1351 = vpop.f32.mrb[0].mxu0
      %v1352 = vadd.f32 0.0, %v1351
      %v1353 = vpop.f32.mrb[0].mxu0
      %1354 = vmatprep.mubr.f32.mxu0 0.0
      %1355 = vmatmul.mubr.f32.gmra.mrb[0].mxu0 %v1137
      %v1356 = vpop.f32.mrb[0].mxu0
      %v1357 = vadd.f32 0.0, %v1356
      %v1358 = vpop.f32.mrb[0].mxu0
      %1359 = vmatprep.mubr.f32.mxu0 0.0
      %1360 = vmatmul.mubr.f32.gmra.mrb[0].mxu0 %v1140
      %v1361 = vpop.f32.mrb[0].mxu0
      %v1362 = vadd.f32 0.0, %v1361
      %v1363 = vpop.f32.mrb[0].mxu0
      %1364 = vmatprep.mubr.f32.mxu0 0.0
      %1365 = vmatmul.mubr.f32.gmra.mrb[0].mxu0 %v1143
      %v1366 = vpop.f32.mrb[0].mxu0
      %v1367 = vadd.f32 0.0, %v1366
      %v1368 = vpop.f32.mrb[0].mxu0
      %1369 = vdwg.mxu0
      %v1370 = vld [vmem:[#allocation2] sm:$0xff]
      %v1371 = vld [vmem:[#allocation2 + $0x8] sm:$0xff]
      %v1372 = vld [vmem:[#allocation2 + $0x10] sm:$0xff]
      %v1373 = vld [vmem:[#allocation2 + $0x18] sm:$0xff]
      %v1374 = vld [vmem:[#allocation2 + $0x20] sm:$0xff]
      %v1375 = vld [vmem:[#allocation2 + $0x28] sm:$0xff]
      %v1376 = vld [vmem:[#allocation2 + $0x30] sm:$0xff]
      %v1377 = vld [vmem:[#allocation2 + $0x38] sm:$0xff]
      %v1378 = vld [vmem:[#allocation2 + $0x40] sm:$0xff]
      %v1379 = vld [vmem:[#allocation2 + $0x48] sm:$0xff]
      %v1380 = vld [vmem:[#allocation2 + $0x50] sm:$0xff]
      %v1381 = vld [vmem:[#allocation2 + $0x58] sm:$0xff]
      %v1382 = vld [vmem:[#allocation2 + $0x60] sm:$0xff]
      %v1383 = vld [vmem:[#allocation2 + $0x68] sm:$0xff]
      %v1384 = vld [vmem:[#allocation2 + $0x70] sm:$0xff]
      %v1385 = vld [vmem:[#allocation2 + $0x78] sm:$0xff]
      %v1386 = vld [vmem:[#allocation2 + $0x80] sm:$0xff]
      %v1387 = vld [vmem:[#allocation2 + $0x88] sm:$0xff]
      %v1388 = vld [vmem:[#allocation2 + $0x90] sm:$0xff]
      %v1389 = vld [vmem:[#allocation2 + $0x98] sm:$0xff]
      %v1390 = vld [vmem:[#allocation2 + $0xa0] sm:$0xff]
      %v1391 = vld [vmem:[#allocation2 + $0xa8] sm:$0xff]
      %v1392 = vld [vmem:[#allocation2 + $0xb0] sm:$0xff]
      %v1393 = vld [vmem:[#allocation2 + $0xb8] sm:$0xff]
      %v1394 = vld [vmem:[#allocation2 + $0xc0] sm:$0xff]
      %v1395 = vld [vmem:[#allocation2 + $0xc8] sm:$0xff]
      %v1396 = vld [vmem:[#allocation2 + $0xd0] sm:$0xff]
      %v1397 = vld [vmem:[#allocation2 + $0xd8] sm:$0xff]
      %v1398 = vld [vmem:[#allocation2 + $0xe0] sm:$0xff]
      %v1399 = vld [vmem:[#allocation2 + $0xe8] sm:$0xff]
      %v1400 = vld [vmem:[#allocation2 + $0xf0] sm:$0xff]
      %v1401 = vld [vmem:[#allocation2 + $0xf8] sm:$0xff]
      %v1402 = vadd.f32 %v1370, %v1212
      %v1403 = vadd.f32 %v1371, %v1217
      %v1404 = vadd.f32 %v1372, %v1222
      %v1405 = vadd.f32 %v1373, %v1227
      %v1406 = vadd.f32 %v1374, %v1232
      %v1407 = vadd.f32 %v1375, %v1237
      %v1408 = vadd.f32 %v1376, %v1242
      %v1409 = vadd.f32 %v1377, %v1247
      %v1410 = vadd.f32 %v1378, %v1252
      %v1411 = vadd.f32 %v1379, %v1257
      %v1412 = vadd.f32 %v1380, %v1262
      %v1413 = vadd.f32 %v1381, %v1267
      %v1414 = vadd.f32 %v1382, %v1272
      %v1415 = vadd.f32 %v1383, %v1277
      %v1416 = vadd.f32 %v1384, %v1282
      %v1417 = vadd.f32 %v1385, %v1287
      %v1418 = vadd.f32 %v1386, %v1292
      %v1419 = vadd.f32 %v1387, %v1297
      %v1420 = vadd.f32 %v1388, %v1302
      %v1421 = vadd.f32 %v1389, %v1307
      %v1422 = vadd.f32 %v1390, %v1312
      %v1423 = vadd.f32 %v1391, %v1317
      %v1424 = vadd.f32 %v1392, %v1322
      %v1425 = vadd.f32 %v1393, %v1327
      %v1426 = vadd.f32 %v1394, %v1332
      %v1427 = vadd.f32 %v1395, %v1337
      %v1428 = vadd.f32 %v1396, %v1342
      %v1429 = vadd.f32 %v1397, %v1347
      %v1430 = vadd.f32 %v1398, %v1352
      %v1431 = vadd.f32 %v1399, %v1357
      %v1432 = vadd.f32 %v1400, %v1362
      %v1433 = vadd.f32 %v1401, %v1367
      %1434 = vst [vmem:[#allocation2] sm:$0xff] %v1402
      %1435 = vst [vmem:[#allocation2 + $0x8] sm:$0xff] %v1403
      %1436 = vst [vmem:[#allocation2 + $0x10] sm:$0xff] %v1404
      %1437 = vst [vmem:[#allocation2 + $0x18] sm:$0xff] %v1405
      %1438 = vst [vmem:[#allocation2 + $0x20] sm:$0xff] %v1406
      %1439 = vst [vmem:[#allocation2 + $0x28] sm:$0xff] %v1407
      %1440 = vst [vmem:[#allocation2 + $0x30] sm:$0xff] %v1408
      %1441 = vst [vmem:[#allocation2 + $0x38] sm:$0xff] %v1409
      %1442 = vst [vmem:[#allocation2 + $0x40] sm:$0xff] %v1410
      %1443 = vst [vmem:[#allocation2 + $0x48] sm:$0xff] %v1411
      %1444 = vst [vmem:[#allocation2 + $0x50] sm:$0xff] %v1412
      %1445 = vst [vmem:[#allocation2 + $0x58] sm:$0xff] %v1413
      %1446 = vst [vmem:[#allocation2 + $0x60] sm:$0xff] %v1414
      %1447 = vst [vmem:[#allocation2 + $0x68] sm:$0xff] %v1415
      %1448 = vst [vmem:[#allocation2 + $0x70] sm:$0xff] %v1416
      %1449 = vst [vmem:[#allocation2 + $0x78] sm:$0xff] %v1417
      %1450 = vst [vmem:[#allocation2 + $0x80] sm:$0xff] %v1418
      %1451 = vst [vmem:[#allocation2 + $0x88] sm:$0xff] %v1419
      %1452 = vst [vmem:[#allocation2 + $0x90] sm:$0xff] %v1420
      %1453 = vst [vmem:[#allocation2 + $0x98] sm:$0xff] %v1421
      %1454 = vst [vmem:[#allocation2 + $0xa0] sm:$0xff] %v1422
      %1455 = vst [vmem:[#allocation2 + $0xa8] sm:$0xff] %v1423
      %1456 = vst [vmem:[#allocation2 + $0xb0] sm:$0xff] %v1424
      %1457 = vst [vmem:[#allocation2 + $0xb8] sm:$0xff] %v1425
      %1458 = vst [vmem:[#allocation2 + $0xc0] sm:$0xff] %v1426
      %1459 = vst [vmem:[#allocation2 + $0xc8] sm:$0xff] %v1427
      %1460 = vst [vmem:[#allocation2 + $0xd0] sm:$0xff] %v1428
      %1461 = vst [vmem:[#allocation2 + $0xd8] sm:$0xff] %v1429
      %1462 = vst [vmem:[#allocation2 + $0xe0] sm:$0xff] %v1430
      %1463 = vst [vmem:[#allocation2 + $0xe8] sm:$0xff] %v1431
      %1464 = vst [vmem:[#allocation2 + $0xf0] sm:$0xff] %v1432
      %1465 = vst [vmem:[#allocation2 + $0xf8] sm:$0xff] %v1433
      %v1466 = vld [vmem:[#allocation2] sm:$0xff]
      %v1467 = vld [vmem:[#allocation2 + $0x8] sm:$0xff]
      %v1468 = vld [vmem:[#allocation2 + $0x10] sm:$0xff]
      %v1469 = vld [vmem:[#allocation2 + $0x18] sm:$0xff]
      %v1470 = vld [vmem:[#allocation2 + $0x20] sm:$0xff]
      %v1471 = vld [vmem:[#allocation2 + $0x28] sm:$0xff]
      %v1472 = vld [vmem:[#allocation2 + $0x30] sm:$0xff]
      %v1473 = vld [vmem:[#allocation2 + $0x38] sm:$0xff]
      %v1474 = vld [vmem:[#allocation2 + $0x40] sm:$0xff]
      %v1475 = vld [vmem:[#allocation2 + $0x48] sm:$0xff]
      %v1476 = vld [vmem:[#allocation2 + $0x50] sm:$0xff]
      %v1477 = vld [vmem:[#allocation2 + $0x58] sm:$0xff]
      %v1478 = vld [vmem:[#allocation2 + $0x60] sm:$0xff]
      %v1479 = vld [vmem:[#allocation2 + $0x68] sm:$0xff]
      %v1480 = vld [vmem:[#allocation2 + $0x70] sm:$0xff]
      %v1481 = vld [vmem:[#allocation2 + $0x78] sm:$0xff]
      %v1482 = vld [vmem:[#allocation2 + $0x80] sm:$0xff]
      %v1483 = vld [vmem:[#allocation2 + $0x88] sm:$0xff]
      %v1484 = vld [vmem:[#allocation2 + $0x90] sm:$0xff]
      %v1485 = vld [vmem:[#allocation2 + $0x98] sm:$0xff]
      %v1486 = vld [vmem:[#allocation2 + $0xa0] sm:$0xff]
      %v1487 = vld [vmem:[#allocation2 + $0xa8] sm:$0xff]
      %v1488 = vld [vmem:[#allocation2 + $0xb0] sm:$0xff]
      %v1489 = vld [vmem:[#allocation2 + $0xb8] sm:$0xff]
      %v1490 = vld [vmem:[#allocation2 + $0xc0] sm:$0xff]
      %v1491 = vld [vmem:[#allocation2 + $0xc8] sm:$0xff]
      %v1492 = vld [vmem:[#allocation2 + $0xd0] sm:$0xff]
      %v1493 = vld [vmem:[#allocation2 + $0xd8] sm:$0xff]
      %v1494 = vld [vmem:[#allocation2 + $0xe0] sm:$0xff]
      %v1495 = vld [vmem:[#allocation2 + $0xe8] sm:$0xff]
      %v1496 = vld [vmem:[#allocation2 + $0xf0] sm:$0xff]
      %v1497 = vld [vmem:[#allocation2 + $0xf8] sm:$0xff]
      %v1498 = vld [vmem:[%s2] sm:$0x1]
      %v1500 = vlaneseq
      %v1501 = vshrl.u32 %v1500, 7
      %v1502 = vsub.s32 0, %v1501
      %v1503 = vrot.slane %v1498, %v1502
      %v1505 = vadd.f32 %v1466, %v1503
      %v1506 = vadd.f32 %v1467, %v1503
      %v1507 = vadd.f32 %v1468, %v1503
      %v1508 = vadd.f32 %v1469, %v1503
      %v1509 = vadd.f32 %v1470, %v1503
      %v1510 = vadd.f32 %v1471, %v1503
      %v1511 = vadd.f32 %v1472, %v1503
      %v1512 = vadd.f32 %v1473, %v1503
      %v1513 = vadd.f32 %v1474, %v1503
      %v1514 = vadd.f32 %v1475, %v1503
      %v1515 = vadd.f32 %v1476, %v1503
      %v1516 = vadd.f32 %v1477, %v1503
      %v1517 = vadd.f32 %v1478, %v1503
      %v1518 = vadd.f32 %v1479, %v1503
      %v1519 = vadd.f32 %v1480, %v1503
      %v1520 = vadd.f32 %v1481, %v1503
      %v1521 = vadd.f32 %v1482, %v1503
      %v1522 = vadd.f32 %v1483, %v1503
      %v1523 = vadd.f32 %v1484, %v1503
      %v1524 = vadd.f32 %v1485, %v1503
      %v1525 = vadd.f32 %v1486, %v1503
      %v1526 = vadd.f32 %v1487, %v1503
      %v1527 = vadd.f32 %v1488, %v1503
      %v1528 = vadd.f32 %v1489, %v1503
      %v1529 = vadd.f32 %v1490, %v1503
      %v1530 = vadd.f32 %v1491, %v1503
      %v1531 = vadd.f32 %v1492, %v1503
      %v1532 = vadd.f32 %v1493, %v1503
      %v1533 = vadd.f32 %v1494, %v1503
      %v1534 = vadd.f32 %v1495, %v1503
      %v1535 = vadd.f32 %v1496, %v1503
      %v1536 = vadd.f32 %v1497, %v1503
      %v1537 = vmax.f32 %v1505, 0.0
      %v1538 = vmax.f32 %v1506, 0.0
      %v1539 = vmax.f32 %v1507, 0.0
      %v1540 = vmax.f32 %v1508, 0.0
      %v1541 = vmax.f32 %v1509, 0.0
      %v1542 = vmax.f32 %v1510, 0.0
      %v1543 = vmax.f32 %v1511, 0.0
      %v1544 = vmax.f32 %v1512, 0.0
      %v1545 = vmax.f32 %v1513, 0.0
      %v1546 = vmax.f32 %v1514, 0.0
      %v1547 = vmax.f32 %v1515, 0.0
      %v1548 = vmax.f32 %v1516, 0.0
      %v1549 = vmax.f32 %v1517, 0.0
      %v1550 = vmax.f32 %v1518, 0.0
      %v1551 = vmax.f32 %v1519, 0.0
      %v1552 = vmax.f32 %v1520, 0.0
      %v1553 = vmax.f32 %v1521, 0.0
      %v1554 = vmax.f32 %v1522, 0.0
      %v1555 = vmax.f32 %v1523, 0.0
      %v1556 = vmax.f32 %v1524, 0.0
      %v1557 = vmax.f32 %v1525, 0.0
      %v1558 = vmax.f32 %v1526, 0.0
      %v1559 = vmax.f32 %v1527, 0.0
      %v1560 = vmax.f32 %v1528, 0.0
      %v1561 = vmax.f32 %v1529, 0.0
      %v1562 = vmax.f32 %v1530, 0.0
      %v1563 = vmax.f32 %v1531, 0.0
      %v1564 = vmax.f32 %v1532, 0.0
      %v1565 = vmax.f32 %v1533, 0.0
      %v1566 = vmax.f32 %v1534, 0.0
      %v1567 = vmax.f32 %v1535, 0.0
      %v1568 = vmax.f32 %v1536, 0.0
      %1569 = vst [vmem:[%s170] sm:$0xff] %v1537
      %1570 = vst [vmem:[%s170 + $0x8] sm:$0xff] %v1538
      %1571 = vst [vmem:[%s170 + $0x10] sm:$0xff] %v1539
      %1572 = vst [vmem:[%s170 + $0x18] sm:$0xff] %v1540
      %1573 = vst [vmem:[%s170 + $0x20] sm:$0xff] %v1541
      %1574 = vst [vmem:[%s170 + $0x28] sm:$0xff] %v1542
      %1575 = vst [vmem:[%s170 + $0x30] sm:$0xff] %v1543
      %1576 = vst [vmem:[%s170 + $0x38] sm:$0xff] %v1544
      %1577 = vst [vmem:[%s170 + $0x40] sm:$0xff] %v1545
      %1578 = vst [vmem:[%s170 + $0x48] sm:$0xff] %v1546
      %1579 = vst [vmem:[%s170 + $0x50] sm:$0xff] %v1547
      %1580 = vst [vmem:[%s170 + $0x58] sm:$0xff] %v1548
      %1581 = vst [vmem:[%s170 + $0x60] sm:$0xff] %v1549
      %1582 = vst [vmem:[%s170 + $0x68] sm:$0xff] %v1550
      %1583 = vst [vmem:[%s170 + $0x70] sm:$0xff] %v1551
      %1584 = vst [vmem:[%s170 + $0x78] sm:$0xff] %v1552
      %1585 = vst [vmem:[%s170 + $0x80] sm:$0xff] %v1553
      %1586 = vst [vmem:[%s170 + $0x88] sm:$0xff] %v1554
      %1587 = vst [vmem:[%s170 + $0x90] sm:$0xff] %v1555
      %1588 = vst [vmem:[%s170 + $0x98] sm:$0xff] %v1556
      %1589 = vst [vmem:[%s170 + $0xa0] sm:$0xff] %v1557
      %1590 = vst [vmem:[%s170 + $0xa8] sm:$0xff] %v1558
      %1591 = vst [vmem:[%s170 + $0xb0] sm:$0xff] %v1559
      %1592 = vst [vmem:[%s170 + $0xb8] sm:$0xff] %v1560
      %1593 = vst [vmem:[%s170 + $0xc0] sm:$0xff] %v1561
      %1594 = vst [vmem:[%s170 + $0xc8] sm:$0xff] %v1562
      %1595 = vst [vmem:[%s170 + $0xd0] sm:$0xff] %v1563
      %1596 = vst [vmem:[%s170 + $0xd8] sm:$0xff] %v1564
      %1597 = vst [vmem:[%s170 + $0xe0] sm:$0xff] %v1565
      %1598 = vst [vmem:[%s170 + $0xe8] sm:$0xff] %v1566
      %1599 = vst [vmem:[%s170 + $0xf0] sm:$0xff] %v1567
      %1600 = vst [vmem:[%s170 + $0xf8] sm:$0xff] %v1568
      %p1601 = scmp.lt.s32.totalorder %s14, 1
      %s1602 = scalar_select %p1601, %s14, 1
      %s1603 = smul.addr %s1602, 32
      %s1604 = smul.addr %s1603, 8
      %s1605 = scalar_lea.vmem %s3, %s1604
      // Predicated region
      $region33: #{conv_block_forward.2} parent=31 // pred_check
        %p1606 = pneg %p100
      $region34: #{conv_block_forward.2} parent=31 // pred_check_branch
        %1608 = sbr.rel (%p1606) target = $region36
      $region35: #{conv_block_forward.2} parent=31 // pred_region
        _
      $region36: #{conv_block_forward.2} parent=31 // pred_fallthru
        _
    $region32: #{conv_block_forward.2} parent=5 // pred_fallthru
      _
    %p1609 = scmp.le.s32.totalorder 2, %s9
    // Predicated region
    $region37: #{conv_block_forward.2} parent=5 // pred_check
      %p1610 = pneg %p1609
    $region38: #{conv_block_forward.2} parent=5 // pred_check_branch
      %1612 = sbr.rel (%p1610) target = $region40
    $region39: #{conv_block_forward.2} parent=5 // pred_region
      %s1613 = ssub.s32 %s9, 2
      // Predicated region
      $region41: #{conv_block_forward.2} parent=39 // pred_check
        %p1614 = pneg %p106
      $region42: #{conv_block_forward.2} parent=39 // pred_check_branch
        %1616 = sbr.rel (%p1614) target = $region44
      $region43: #{conv_block_forward.2} parent=39 // pred_region
        %p1617 = scmp.lt.s32.totalorder %s15, 1
        %s1618 = scalar_select %p1617, %s15, 1
        %s1619 = smul.addr %s1618, 32
        %s1620 = smul.addr %s1619, 8
        %s1621 = scalar_lea.vmem %s3, %s1620
      $region44: #{conv_block_forward.2} parent=39 // pred_fallthru
        _
    $region40: #{conv_block_forward.2} parent=5 // pred_fallthru
      _
  $region6: #{conv_block_forward.2} parent=0 // loop_footer
    %s13 = sadd.s32 1, %s9
  $region7: #{conv_block_forward.2} parent=0 // loop_footer_branch
    %8 = sbr.rel target = $region3
  $region8: #{conv_block_forward.2} parent=0 // loop_exit
    _

// kernel: conv_block_forward.3
$region0: #{conv_block_forward.3}
  #allocation0 [shape = 'u32[]', space=smem, size = 0x4, offset = 0x4, fixed_abs, tag = 'smem constant byte address 0x4 - core index']
  #allocation1 [shape = 'u32[144,128]{1,0:T(1,128)}', space=vmem, size = 0x12000, scoped, tag = 'internal scratch']
  #allocation2 [shape = 'f32[256,128]{1,0:T(8,128)}', space=vmem, size = 0x20000, scoped, tag = 'scratch operand']
  %s0 = inlined_call_operand.vmem [shape: f32[2,288,384], index: 0, kind: input, shape index: {}]
  %s1 = inlined_call_operand.vmem [shape: f32[3,384,128], index: 1, kind: input, shape index: {}]
  %s2 = inlined_call_operand.vmem [shape: f32[1,128], index: 2, kind: input, shape index: {}]
  %s3 = inlined_call_operand.vmem [shape: f32[2,256,128], index: 3, kind: output, shape index: {}]
  %s4 = sld [smem:[#allocation0]]
  $region45: #{conv_block_forward.3} parent=0
    _
  %s6 = ssub.s32 1, %s4
  %s7 = scalar_select 0, %s6, %s4
  loop: start=0, step=1, limit=4
  $region2: #{conv_block_forward.3} parent=0 // loop_pre_header
    _
  $region3: #{conv_block_forward.3} parent=0 // loop_header
    %s9 = sphi 0, %s13
    %p10 = scmp.ge.s32.totalorder %s9, 4
    %s19 = sphi 0, %s21
    %s22 = sphi 0, %s19
    %s23 = sphi 0, %s22
    %s39 = sphi 0, %s23
    %s43 = sphi 0, %s43
    %s45 = sphi 0, %s43
    %s46 = sphi 0, %s45
    %s60 = sphi 0, %s46
    %s64 = sphi 0, %s64
    %s66 = sphi 0, %s64
    %s67 = sphi 0, %s66
    %s81 = sphi 0, %s67
    %s87 = sphi 0, %s89
    %s90 = sphi 0, %s87
    %s91 = sphi 0, %s90
    %s107 = sphi 0, %s91
  $region4: #{conv_block_forward.3} parent=0 // loop_header_branch
    %12 = sbr.rel (%p10) target = $region8
  $region5: #{conv_block_forward.3} parent=0 // loop_body
    %s14 = ssub.s32 %s9, 1
    %s15 = ssub.s32 %s9, 2
    %s16 = sadd.s32 %s9, 1
    %s17 = ssub.s32 %s9, %s16
    %p18 = scmp.eq.s32.totalorder %s17, 0
    %s20 = sadd.s32 %s19, 1
    %s21 = scalar_select %p18, %s19, %s20
    %p24 = pneg %p18
    %p25 = scmp.eq.s32.totalorder %s9, 1
    %p26 = por %p24, %p25
    %p27 = scmp.ne.s32.totalorder %s19, %s22
    %p28 = scmp.eq.s32.totalorder %s9, 0
    %p29 = por %p27, %p28
    %p30 = scmp.ne.s32.totalorder %s19, %s22
    %p31 = scmp.eq.s32.totalorder %s14, 1
    %p32 = por %p30, %p31
    %p33 = scmp.ne.s32.totalorder %s22, %s23
    %p34 = scmp.eq.s32.totalorder %s14, 0
    %p35 = por %p33, %p34
    %p36 = scmp.ne.s32.totalorder %s22, %s23
    %p37 = scmp.eq.s32.totalorder %s15, 1
    %p38 = por %p36, %p37
    %p40 = scmp.ne.s32.totalorder %s23, %s39
    %p41 = scmp.eq.s32.totalorder %s15, 0
    %p42 = por %p40, %p41
    %s44 = sadd.s32 %s43, 1
    %p47 = scmp.eq.s32.totalorder %s9, 1
    %p48 = scmp.ne.s32.totalorder %s43, %s45
    %p49 = scmp.eq.s32.totalorder %s9, 0
    %p50 = por %p48, %p49
    %p51 = scmp.ne.s32.totalorder %s43, %s45
    %p52 = scmp.eq.s32.totalorder %s14, 1
    %p53 = por %p51, %p52
    %p54 = scmp.ne.s32.totalorder %s45, %s46
    %p55 = scmp.eq.s32.totalorder %s14, 0
    %p56 = por %p54, %p55
    %p57 = scmp.ne.s32.totalorder %s45, %s46
    %p58 = scmp.eq.s32.totalorder %s15, 1
    %p59 = por %p57, %p58
    %p61 = scmp.ne.s32.totalorder %s46, %s60
    %p62 = scmp.eq.s32.totalorder %s15, 0
    %p63 = por %p61, %p62
    %s65 = sadd.s32 %s64, 1
    %p68 = scmp.eq.s32.totalorder %s9, 1
    %p69 = scmp.ne.s32.totalorder %s64, %s66
    %p70 = scmp.eq.s32.totalorder %s9, 0
    %p71 = por %p69, %p70
    %p72 = scmp.ne.s32.totalorder %s64, %s66
    %p73 = scmp.eq.s32.totalorder %s14, 1
    %p74 = por %p72, %p73
    %p75 = scmp.ne.s32.totalorder %s66, %s67
    %p76 = scmp.eq.s32.totalorder %s14, 0
    %p77 = por %p75, %p76
    %p78 = scmp.ne.s32.totalorder %s66, %s67
    %p79 = scmp.eq.s32.totalorder %s15, 1
    %p80 = por %p78, %p79
    %p82 = scmp.ne.s32.totalorder %s67, %s81
    %p83 = scmp.eq.s32.totalorder %s15, 0
    %p84 = por %p82, %p83
    %s85 = ssub.s32 %s9, %s16
    %p86 = scmp.eq.s32.totalorder %s85, 0
    %s88 = sadd.s32 %s87, 1
    %s89 = scalar_select %p86, %s87, %s88
    %p92 = pneg %p86
    %p93 = scmp.eq.s32.totalorder %s9, 1
    %p94 = por %p92, %p93
    %p95 = scmp.ne.s32.totalorder %s87, %s90
    %p96 = scmp.eq.s32.totalorder %s9, 0
    %p97 = por %p95, %p96
    %p98 = scmp.ne.s32.totalorder %s87, %s90
    %p99 = scmp.eq.s32.totalorder %s14, 1
    %p100 = por %p98, %p99
    %p101 = scmp.ne.s32.totalorder %s90, %s91
    %p102 = scmp.eq.s32.totalorder %s14, 0
    %p103 = por %p101, %p102
    %p104 = scmp.ne.s32.totalorder %s90, %s91
    %p105 = scmp.eq.s32.totalorder %s15, 1
    %p106 = por %p104, %p105
    %p108 = scmp.ne.s32.totalorder %s91, %s107
    %p109 = scmp.eq.s32.totalorder %s15, 0
    %p110 = por %p108, %p109
    %p111 = scmp.le.s32.totalorder 1, %s9
    %p112 = scmp.lt.s32.totalorder %s9, 3
    %p113 = pnand %p111, %p112
    %p114 = pneg %p113
    // Predicated region
    $region9: #{conv_block_forward.3} parent=5 // pred_check
      _
    $region10: #{conv_block_forward.3} parent=5 // pred_check_branch
      %116 = sbr.rel (%p113) target = $region12
    $region11: #{conv_block_forward.3} parent=5 // pred_region
      %s117 = ssub.s32 %s9, 1
      // Predicated region
      $region13: #{conv_block_forward.3} parent=11 // pred_check
        %p118 = pneg %p56
      $region14: #{conv_block_forward.3} parent=11 // pred_check_branch
        %120 = sbr.rel (%p118) target = $region16
      $region15: #{conv_block_forward.3} parent=11 // pred_region
        _
      $region16: #{conv_block_forward.3} parent=11 // pred_fallthru
        _
      // Predicated region
      $region17: #{conv_block_forward.3} parent=11 // pred_check
        %p121 = pneg %p77
      $region18: #{conv_block_forward.3} parent=11 // pred_check_branch
        %123 = sbr.rel (%p121) target = $region20
      $region19: #{conv_block_forward.3} parent=11 // pred_region
        _
      $region20: #{conv_block_forward.3} parent=11 // pred_fallthru
        _
    $region12: #{conv_block_forward.3} parent=5 // pred_fallthru
      _
    %p124 = scmp.lt.s32.totalorder %s9, 2
    // Predicated region
    $region21: #{conv_block_forward.3} parent=5 // pred_check
      %p125 = pneg %p124
    $region22: #{conv_block_forward.3} parent=5 // pred_check_branch
      %127 = sbr.rel (%p125) target = $region24
    $region23: #{conv_block_forward.3} parent=5 // pred_region
      // Predicated region
      $region25: #{conv_block_forward.3} parent=23 // pred_check
        %p128 = pneg %p29
      $region26: #{conv_block_forward.3} parent=23 // pred_check_branch
        %130 = sbr.rel (%p128) target = $region28
      $region27: #{conv_block_forward.3} parent=23 // pred_region
        %p131 = scmp.lt.s32.totalorder %s9, 1
        %s132 = scalar_select %p131, %s9, 1
        %s133 = smul.addr %s132, 108
        %s134 = smul.addr %s133, 8
        %s135 = scalar_lea.vmem %s0, %s134
      $region28: #{conv_block_forward.3} parent=23 // pred_fallthru
        _
    $region24: #{conv_block_forward.3} parent=5 // pred_fallthru
      _
    %p136 = scmp.le.s32.totalorder 1, %s9
    %p137 = scmp.lt.s32.totalorder %s9, 3
    %p138 = pnand %p136, %p137
    %p139 = pneg %p138
    // Predicated region
    $region29: #{conv_block_forward.3} parent=5 // pred_check
      _
    $region30: #{conv_block_forward.3} parent=5 // pred_check_branch
      %141 = sbr.rel (%p138) target = $region32
    $region31: #{conv_block_forward.3} parent=5 // pred_region
      %s142 = ssub.s32 %s9, 1
      %p143 = scmp.lt.s32.totalorder %s14, 1
      %s144 = scalar_select %p143, %s14, 1
      %s145 = smul.addr %s144, 108
      %s146 = smul.addr %s145, 8
      %s147 = scalar_lea.vmem %s0, %s146
      %p148 = pneg %p35
      %p149 = pneg %p32
      %p150 = pneg %p56
      %p151 = pneg %p53
      %p152 = pneg %p77
      %p153 = pneg %p74
      %p154 = pneg %p103
      %p155 = pneg %p100
      %p156 = scmp.lt.s32.totalorder %s14, 1
      %s157 = scalar_select %p156, %s14, 1
      %s158 = smul.addr %s157, 32
      %s159 = smul.addr %s158, 8
      %s160 = scalar_lea.vmem %s3, %s159
      %p161 = scmp.lt.s32.totalorder %s14, 1
      %s162 = scalar_select %p161, %s14, 1
      %s163 = smul.addr %s162, 108
      %s164 = smul.addr %s163, 8
      %s165 = scalar_lea.vmem %s0, %s164
      %p166 = scmp.lt.s32.totalorder %s14, 1
      %s167 = scalar_select %p166, %s14, 1
      %s168 = smul.addr %s167, 32
      %s169 = smul.addr %s168, 8
      %s170 = scalar_lea.vmem %s3, %s169
      %v171 = vld [vmem:[%s165] sm:$0xff]
      %v172 = vld [vmem:[%s165 + $0x8] sm:$0xff]
      %v173 = vld [vmem:[%s165 + $0x10] sm:$0xff]
      %v174 = vld [vmem:[%s165 + $0x18] sm:$0xff]
      %v175 = vld [vmem:[%s165 + $0x20] sm:$0xff]
      %v176 = vld [vmem:[%s165 + $0x28] sm:$0xff]
      %v177 = vld [vmem:[%s165 + $0x30] sm:$0xff]
      %v178 = vld [vmem:[%s165 + $0x38] sm:$0xff]
      %v179 = vld [vmem:[%s165 + $0x40] sm:$0xff]
      %v180 = vld [vmem:[%s165 + $0x48] sm:$0xff]
      %v181 = vld [vmem:[%s165 + $0x50] sm:$0xff]
      %v182 = vld [vmem:[%s165 + $0x58] sm:$0xff]
      %v183 = vld [vmem:[%s165 + $0x60] sm:$0xff]
      %v184 = vld [vmem:[%s165 + $0x68] sm:$0xff]
      %v185 = vld [vmem:[%s165 + $0x70] sm:$0xff]
      %v186 = vld [vmem:[%s165 + $0x78] sm:$0xff]
      %v187 = vld [vmem:[%s165 + $0x80] sm:$0xff]
      %v188 = vld [vmem:[%s165 + $0x88] sm:$0xff]
      %v189 = vld [vmem:[%s165 + $0x90] sm:$0xff]
      %v190 = vld [vmem:[%s165 + $0x98] sm:$0xff]
      %v191 = vld [vmem:[%s165 + $0xa0] sm:$0xff]
      %v192 = vld [vmem:[%s165 + $0xa8] sm:$0xff]
      %v193 = vld [vmem:[%s165 + $0xb0] sm:$0xff]
      %v194 = vld [vmem:[%s165 + $0xb8] sm:$0xff]
      %v195 = vld [vmem:[%s165 + $0xc0] sm:$0xff]
      %v196 = vld [vmem:[%s165 + $0xc8] sm:$0xff]
      %v197 = vld [vmem:[%s165 + $0xd0] sm:$0xff]
      %v198 = vld [vmem:[%s165 + $0xd8] sm:$0xff]
      %v199 = vld [vmem:[%s165 + $0xe0] sm:$0xff]
      %v200 = vld [vmem:[%s165 + $0xe8] sm:$0xff]
      %v201 = vld [vmem:[%s165 + $0xf0] sm:$0xff]
      %v202 = vld [vmem:[%s165 + $0xf8] sm:$0xff]
      %v203 = vld [vmem:[%s165 + $0x100] sm:$0xff]
      %v204 = vld [vmem:[%s165 + $0x108] sm:$0xff]
      %v205 = vld [vmem:[%s165 + $0x110] sm:$0xff]
      %v206 = vld [vmem:[%s165 + $0x118] sm:$0xff]
      %v207 = vld [vmem:[%s165 + $0x120] sm:$0xff]
      %v208 = vld [vmem:[%s165 + $0x128] sm:$0xff]
      %v209 = vld [vmem:[%s165 + $0x130] sm:$0xff]
      %v210 = vld [vmem:[%s165 + $0x138] sm:$0xff]
      %v211 = vld [vmem:[%s165 + $0x140] sm:$0xff]
      %v212 = vld [vmem:[%s165 + $0x148] sm:$0xff]
      %v213 = vld [vmem:[%s165 + $0x150] sm:$0xff]
      %v214 = vld [vmem:[%s165 + $0x158] sm:$0xff]
      %v215 = vld [vmem:[%s165 + $0x160] sm:$0xff]
      %v216 = vld [vmem:[%s165 + $0x168] sm:$0xff]
      %v217 = vld [vmem:[%s165 + $0x170] sm:$0xff]
      %v218 = vld [vmem:[%s165 + $0x178] sm:$0xff]
      %v219 = vld [vmem:[%s165 + $0x180] sm:$0xff]
      %v220 = vld [vmem:[%s165 + $0x188] sm:$0xff]
      %v221 = vld [vmem:[%s165 + $0x190] sm:$0xff]
      %v222 = vld [vmem:[%s165 + $0x198] sm:$0xff]
      %v223 = vld [vmem:[%s165 + $0x1a0] sm:$0xff]
      %v224 = vld [vmem:[%s165 + $0x1a8] sm:$0xff]
      %v225 = vld [vmem:[%s165 + $0x1b0] sm:$0xff]
      %v226 = vld [vmem:[%s165 + $0x1b8] sm:$0xff]
      %v227 = vld [vmem:[%s165 + $0x1c0] sm:$0xff]
      %v228 = vld [vmem:[%s165 + $0x1c8] sm:$0xff]
      %v229 = vld [vmem:[%s165 + $0x1d0] sm:$0xff]
      %v230 = vld [vmem:[%s165 + $0x1d8] sm:$0xff]
      %v231 = vld [vmem:[%s165 + $0x1e0] sm:$0xff]
      %v232 = vld [vmem:[%s165 + $0x1e8] sm:$0xff]
      %v233 = vld [vmem:[%s165 + $0x1f0] sm:$0xff]
      %v234 = vld [vmem:[%s165 + $0x1f8] sm:$0xff]
      %v235 = vld [vmem:[%s165 + $0x200] sm:$0xff]
      %v236 = vld [vmem:[%s165 + $0x208] sm:$0xff]
      %v237 = vld [vmem:[%s165 + $0x210] sm:$0xff]
      %v238 = vld [vmem:[%s165 + $0x218] sm:$0xff]
      %v239 = vld [vmem:[%s165 + $0x220] sm:$0xff]
      %v240 = vld [vmem:[%s165 + $0x228] sm:$0xff]
      %v241 = vld [vmem:[%s165 + $0x230] sm:$0xff]
      %v242 = vld [vmem:[%s165 + $0x238] sm:$0xff]
      %v243 = vld [vmem:[%s165 + $0x240] sm:$0xff]
      %v244 = vld [vmem:[%s165 + $0x248] sm:$0xff]
      %v245 = vld [vmem:[%s165 + $0x250] sm:$0xff]
      %v246 = vld [vmem:[%s165 + $0x258] sm:$0xff]
      %v247 = vld [vmem:[%s165 + $0x260] sm:$0xff]
      %v248 = vld [vmem:[%s165 + $0x268] sm:$0xff]
      %v249 = vld [vmem:[%s165 + $0x270] sm:$0xff]
      %v250 = vld [vmem:[%s165 + $0x278] sm:$0xff]
      %v251 = vld [vmem:[%s165 + $0x280] sm:$0xff]
      %v252 = vld [vmem:[%s165 + $0x288] sm:$0xff]
      %v253 = vld [vmem:[%s165 + $0x290] sm:$0xff]
      %v254 = vld [vmem:[%s165 + $0x298] sm:$0xff]
      %v255 = vld [vmem:[%s165 + $0x2a0] sm:$0xff]
      %v256 = vld [vmem:[%s165 + $0x2a8] sm:$0xff]
      %v257 = vld [vmem:[%s165 + $0x2b0] sm:$0xff]
      %v258 = vld [vmem:[%s165 + $0x2b8] sm:$0xff]
      %v259 = vld [vmem:[%s165 + $0x2c0] sm:$0xff]
      %v260 = vld [vmem:[%s165 + $0x2c8] sm:$0xff]
      %v261 = vld [vmem:[%s165 + $0x2d0] sm:$0xff]
      %v262 = vld [vmem:[%s165 + $0x2d8] sm:$0xff]
      %v263 = vld [vmem:[%s165 + $0x2e0] sm:$0xff]
      %v264 = vld [vmem:[%s165 + $0x2e8] sm:$0xff]
      %v265 = vld [vmem:[%s165 + $0x2f0] sm:$0xff]
      %v266 = vld [vmem:[%s165 + $0x2f8] sm:$0xff]
      %v267 = vld [vmem:[%s1] sm:$0xff]
      %v268 = vld [vmem:[%s1 + $0x8] sm:$0xff]
      %v269 = vld [vmem:[%s1 + $0x10] sm:$0xff]
      %v270 = vld [vmem:[%s1 + $0x18] sm:$0xff]
      %v271 = vld [vmem:[%s1 + $0x20] sm:$0xff]
      %v272 = vld [vmem:[%s1 + $0x28] sm:$0xff]
      %v273 = vld [vmem:[%s1 + $0x30] sm:$0xff]
      %v274 = vld [vmem:[%s1 + $0x38] sm:$0xff]
      %v275 = vld [vmem:[%s1 + $0x40] sm:$0xff]
      %v276 = vld [vmem:[%s1 + $0x48] sm:$0xff]
      %v277 = vld [vmem:[%s1 + $0x50] sm:$0xff]
      %v278 = vld [vmem:[%s1 + $0x58] sm:$0xff]
      %v279 = vld [vmem:[%s1 + $0x60] sm:$0xff]
      %v280 = vld [vmem:[%s1 + $0x68] sm:$0xff]
      %v281 = vld [vmem:[%s1 + $0x70] sm:$0xff]
      %v282 = vld [vmem:[%s1 + $0x78] sm:$0xff]
      %v283 = vld [vmem:[%s1 + $0x80] sm:$0xff]
      %v284 = vld [vmem:[%s1 + $0x88] sm:$0xff]
      %v285 = vld [vmem:[%s1 + $0x90] sm:$0xff]
      %v286 = vld [vmem:[%s1 + $0x98] sm:$0xff]
      %v287 = vld [vmem:[%s1 + $0xa0] sm:$0xff]
      %v288 = vld [vmem:[%s1 + $0xa8] sm:$0xff]
      %v289 = vld [vmem:[%s1 + $0xb0] sm:$0xff]
      %v290 = vld [vmem:[%s1 + $0xb8] sm:$0xff]
      %v291 = vld [vmem:[%s1 + $0xc0] sm:$0xff]
      %v292 = vld [vmem:[%s1 + $0xc8] sm:$0xff]
      %v293 = vld [vmem:[%s1 + $0xd0] sm:$0xff]
      %v294 = vld [vmem:[%s1 + $0xd8] sm:$0xff]
      %v295 = vld [vmem:[%s1 + $0xe0] sm:$0xff]
      %v296 = vld [vmem:[%s1 + $0xe8] sm:$0xff]
      %v297 = vld [vmem:[%s1 + $0xf0] sm:$0xff]
      %v298 = vld [vmem:[%s1 + $0xf8] sm:$0xff]
      %v299 = vld [vmem:[%s1 + $0x100] sm:$0xff]
      %v300 = vld [vmem:[%s1 + $0x108] sm:$0xff]
      %v301 = vld [vmem:[%s1 + $0x110] sm:$0xff]
      %v302 = vld [vmem:[%s1 + $0x118] sm:$0xff]
      %v303 = vld [vmem:[%s1 + $0x120] sm:$0xff]
      %v304 = vld [vmem:[%s1 + $0x128] sm:$0xff]
      %v305 = vld [vmem:[%s1 + $0x130] sm:$0xff]
      %v306 = vld [vmem:[%s1 + $0x138] sm:$0xff]
      %v307 = vld [vmem:[%s1 + $0x140] sm:$0xff]
      %v308 = vld [vmem:[%s1 + $0x148] sm:$0xff]
      %v309 = vld [vmem:[%s1 + $0x150] sm:$0xff]
      %v310 = vld [vmem:[%s1 + $0x158] sm:$0xff]
      %v311 = vld [vmem:[%s1 + $0x160] sm:$0xff]
      %v312 = vld [vmem:[%s1 + $0x168] sm:$0xff]
      %v313 = vld [vmem:[%s1 + $0x170] sm:$0xff]
      %v314 = vld [vmem:[%s1 + $0x178] sm:$0xff]
      %315 = vmatprep.subr.mxu0 0.0
      %316 = vmatpush1.msra.mxu0 %v267
      %317 = vmatprep.subr.mxu0 0.0
      %318 = vmatpush1.msra.mxu0 %v268
      %319 = vmatprep.subr.mxu0 0.0
      %320 = vmatpush1.msra.mxu0 %v269
      %321 = vmatprep.subr.mxu0 0.0
      %322 = vmatpush1.msra.mxu0 %v270
      %323 = vmatprep.subr.mxu0 0.0
      %324 = vmatpush1.msra.mxu0 %v271
      %325 = vmatprep.subr.mxu0 0.0
      %326 = vmatpush1.msra.mxu0 %v272
      %327 = vmatprep.subr.mxu0 0.0
      %328 = vmatpush1.msra.mxu0 %v273
      %329 = vmatprep.subr.mxu0 0.0
      %330 = vmatpush1.msra.mxu0 %v274
      %331 = vmatprep.subr.mxu0 0.0
      %332 = vmatpush1.msra.mxu0 %v275
      %333 = vmatprep.subr.mxu0 0.0
      %334 = vmatpush1.msra.mxu0 %v276
      %335 = vmatprep.subr.mxu0 0.0
      %336 = vmatpush1.msra.mxu0 %v277
      %337 = vmatprep.subr.mxu0 0.0
      %338 = vmatpush1.msra.mxu0 %v278
      %339 = vmatprep.subr.mxu0 0.0
      %340 = vmatpush1.msra.mxu0 %v279
      %341 = vmatprep.subr.mxu0 0.0
      %342 = vmatpush1.msra.mxu0 %v280
      %343 = vmatprep.subr.mxu0 0.0
      %344 = vmatpush1.msra.mxu0 %v281
      %345 = vmatprep.subr.mxu0 0.0
      %346 = vmatpush1.msra.mxu0 %v282
      %347 = vmatprep.subr.mxu0 0.0
      %348 = vmatpush1.msra.mxu0 %v283
      %349 = vmatprep.subr.mxu0 0.0
      %350 = vmatpush1.msra.mxu0 %v284
      %351 = vmatprep.subr.mxu0 0.0
      %352 = vmatpush1.msra.mxu0 %v285
      %353 = vmatprep.subr.mxu0 0.0
      %354 = vmatpush1.msra.mxu0 %v286
      %355 = vmatprep.subr.mxu0 0.0
      %356 = vmatpush1.msra.mxu0 %v287
      %357 = vmatprep.subr.mxu0 0.0
      %358 = vmatpush1.msra.mxu0 %v288
      %359 = vmatprep.subr.mxu0 0.0
      %360 = vmatpush1.msra.mxu0 %v289
      %361 = vmatprep.subr.mxu0 0.0
      %362 = vmatpush1.msra.mxu0 %v290
      %363 = vmatprep.subr.mxu0 0.0
      %364 = vmatpush1.msra.mxu0 %v291
      %365 = vmatprep.subr.mxu0 0.0
      %366 = vmatpush1.msra.mxu0 %v292
      %367 = vmatprep.subr.mxu0 0.0
      %368 = vmatpush1.msra.mxu0 %v293
      %369 = vmatprep.subr.mxu0 0.0
      %370 = vmatpush1.msra.mxu0 %v294
      %371 = vmatprep.subr.mxu0 0.0
      %372 = vmatpush1.msra.mxu0 %v295
      %373 = vmatprep.subr.mxu0 0.0
      %374 = vmatpush1.msra.mxu0 %v296
      %375 = vmatprep.subr.mxu0 0.0
      %376 = vmatpush1.msra.mxu0 %v297
      %377 = vmatprep.subr.mxu0 0.0
      %378 = vmatpush1.msra.mxu0 %v298
      %379 = vmatprep.mubr.f32.mxu0 %v172
      %380 = vmatmul.mubr.f32.gmra.mrb[0].mxu0 %v171
      %v381 = vpop.f32.mrb[0].mxu0
      %v382 = vadd.f32 0.0, %v381
      %v383 = vpop.f32.mrb[0].mxu0
      %384 = vmatprep.mubr.f32.mxu0 %v175
      %385 = vmatmul.mubr.f32.gmra.mrb[0].mxu0 %v174
      %v386 = vpop.f32.mrb[0].mxu0
      %v387 = vadd.f32 0.0, %v386
      %v388 = vpop.f32.mrb[0].mxu0
      %389 = vmatprep.mubr.f32.mxu0 %v178
      %390 = vmatmul.mubr.f32.gmra.mrb[0].mxu0 %v177
      %v391 = vpop.f32.mrb[0].mxu0
      %v392 = vadd.f32 0.0, %v391
      %v393 = vpop.f32.mrb[0].mxu0
      %394 = vmatprep.mubr.f32.mxu0 %v181
      %395 = vmatmul.mubr.f32.gmra.mrb[0].mxu0 %v180
      %v396 = vpop.f32.mrb[0].mxu0
      %v397 = vadd.f32 0.0, %v396
      %v398 = vpop.f32.mrb[0].mxu0
      %399 = vmatprep.mubr.f32.mxu0 %v184
      %400 = vmatmul.mubr.f32.gmra.mrb[0].mxu0 %v183
      %v401 = vpop.f32.mrb[0].mxu0
      %v402 = vadd.f32 0.0, %v401
      %v403 = vpop.f32.mrb[0].mxu0
      %404 = vmatprep.mubr.f32.mxu0 %v187
      %405 = vmatmul.mubr.f32.gmra.mrb[0].mxu0 %v186
      %v406 = vpop.f32.mrb[0].mxu0
      %v407 = vadd.f32 0.0, %v406
      %v408 = vpop.f32.mrb[0].mxu0
      %409 = vmatprep.mubr.f32.mxu0 %v190
      %410 = vmatmul.mubr.f32.gmra.mrb[0].mxu0 %v189
      %v411 = vpop.f32.mrb[0].mxu0
      %v412 = vadd.f32 0.0, %v411
      %v413 = vpop.f32.mrb[0].mxu0
      %414 = vmatprep.mubr.f32.mxu0 %v193
      %415 = vmatmul.mubr.f32.gmra.mrb[0].mxu0 %v192
      %v416 = vpop.f32.mrb[0].mxu0
      %v417 = vadd.f32 0.0, %v416
      %v418 = vpop.f32.mrb[0].mxu0
      %419 = vmatprep.mubr.f32.mxu0 %v196
      %420 = vmatmul.mubr.f32.gmra.mrb[0].mxu0 %v195
      %v421 = vpop.f32.mrb[0].mxu0
      %v422 = vadd.f32 0.0, %v421
      %v423 = vpop.f32.mrb[0].mxu0
      %424 = vmatprep.mubr.f32.mxu0 %v199
      %425 = vmatmul.mubr.f32.gmra.mrb[0].mxu0 %v198
      %v426 = vpop.f32.mrb[0].mxu0
      %v427 = vadd.f32 0.0, %v426
      %v428 = vpop.f32.mrb[0].mxu0
      %429 = vmatprep.mubr.f32.mxu0 %v202
      %430 = vmatmul.mubr.f32.gmra.mrb[0].mxu0 %v201
      %v431 = vpop.f32.mrb[0].mxu0
      %v432 = vadd.f32 0.0, %v431
      %v433 = vpop.f32.mrb[0].mxu0
      %434 = vmatprep.mubr.f32.mxu0 %v205
      %435 = vmatmul.mubr.f32.gmra.mrb[0].mxu0 %v204
      %v436 = vpop.f32.mrb[0].mxu0
      %v437 = vadd.f32 0.0, %v436
      %v438 = vpop.f32.mrb[0].mxu0
      %439 = vmatprep.mubr.f32.mxu0 %v208
      %440 = vmatmul.mubr.f32.gmra.mrb[0].mxu0 %v207
      %v441 = vpop.f32.mrb[0].mxu0
      %v442 = vadd.f32 0.0, %v441
      %v443 = vpop.f32.mrb[0].mxu0
      %444 = vmatprep.mubr.f32.mxu0 %v211
      %445 = vmatmul.mubr.f32.gmra.mrb[0].mxu0 %v210
      %v446 = vpop.f32.mrb[0].mxu0
      %v447 = vadd.f32 0.0, %v446
      %v448 = vpop.f32.mrb[0].mxu0
      %449 = vmatprep.mubr.f32.mxu0 %v214
      %450 = vmatmul.mubr.f32.gmra.mrb[0].mxu0 %v213
      %v451 = vpop.f32.mrb[0].mxu0
      %v452 = vadd.f32 0.0, %v451
      %v453 = vpop.f32.mrb[0].mxu0
      %454 = vmatprep.mubr.f32.mxu0 %v217
      %455 = vmatmul.mubr.f32.gmra.mrb[0].mxu0 %v216
      %v456 = vpop.f32.mrb[0].mxu0
      %v457 = vadd.f32 0.0, %v456
      %v458 = vpop.f32.mrb[0].mxu0
      %459 = vmatprep.mubr.f32.mxu0 %v220
      %460 = vmatmul.mubr.f32.gmra.mrb[0].mxu0 %v219
      %v461 = vpop.f32.mrb[0].mxu0
      %v462 = vadd.f32 0.0, %v461
      %v463 = vpop.f32.mrb[0].mxu0
      %464 = vmatprep.mubr.f32.mxu0 %v223
      %465 = vmatmul.mubr.f32.gmra.mrb[0].mxu0 %v222
      %v466 = vpop.f32.mrb[0].mxu0
      %v467 = vadd.f32 0.0, %v466
      %v468 = vpop.f32.mrb[0].mxu0
      %469 = vmatprep.mubr.f32.mxu0 %v226
      %470 = vmatmul.mubr.f32.gmra.mrb[0].mxu0 %v225
      %v471 = vpop.f32.mrb[0].mxu0
      %v472 = vadd.f32 0.0, %v471
      %v473 = vpop.f32.mrb[0].mxu0
      %474 = vmatprep.mubr.f32.mxu0 %v229
      %475 = vmatmul.mubr.f32.gmra.mrb[0].mxu0 %v228
      %v476 = vpop.f32.mrb[0].mxu0
      %v477 = vadd.f32 0.0, %v476
      %v478 = vpop.f32.mrb[0].mxu0
      %479 = vmatprep.mubr.f32.mxu0 %v232
      %480 = vmatmul.mubr.f32.gmra.mrb[0].mxu0 %v231
      %v481 = vpop.f32.mrb[0].mxu0
      %v482 = vadd.f32 0.0, %v481
      %v483 = vpop.f32.mrb[0].mxu0
      %484 = vmatprep.mubr.f32.mxu0 %v235
      %485 = vmatmul.mubr.f32.gmra.mrb[0].mxu0 %v234
      %v486 = vpop.f32.mrb[0].mxu0
      %v487 = vadd.f32 0.0, %v486
      %v488 = vpop.f32.mrb[0].mxu0
      %489 = vmatprep.mubr.f32.mxu0 %v238
      %490 = vmatmul.mubr.f32.gmra.mrb[0].mxu0 %v237
      %v491 = vpop.f32.mrb[0].mxu0
      %v492 = vadd.f32 0.0, %v491
      %v493 = vpop.f32.mrb[0].mxu0
      %494 = vmatprep.mubr.f32.mxu0 %v241
      %495 = vmatmul.mubr.f32.gmra.mrb[0].mxu0 %v240
      %v496 = vpop.f32.mrb[0].mxu0
      %v497 = vadd.f32 0.0, %v496
      %v498 = vpop.f32.mrb[0].mxu0
      %499 = vmatprep.mubr.f32.mxu0 %v244
      %500 = vmatmul.mubr.f32.gmra.mrb[0].mxu0 %v243
      %v501 = vpop.f32.mrb[0].mxu0
      %v502 = vadd.f32 0.0, %v501
      %v503 = vpop.f32.mrb[0].mxu0
      %504 = vmatprep.mubr.f32.mxu0 %v247
      %505 = vmatmul.mubr.f32.gmra.mrb[0].mxu0 %v246
      %v506 = vpop.f32.mrb[0].mxu0
      %v507 = vadd.f32 0.0, %v506
      %v508 = vpop.f32.mrb[0].mxu0
      %509 = vmatprep.mubr.f32.mxu0 %v250
      %510 = vmatmul.mubr.f32.gmra.mrb[0].mxu0 %v249
      %v511 = vpop.f32.mrb[0].mxu0
      %v512 = vadd.f32 0.0, %v511
      %v513 = vpop.f32.mrb[0].mxu0
      %514 = vmatprep.mubr.f32.mxu0 %v253
      %515 = vmatmul.mubr.f32.gmra.mrb[0].mxu0 %v252
      %v516 = vpop.f32.mrb[0].mxu0
      %v517 = vadd.f32 0.0, %v516
      %v518 = vpop.f32.mrb[0].mxu0
      %519 = vmatprep.mubr.f32.mxu0 %v256
      %520 = vmatmul.mubr.f32.gmra.mrb[0].mxu0 %v255
      %v521 = vpop.f32.mrb[0].mxu0
      %v522 = vadd.f32 0.0, %v521
      %v523 = vpop.f32.mrb[0].mxu0
      %524 = vmatprep.mubr.f32.mxu0 %v259
      %525 = vmatmul.mubr.f32.gmra.mrb[0].mxu0 %v258
      %v526 = vpop.f32.mrb[0].mxu0
      %v527 = vadd.f32 0.0, %v526
      %v528 = vpop.f32.mrb[0].mxu0
      %529 = vmatprep.mubr.f32.mxu0 %v262
      %530 = vmatmul.mubr.f32.gmra.mrb[0].mxu0 %v261
      %v531 = vpop.f32.mrb[0].mxu0
      %v532 = vadd.f32 0.0, %v531
      %v533 = vpop.f32.mrb[0].mxu0
      %534 = vmatprep.mubr.f32.mxu0 %v265
      %535 = vmatmul.mubr.f32.gmra.mrb[0].mxu0 %v264
      %v536 = vpop.f32.mrb[0].mxu0
      %v537 = vadd.f32 0.0, %v536
      %v538 = vpop.f32.mrb[0].mxu0
      %539 = vdwg.mxu0
      %540 = vmatprep.subr.mxu0 0.0
      %541 = vmatpush1.msra.mxu0 %v299
      %542 = vmatprep.subr.mxu0 0.0
      %543 = vmatpush1.msra.mxu0 %v300
      %544 = vmatprep.subr.mxu0 0.0
      %545 = vmatpush1.msra.mxu0 %v301
      %546 = vmatprep.subr.mxu0 0.0
      %547 = vmatpush1.msra.mxu0 %v302
      %548 = vmatprep.subr.mxu0 0.0
      %549 = vmatpush1.msra.mxu0 %v303
      %550 = vmatprep.subr.mxu0 0.0
      %551 = vmatpush1.msra.mxu0 %v304
      %552 = vmatprep.subr.mxu0 0.0
      %553 = vmatpush1.msra.mxu0 %v305
      %554 = vmatprep.subr.mxu0 0.0
      %555 = vmatpush1.msra.mxu0 %v306
      %556 = vmatprep.subr.mxu0 0.0
      %557 = vmatpush1.msra.mxu0 %v307
      %558 = vmatprep.subr.mxu0 0.0
      %559 = vmatpush1.msra.mxu0 %v308
      %560 = vmatprep.subr.mxu0 0.0
      %561 = vmatpush1.msra.mxu0 %v309
      %562 = vmatprep.subr.mxu0 0.0
      %563 = vmatpush1.msra.mxu0 %v310
      %564 = vmatprep.subr.mxu0 0.0
      %565 = vmatpush1.msra.mxu0 %v311
      %566 = vmatprep.subr.mxu0 0.0
      %567 = vmatpush1.msra.mxu0 %v312
      %568 = vmatprep.subr.mxu0 0.0
      %569 = vmatpush1.msra.mxu0 %v313
      %570 = vmatprep.subr.mxu0 0.0
      %571 = vmatpush1.msra.mxu0 %v314
      %572 = vmatprep.subr.mxu0 0.0
      %573 = vmatpush1.msra.mxu0 0.0
      %574 = vmatprep.subr.mxu0 0.0
      %575 = vmatpush1.msra.mxu0 0.0
      %576 = vmatprep.subr.mxu0 0.0
      %577 = vmatpush1.msra.mxu0 0.0
      %578 = vmatprep.subr.mxu0 0.0
      %579 = vmatpush1.msra.mxu0 0.0
      %580 = vmatprep.subr.mxu0 0.0
      %581 = vmatpush1.msra.mxu0 0.0
      %582 = vmatprep.subr.mxu0 0.0
      %583 = vmatpush1.msra.mxu0 0.0
      %584 = vmatprep.subr.mxu0 0.0
      %585 = vmatpush1.msra.mxu0 0.0
      %586 = vmatprep.subr.mxu0 0.0
      %587 = vmatpush1.msra.mxu0 0.0
      %588 = vmatprep.subr.mxu0 0.0
      %589 = vmatpush1.msra.mxu0 0.0
      %590 = vmatprep.subr.mxu0 0.0
      %591 = vmatpush1.msra.mxu0 0.0
      %592 = vmatprep.subr.mxu0 0.0
      %593 = vmatpush1.msra.mxu0 0.0
      %594 = vmatprep.subr.mxu0 0.0
      %595 = vmatpush1.msra.mxu0 0.0
      %596 = vmatprep.subr.mxu0 0.0
      %597 = vmatpush1.msra.mxu0 0.0
      %598 = vmatprep.subr.mxu0 0.0
      %599 = vmatpush1.msra.mxu0 0.0
      %600 = vmatprep.subr.mxu0 0.0
      %601 = vmatpush1.msra.mxu0 0.0
      %602 = vmatprep.subr.mxu0 0.0
      %603 = vmatpush1.msra.mxu0 0.0
      %604 = vmatprep.mubr.f32.mxu0 0.0
      %605 = vmatmul.mubr.f32.gmra.mrb[0].mxu0 %v173
      %v606 = vpop.f32.mrb[0].mxu0
      %v607 = vadd.f32 %v382, %v606
      %v608 = vpop.f32.mrb[0].mxu0
      %609 = vmatprep.mubr.f32.mxu0 0.0
      %610 = vmatmul.mubr.f32.gmra.mrb[0].mxu0 %v176
      %v611 = vpop.f32.mrb[0].mxu0
      %v612 = vadd.f32 %v387, %v611
      %v613 = vpop.f32.mrb[0].mxu0
      %614 = vmatprep.mubr.f32.mxu0 0.0
      %615 = vmatmul.mubr.f32.gmra.mrb[0].mxu0 %v179
      %v616 = vpop.f32.mrb[0].mxu0
      %v617 = vadd.f32 %v392, %v616
      %v618 = vpop.f32.mrb[0].mxu0
      %619 = vmatprep.mubr.f32.mxu0 0.0
      %620 = vmatmul.mubr.f32.gmra.mrb[0].mxu0 %v182
      %v621 = vpop.f32.mrb[0].mxu0
      %v622 = vadd.f32 %v397, %v621
      %v623 = vpop.f32.mrb[0].mxu0
      %624 = vmatprep.mubr.f32.mxu0 0.0
      %625 = vmatmul.mubr.f32.gmra.mrb[0].mxu0 %v185
      %v626 = vpop.f32.mrb[0].mxu0
      %v627 = vadd.f32 %v402, %v626
      %v628 = vpop.f32.mrb[0].mxu0
      %629 = vmatprep.mubr.f32.mxu0 0.0
      %630 = vmatmul.mubr.f32.gmra.mrb[0].mxu0 %v188
      %v631 = vpop.f32.mrb[0].mxu0
      %v632 = vadd.f32 %v407, %v631
      %v633 = vpop.f32.mrb[0].mxu0
      %634 = vmatprep.mubr.f32.mxu0 0.0
      %635 = vmatmul.mubr.f32.gmra.mrb[0].mxu0 %v191
      %v636 = vpop.f32.mrb[0].mxu0
      %v637 = vadd.f32 %v412, %v636
      %v638 = vpop.f32.mrb[0].mxu0
      %639 = vmatprep.mubr.f32.mxu0 0.0
      %640 = vmatmul.mubr.f32.gmra.mrb[0].mxu0 %v194
      %v641 = vpop.f32.mrb[0].mxu0
      %v642 = vadd.f32 %v417, %v641
      %v643 = vpop.f32.mrb[0].mxu0
      %644 = vmatprep.mubr.f32.mxu0 0.0
      %645 = vmatmul.mubr.f32.gmra.mrb[0].mxu0 %v197
      %v646 = vpop.f32.mrb[0].mxu0
      %v647 = vadd.f32 %v422, %v646
      %v648 = vpop.f32.mrb[0].mxu0
      %649 = vmatprep.mubr.f32.mxu0 0.0
      %650 = vmatmul.mubr.f32.gmra.mrb[0].mxu0 %v200
      %v651 = vpop.f32.mrb[0].mxu0
      %v652 = vadd.f32 %v427, %v651
      %v653 = vpop.f32.mrb[0].mxu0
      %654 = vmatprep.mubr.f32.mxu0 0.0
      %655 = vmatmul.mubr.f32.gmra.mrb[0].mxu0 %v203
      %v656 = vpop.f32.mrb[0].mxu0
      %v657 = vadd.f32 %v432, %v656
      %v658 = vpop.f32.mrb[0].mxu0
      %659 = vmatprep.mubr.f32.mxu0 0.0
      %660 = vmatmul.mubr.f32.gmra.mrb[0].mxu0 %v206
      %v661 = vpop.f32.mrb[0].mxu0
      %v662 = vadd.f32 %v437, %v661
      %v663 = vpop.f32.mrb[0].mxu0
      %664 = vmatprep.mubr.f32.mxu0 0.0
      %665 = vmatmul.mubr.f32.gmra.mrb[0].mxu0 %v209
      %v666 = vpop.f32.mrb[0].mxu0
      %v667 = vadd.f32 %v442, %v666
      %v668 = vpop.f32.mrb[0].mxu0
      %669 = vmatprep.mubr.f32.mxu0 0.0
      %670 = vmatmul.mubr.f32.gmra.mrb[0].mxu0 %v212
      %v671 = vpop.f32.mrb[0].mxu0
      %v672 = vadd.f32 %v447, %v671
      %v673 = vpop.f32.mrb[0].mxu0
      %674 = vmatprep.mubr.f32.mxu0 0.0
      %675 = vmatmul.mubr.f32.gmra.mrb[0].mxu0 %v215
      %v676 = vpop.f32.mrb[0].mxu0
      %v677 = vadd.f32 %v452, %v676
      %v678 = vpop.f32.mrb[0].mxu0
      %679 = vmatprep.mubr.f32.mxu0 0.0
      %680 = vmatmul.mubr.f32.gmra.mrb[0].mxu0 %v218
      %v681 = vpop.f32.mrb[0].mxu0
      %v682 = vadd.f32 %v457, %v681
      %v683 = vpop.f32.mrb[0].mxu0
      %684 = vmatprep.mubr.f32.mxu0 0.0
      %685 = vmatmul.mubr.f32.gmra.mrb[0].mxu0 %v221
      %v686 = vpop.f32.mrb[0].mxu0
      %v687 = vadd.f32 %v462, %v686
      %v688 = vpop.f32.mrb[0].mxu0
      %689 = vmatprep.mubr.f32.mxu0 0.0
      %690 = vmatmul.mubr.f32.gmra.mrb[0].mxu0 %v224
      %v691 = vpop.f32.mrb[0].mxu0
      %v692 = vadd.f32 %v467, %v691
      %v693 = vpop.f32.mrb[0].mxu0
      %694 = vmatprep.mubr.f32.mxu0 0.0
      %695 = vmatmul.mubr.f32.gmra.mrb[0].mxu0 %v227
      %v696 = vpop.f32.mrb[0].mxu0
      %v697 = vadd.f32 %v472, %v696
      %v698 = vpop.f32.mrb[0].mxu0
      %699 = vmatprep.mubr.f32.mxu0 0.0
      %700 = vmatmul.mubr.f32.gmra.mrb[0].mxu0 %v230
      %v701 = vpop.f32.mrb[0].mxu0
      %v702 = vadd.f32 %v477, %v701
      %v703 = vpop.f32.mrb[0].mxu0
      %704 = vmatprep.mubr.f32.mxu0 0.0
      %705 = vmatmul.mubr.f32.gmra.mrb[0].mxu0 %v233
      %v706 = vpop.f32.mrb[0].mxu0
      %v707 = vadd.f32 %v482, %v706
      %v708 = vpop.f32.mrb[0].mxu0
      %709 = vmatprep.mubr.f32.mxu0 0.0
      %710 = vmatmul.mubr.f32.gmra.mrb[0].mxu0 %v236
      %v711 = vpop.f32.mrb[0].mxu0
      %v712 = vadd.f32 %v487, %v711
      %v713 = vpop.f32.mrb[0].mxu0
      %714 = vmatprep.mubr.f32.mxu0 0.0
      %715 = vmatmul.mubr.f32.gmra.mrb[0].mxu0 %v239
      %v716 = vpop.f32.mrb[0].mxu0
      %v717 = vadd.f32 %v492, %v716
      %v718 = vpop.f32.mrb[0].mxu0
      %719 = vmatprep.mubr.f32.mxu0 0.0
      %720 = vmatmul.mubr.f32.gmra.mrb[0].mxu0 %v242
      %v721 = vpop.f32.mrb[0].mxu0
      %v722 = vadd.f32 %v497, %v721
      %v723 = vpop.f32.mrb[0].mxu0
      %724 = vmatprep.mubr.f32.mxu0 0.0
      %725 = vmatmul.mubr.f32.gmra.mrb[0].mxu0 %v245
      %v726 = vpop.f32.mrb[0].mxu0
      %v727 = vadd.f32 %v502, %v726
      %v728 = vpop.f32.mrb[0].mxu0
      %729 = vmatprep.mubr.f32.mxu0 0.0
      %730 = vmatmul.mubr.f32.gmra.mrb[0].mxu0 %v248
      %v731 = vpop.f32.mrb[0].mxu0
      %v732 = vadd.f32 %v507, %v731
      %v733 = vpop.f32.mrb[0].mxu0
      %734 = vmatprep.mubr.f32.mxu0 0.0
      %735 = vmatmul.mubr.f32.gmra.mrb[0].mxu0 %v251
      %v736 = vpop.f32.mrb[0].mxu0
      %v737 = vadd.f32 %v512, %v736
      %v738 = vpop.f32.mrb[0].mxu0
      %739 = vmatprep.mubr.f32.mxu0 0.0
      %740 = vmatmul.mubr.f32.gmra.mrb[0].mxu0 %v254
      %v741 = vpop.f32.mrb[0].mxu0
      %v742 = vadd.f32 %v517, %v741
      %v743 = vpop.f32.mrb[0].mxu0
      %744 = vmatprep.mubr.f32.mxu0 0.0
      %745 = vmatmul.mubr.f32.gmra.mrb[0].mxu0 %v257
      %v746 = vpop.f32.mrb[0].mxu0
      %v747 = vadd.f32 %v522, %v746
      %v748 = vpop.f32.mrb[0].mxu0
      %749 = vmatprep.mubr.f32.mxu0 0.0
      %750 = vmatmul.mubr.f32.gmra.mrb[0].mxu0 %v260
      %v751 = vpop.f32.mrb[0].mxu0
      %v752 = vadd.f32 %v527, %v751
      %v753 = vpop.f32.mrb[0].mxu0
      %754 = vmatprep.mubr.f32.mxu0 0.0
      %755 = vmatmul.mubr.f32.gmra.mrb[0].mxu0 %v263
      %v756 = vpop.f32.mrb[0].mxu0
      %v757 = vadd.f32 %v532, %v756
      %v758 = vpop.f32.mrb[0].mxu0
      %759 = vmatprep.mubr.f32.mxu0 0.0
      %760 = vmatmul.mubr.f32.gmra.mrb[0].mxu0 %v266
      %v761 = vpop.f32.mrb[0].mxu0
      %v762 = vadd.f32 %v537, %v761
      %v763 = vpop.f32.mrb[0].mxu0
      %764 = vdwg.mxu0
      %765 = vst [vmem:[#allocation2] sm:$0xff] %v607
      %766 = vst [vmem:[#allocation2 + $0x8] sm:$0xff] %v612
      %767 = vst [vmem:[#allocation2 + $0x10] sm:$0xff] %v617
      %768 = vst [vmem:[#allocation2 + $0x18] sm:$0xff] %v622
      %769 = vst [vmem:[#allocation2 + $0x20] sm:$0xff] %v627
      %770 = vst [vmem:[#allocation2 + $0x28] sm:$0xff] %v632
      %771 = vst [vmem:[#allocation2 + $0x30] sm:$0xff] %v637
      %772 = vst [vmem:[#allocation2 + $0x38] sm:$0xff] %v642
      %773 = vst [vmem:[#allocation2 + $0x40] sm:$0xff] %v647
      %774 = vst [vmem:[#allocation2 + $0x48] sm:$0xff] %v652
      %775 = vst [vmem:[#allocation2 + $0x50] sm:$0xff] %v657
      %776 = vst [vmem:[#allocation2 + $0x58] sm:$0xff] %v662
      %777 = vst [vmem:[#allocation2 + $0x60] sm:$0xff] %v667
      %778 = vst [vmem:[#allocation2 + $0x68] sm:$0xff] %v672
      %779 = vst [vmem:[#allocation2 + $0x70] sm:$0xff] %v677
      %780 = vst [vmem:[#allocation2 + $0x78] sm:$0xff] %v682
      %781 = vst [vmem:[#allocation2 + $0x80] sm:$0xff] %v687
      %782 = vst [vmem:[#allocation2 + $0x88] sm:$0xff] %v692
      %783 = vst [vmem:[#allocation2 + $0x90] sm:$0xff] %v697
      %784 = vst [vmem:[#allocation2 + $0x98] sm:$0xff] %v702
      %785 = vst [vmem:[#allocation2 + $0xa0] sm:$0xff] %v707
      %786 = vst [vmem:[#allocation2 + $0xa8] sm:$0xff] %v712
      %787 = vst [vmem:[#allocation2 + $0xb0] sm:$0xff] %v717
      %788 = vst [vmem:[#allocation2 + $0xb8] sm:$0xff] %v722
      %789 = vst [vmem:[#allocation2 + $0xc0] sm:$0xff] %v727
      %790 = vst [vmem:[#allocation2 + $0xc8] sm:$0xff] %v732
      %791 = vst [vmem:[#allocation2 + $0xd0] sm:$0xff] %v737
      %792 = vst [vmem:[#allocation2 + $0xd8] sm:$0xff] %v742
      %793 = vst [vmem:[#allocation2 + $0xe0] sm:$0xff] %v747
      %794 = vst [vmem:[#allocation2 + $0xe8] sm:$0xff] %v752
      %795 = vst [vmem:[#allocation2 + $0xf0] sm:$0xff] %v757
      %796 = vst [vmem:[#allocation2 + $0xf8] sm:$0xff] %v762
      %v797 = vld [vmem:[%s165 + $0x30] sm:$0xff]
      %v798 = vld [vmem:[%s165 + $0x38] sm:$0xff]
      %v799 = vld [vmem:[%s165 + $0x40] sm:$0xff]
      %v800 = vld [vmem:[%s165 + $0x48] sm:$0xff]
      %v801 = vld [vmem:[%s165 + $0x50] sm:$0xff]
      %v802 = vld [vmem:[%s165 + $0x58] sm:$0xff]
      %v803 = vld [vmem:[%s165 + $0x60] sm:$0xff]
      %v804 = vld [vmem:[%s165 + $0x68] sm:$0xff]
      %v805 = vld [vmem:[%s165 + $0x70] sm:$0xff]
      %v806 = vld [vmem:[%s165 + $0x78] sm:$0xff]
      %v807 = vld [vmem:[%s165 + $0x80] sm:$0xff]
      %v808 = vld [vmem:[%s165 + $0x88] sm:$0xff]
      %v809 = vld [vmem:[%s165 + $0x90] sm:$0xff]
      %v810 = vld [vmem:[%s165 + $0x98] sm:$0xff]
      %v811 = vld [vmem:[%s165 + $0xa0] sm:$0xff]
      %v812 = vld [vmem:[%s165 + $0xa8] sm:$0xff]
      %v813 = vld [vmem:[%s165 + $0xb0] sm:$0xff]
      %v814 = vld [vmem:[%s165 + $0xb8] sm:$0xff]
      %v815 = vld [vmem:[%s165 + $0xc0] sm:$0xff]
      %v816 = vld [vmem:[%s165 + $0xc8] sm:$0xff]
      %v817 = vld [vmem:[%s165 + $0xd0] sm:$0xff]
      %v818 = vld [vmem:[%s165 + $0xd8] sm:$0xff]
      %v819 = vld [vmem:[%s165 + $0xe0] sm:$0xff]
      %v820 = vld [vmem:[%s165 + $0xe8] sm:$0xff]
      %v821 = vld [vmem:[%s165 + $0xf0] sm:$0xff]
      %v822 = vld [vmem:[%s165 + $0xf8] sm:$0xff]
      %v823 = vld [vmem:[%s165 + $0x100] sm:$0xff]
      %v824 = vld [vmem:[%s165 + $0x108] sm:$0xff]
      %v825 = vld [vmem:[%s165 + $0x110] sm:$0xff]
      %v826 = vld [vmem:[%s165 + $0x118] sm:$0xff]
      %v827 = vld [vmem:[%s165 + $0x120] sm:$0xff]
      %v828 = vld [vmem:[%s165 + $0x128] sm:$0xff]
      %v829 = vld [vmem:[%s165 + $0x130] sm:$0xff]
      %v830 = vld [vmem:[%s165 + $0x138] sm:$0xff]
      %v831 = vld [vmem:[%s165 + $0x140] sm:$0xff]
      %v832 = vld [vmem:[%s165 + $0x148] sm:$0xff]
      %v833 = vld [vmem:[%s165 + $0x150] sm:$0xff]
      %v834 = vld [vmem:[%s165 + $0x158] sm:$0xff]
      %v835 = vld [vmem:[%s165 + $0x160] sm:$0xff]
      %v836 = vld [vmem:[%s165 + $0x168] sm:$0xff]
      %v837 = vld [vmem:[%s165 + $0x170] sm:$0xff]
      %v838 = vld [vmem:[%s165 + $0x178] sm:$0xff]
      %v839 = vld [vmem:[%s165 + $0x180] sm:$0xff]
      %v840 = vld [vmem:[%s165 + $0x188] sm:$0xff]
      %v841 = vld [vmem:[%s165 + $0x190] sm:$0xff]
      %v842 = vld [vmem:[%s165 + $0x198] sm:$0xff]
      %v843 = vld [vmem:[%s165 + $0x1a0] sm:$0xff]
      %v844 = vld [vmem:[%s165 + $0x1a8] sm:$0xff]
      %v845 = vld [vmem:[%s165 + $0x1b0] sm:$0xff]
      %v846 = vld [vmem:[%s165 + $0x1b8] sm:$0xff]
      %v847 = vld [vmem:[%s165 + $0x1c0] sm:$0xff]
      %v848 = vld [vmem:[%s165 + $0x1c8] sm:$0xff]
      %v849 = vld [vmem:[%s165 + $0x1d0] sm:$0xff]
      %v850 = vld [vmem:[%s165 + $0x1d8] sm:$0xff]
      %v851 = vld [vmem:[%s165 + $0x1e0] sm:$0xff]
      %v852 = vld [vmem:[%s165 + $0x1e8] sm:$0xff]
      %v853 = vld [vmem:[%s165 + $0x1f0] sm:$0xff]
      %v854 = vld [vmem:[%s165 + $0x1f8] sm:$0xff]
      %v855 = vld [vmem:[%s165 + $0x200] sm:$0xff]
      %v856 = vld [vmem:[%s165 + $0x208] sm:$0xff]
      %v857 = vld [vmem:[%s165 + $0x210] sm:$0xff]
      %v858 = vld [vmem:[%s165 + $0x218] sm:$0xff]
      %v859 = vld [vmem:[%s165 + $0x220] sm:$0xff]
      %v860 = vld [vmem:[%s165 + $0x228] sm:$0xff]
      %v861 = vld [vmem:[%s165 + $0x230] sm:$0xff]
      %v862 = vld [vmem:[%s165 + $0x238] sm:$0xff]
      %v863 = vld [vmem:[%s165 + $0x240] sm:$0xff]
      %v864 = vld [vmem:[%s165 + $0x248] sm:$0xff]
      %v865 = vld [vmem:[%s165 + $0x250] sm:$0xff]
      %v866 = vld [vmem:[%s165 + $0x258] sm:$0xff]
      %v867 = vld [vmem:[%s165 + $0x260] sm:$0xff]
      %v868 = vld [vmem:[%s165 + $0x268] sm:$0xff]
      %v869 = vld [vmem:[%s165 + $0x270] sm:$0xff]
      %v870 = vld [vmem:[%s165 + $0x278] sm:$0xff]
      %v871 = vld [vmem:[%s165 + $0x280] sm:$0xff]
      %v872 = vld [vmem:[%s165 + $0x288] sm:$0xff]
      %v873 = vld [vmem:[%s165 + $0x290] sm:$0xff]
      %v874 = vld [vmem:[%s165 + $0x298] sm:$0xff]
      %v875 = vld [vmem:[%s165 + $0x2a0] sm:$0xff]
      %v876 = vld [vmem:[%s165 + $0x2a8] sm:$0xff]
      %v877 = vld [vmem:[%s165 + $0x2b0] sm:$0xff]
      %v878 = vld [vmem:[%s165 + $0x2b8] sm:$0xff]
      %v879 = vld [vmem:[%s165 + $0x2c0] sm:$0xff]
      %v880 = vld [vmem:[%s165 + $0x2c8] sm:$0xff]
      %v881 = vld [vmem:[%s165 + $0x2d0] sm:$0xff]
      %v882 = vld [vmem:[%s165 + $0x2d8] sm:$0xff]
      %v883 = vld [vmem:[%s165 + $0x2e0] sm:$0xff]
      %v884 = vld [vmem:[%s165 + $0x2e8] sm:$0xff]
      %v885 = vld [vmem:[%s165 + $0x2f0] sm:$0xff]
      %v886 = vld [vmem:[%s165 + $0x2f8] sm:$0xff]
      %v887 = vld [vmem:[%s165 + $0x300] sm:$0xff]
      %v888 = vld [vmem:[%s165 + $0x308] sm:$0xff]
      %v889 = vld [vmem:[%s165 + $0x310] sm:$0xff]
      %v890 = vld [vmem:[%s165 + $0x318] sm:$0xff]
      %v891 = vld [vmem:[%s165 + $0x320] sm:$0xff]
      %v892 = vld [vmem:[%s165 + $0x328] sm:$0xff]
      %s893 = scalar_lea.vmem %s1, 384
      %v894 = vld [vmem:[%s893] sm:$0xff]
      %v895 = vld [vmem:[%s893 + $0x8] sm:$0xff]
      %v896 = vld [vmem:[%s893 + $0x10] sm:$0xff]
      %v897 = vld [vmem:[%s893 + $0x18] sm:$0xff]
      %v898 = vld [vmem:[%s893 + $0x20] sm:$0xff]
      %v899 = vld [vmem:[%s893 + $0x28] sm:$0xff]
      %v900 = vld [vmem:[%s893 + $0x30] sm:$0xff]
      %v901 = vld [vmem:[%s893 + $0x38] sm:$0xff]
      %v902 = vld [vmem:[%s893 + $0x40] sm:$0xff]
      %v903 = vld [vmem:[%s893 + $0x48] sm:$0xff]
      %v904 = vld [vmem:[%s893 + $0x50] sm:$0xff]
      %v905 = vld [vmem:[%s893 + $0x58] sm:$0xff]
      %v906 = vld [vmem:[%s893 + $0x60] sm:$0xff]
      %v907 = vld [vmem:[%s893 + $0x68] sm:$0xff]
      %v908 = vld [vmem:[%s893 + $0x70] sm:$0xff]
      %v909 = vld [vmem:[%s893 + $0x78] sm:$0xff]
      %v910 = vld [vmem:[%s893 + $0x80] sm:$0xff]
      %v911 = vld [vmem:[%s893 + $0x88] sm:$0xff]
      %v912 = vld [vmem:[%s893 + $0x90] sm:$0xff]
      %v913 = vld [vmem:[%s893 + $0x98] sm:$0xff]
      %v914 = vld [vmem:[%s893 + $0xa0] sm:$0xff]
      %v915 = vld [vmem:[%s893 + $0xa8] sm:$0xff]
      %v916 = vld [vmem:[%s893 + $0xb0] sm:$0xff]
      %v917 = vld [vmem:[%s893 + $0xb8] sm:$0xff]
      %v918 = vld [vmem:[%s893 + $0xc0] sm:$0xff]
      %v919 = vld [vmem:[%s893 + $0xc8] sm:$0xff]
      %v920 = vld [vmem:[%s893 + $0xd0] sm:$0xff]
      %v921 = vld [vmem:[%s893 + $0xd8] sm:$0xff]
      %v922 = vld [vmem:[%s893 + $0xe0] sm:$0xff]
      %v923 = vld [vmem:[%s893 + $0xe8] sm:$0xff]
      %v924 = vld [vmem:[%s893 + $0xf0] sm:$0xff]
      %v925 = vld [vmem:[%s893 + $0xf8] sm:$0xff]
      %v926 = vld [vmem:[%s893 + $0x100] sm:$0xff]
      %v927 = vld [vmem:[%s893 + $0x108] sm:$0xff]
      %v928 = vld [vmem:[%s893 + $0x110] sm:$0xff]
      %v929 = vld [vmem:[%s893 + $0x118] sm:$0xff]
      %v930 = vld [vmem:[%s893 + $0x120] sm:$0xff]
      %v931 = vld [vmem:[%s893 + $0x128] sm:$0xff]
      %v932 = vld [vmem:[%s893 + $0x130] sm:$0xff]
      %v933 = vld [vmem:[%s893 + $0x138] sm:$0xff]
      %v934 = vld [vmem:[%s893 + $0x140] sm:$0xff]
      %v935 = vld [vmem:[%s893 + $0x148] sm:$0xff]
      %v936 = vld [vmem:[%s893 + $0x150] sm:$0xff]
      %v937 = vld [vmem:[%s893 + $0x158] sm:$0xff]
      %v938 = vld [vmem:[%s893 + $0x160] sm:$0xff]
      %v939 = vld [vmem:[%s893 + $0x168] sm:$0xff]
      %v940 = vld [vmem:[%s893 + $0x170] sm:$0xff]
      %v941 = vld [vmem:[%s893 + $0x178] sm:$0xff]
      %942 = vmatprep.subr.mxu0 0.0
      %943 = vmatpush1.msra.mxu0 %v894
      %944 = vmatprep.subr.mxu0 0.0
      %945 = vmatpush1.msra.mxu0 %v895
      %946 = vmatprep.subr.mxu0 0.0
      %947 = vmatpush1.msra.mxu0 %v896
      %948 = vmatprep.subr.mxu0 0.0
      %949 = vmatpush1.msra.mxu0 %v897
      %950 = vmatprep.subr.mxu0 0.0
      %951 = vmatpush1.msra.mxu0 %v898
      %952 = vmatprep.subr.mxu0 0.0
      %953 = vmatpush1.msra.mxu0 %v899
      %954 = vmatprep.subr.mxu0 0.0
      %955 = vmatpush1.msra.mxu0 %v900
      %956 = vmatprep.subr.mxu0 0.0
      %957 = vmatpush1.msra.mxu0 %v901
      %958 = vmatprep.subr.mxu0 0.0
      %959 = vmatpush1.msra.mxu0 %v902
      %960 = vmatprep.subr.mxu0 0.0
      %961 = vmatpush1.msra.mxu0 %v903
      %962 = vmatprep.subr.mxu0 0.0
      %963 = vmatpush1.msra.mxu0 %v904
      %964 = vmatprep.subr.mxu0 0.0
      %965 = vmatpush1.msra.mxu0 %v905
      %966 = vmatprep.subr.mxu0 0.0
      %967 = vmatpush1.msra.mxu0 %v906
      %968 = vmatprep.subr.mxu0 0.0
      %969 = vmatpush1.msra.mxu0 %v907
      %970 = vmatprep.subr.mxu0 0.0
      %971 = vmatpush1.msra.mxu0 %v908
      %972 = vmatprep.subr.mxu0 0.0
      %973 = vmatpush1.msra.mxu0 %v909
      %974 = vmatprep.subr.mxu0 0.0
      %975 = vmatpush1.msra.mxu0 %v910
      %976 = vmatprep.subr.mxu0 0.0
      %977 = vmatpush1.msra.mxu0 %v911
      %978 = vmatprep.subr.mxu0 0.0
      %979 = vmatpush1.msra.mxu0 %v912
      %980 = vmatprep.subr.mxu0 0.0
      %981 = vmatpush1.msra.mxu0 %v913
      %982 = vmatprep.subr.mxu0 0.0
      %983 = vmatpush1.msra.mxu0 %v914
      %984 = vmatprep.subr.mxu0 0.0
      %985 = vmatpush1.msra.mxu0 %v915
      %986 = vmatprep.subr.mxu0 0.0
      %987 = vmatpush1.msra.mxu0 %v916
      %988 = vmatprep.subr.mxu0 0.0
      %989 = vmatpush1.msra.mxu0 %v917
      %990 = vmatprep.subr.mxu0 0.0
      %991 = vmatpush1.msra.mxu0 %v918
      %992 = vmatprep.subr.mxu0 0.0
      %993 = vmatpush1.msra.mxu0 %v919
      %994 = vmatprep.subr.mxu0 0.0
      %995 = vmatpush1.msra.mxu0 %v920
      %996 = vmatprep.subr.mxu0 0.0
      %997 = vmatpush1.msra.mxu0 %v921
      %998 = vmatprep.subr.mxu0 0.0
      %999 = vmatpush1.msra.mxu0 %v922
      %1000 = vmatprep.subr.mxu0 0.0
      %1001 = vmatpush1.msra.mxu0 %v923
      %1002 = vmatprep.subr.mxu0 0.0
      %1003 = vmatpush1.msra.mxu0 %v924
      %1004 = vmatprep.subr.mxu0 0.0
      %1005 = vmatpush1.msra.mxu0 %v925
      %1006 = vmatprep.mubr.f32.mxu0 %v798
      %1007 = vmatmul.mubr.f32.gmra.mrb[0].mxu0 %v797
      %v1008 = vpop.f32.mrb[0].mxu0
      %v1009 = vadd.f32 0.0, %v1008
      %v1010 = vpop.f32.mrb[0].mxu0
      %1011 = vmatprep.mubr.f32.mxu0 %v801
      %1012 = vmatmul.mubr.f32.gmra.mrb[0].mxu0 %v800
      %v1013 = vpop.f32.mrb[0].mxu0
      %v1014 = vadd.f32 0.0, %v1013
      %v1015 = vpop.f32.mrb[0].mxu0
      %1016 = vmatprep.mubr.f32.mxu0 %v804
      %1017 = vmatmul.mubr.f32.gmra.mrb[0].mxu0 %v803
      %v1018 = vpop.f32.mrb[0].mxu0
      %v1019 = vadd.f32 0.0, %v1018
      %v1020 = vpop.f32.mrb[0].mxu0
      %1021 = vmatprep.mubr.f32.mxu0 %v807
      %1022 = vmatmul.mubr.f32.gmra.mrb[0].mxu0 %v806
      %v1023 = vpop.f32.mrb[0].mxu0
      %v1024 = vadd.f32 0.0, %v1023
      %v1025 = vpop.f32.mrb[0].mxu0
      %1026 = vmatprep.mubr.f32.mxu0 %v810
      %1027 = vmatmul.mubr.f32.gmra.mrb[0].mxu0 %v809
      %v1028 = vpop.f32.mrb[0].mxu0
      %v1029 = vadd.f32 0.0, %v1028
      %v1030 = vpop.f32.mrb[0].mxu0
      %1031 = vmatprep.mubr.f32.mxu0 %v813
      %1032 = vmatmul.mubr.f32.gmra.mrb[0].mxu0 %v812
      %v1033 = vpop.f32.mrb[0].mxu0
      %v1034 = vadd.f32 0.0, %v1033
      %v1035 = vpop.f32.mrb[0].mxu0
      %1036 = vmatprep.mubr.f32.mxu0 %v816
      %1037 = vmatmul.mubr.f32.gmra.mrb[0].mxu0 %v815
      %v1038 = vpop.f32.mrb[0].mxu0
      %v1039 = vadd.f32 0.0, %v1038
      %v1040 = vpop.f32.mrb[0].mxu0
      %1041 = vmatprep.mubr.f32.mxu0 %v819
      %1042 = vmatmul.mubr.f32.gmra.mrb[0].mxu0 %v818
      %v1043 = vpop.f32.mrb[0].mxu0
      %v1044 = vadd.f32 0.0, %v1043
      %v1045 = vpop.f32.mrb[0].mxu0
      %1046 = vmatprep.mubr.f32.mxu0 %v822
      %1047 = vmatmul.mubr.f32.gmra.mrb[0].mxu0 %v821
      %v1048 = vpop.f32.mrb[0].mxu0
      %v1049 = vadd.f32 0.0, %v1048
      %v1050 = vpop.f32.mrb[0].mxu0
      %1051 = vmatprep.mubr.f32.mxu0 %v825
      %1052 = vmatmul.mubr.f32.gmra.mrb[0].mxu0 %v824
      %v1053 = vpop.f32.mrb[0].mxu0
      %v1054 = vadd.f32 0.0, %v1053
      %v1055 = vpop.f32.mrb[0].mxu0
      %1056 = vmatprep.mubr.f32.mxu0 %v828
      %1057 = vmatmul.mubr.f32.gmra.mrb[0].mxu0 %v827
      %v1058 = vpop.f32.mrb[0].mxu0
      %v1059 = vadd.f32 0.0, %v1058
      %v1060 = vpop.f32.mrb[0].mxu0
      %1061 = vmatprep.mubr.f32.mxu0 %v831
      %1062 = vmatmul.mubr.f32.gmra.mrb[0].mxu0 %v830
      %v1063 = vpop.f32.mrb[0].mxu0
      %v1064 = vadd.f32 0.0, %v1063
      %v1065 = vpop.f32.mrb[0].mxu0
      %1066 = vmatprep.mubr.f32.mxu0 %v834
      %1067 = vmatmul.mubr.f32.gmra.mrb[0].mxu0 %v833
      %v1068 = vpop.f32.mrb[0].mxu0
      %v1069 = vadd.f32 0.0, %v1068
      %v1070 = vpop.f32.mrb[0].mxu0
      %1071 = vmatprep.mubr.f32.mxu0 %v837
      %1072 = vmatmul.mubr.f32.gmra.mrb[0].mxu0 %v836
      %v1073 = vpop.f32.mrb[0].mxu0
      %v1074 = vadd.f32 0.0, %v1073
      %v1075 = vpop.f32.mrb[0].mxu0
      %1076 = vmatprep.mubr.f32.mxu0 %v840
      %1077 = vmatmul.mubr.f32.gmra.mrb[0].mxu0 %v839
      %v1078 = vpop.f32.mrb[0].mxu0
      %v1079 = vadd.f32 0.0, %v1078
      %v1080 = vpop.f32.mrb[0].mxu0
      %1081 = vmatprep.mubr.f32.mxu0 %v843
      %1082 = vmatmul.mubr.f32.gmra.mrb[0].mxu0 %v842
      %v1083 = vpop.f32.mrb[0].mxu0
      %v1084 = vadd.f32 0.0, %v1083
      %v1085 = vpop.f32.mrb[0].mxu0
      %1086 = vmatprep.mubr.f32.mxu0 %v846
      %1087 = vmatmul.mubr.f32.gmra.mrb[0].mxu0 %v845
      %v1088 = vpop.f32.mrb[0].mxu0
      %v1089 = vadd.f32 0.0, %v1088
      %v1090 = vpop.f32.mrb[0].mxu0
      %1091 = vmatprep.mubr.f32.mxu0 %v849
      %1092 = vmatmul.mubr.f32.gmra.mrb[0].mxu0 %v848
      %v1093 = vpop.f32.mrb[0].mxu0
      %v1094 = vadd.f32 0.0, %v1093
      %v1095 = vpop.f32.mrb[0].mxu0
      %1096 = vmatprep.mubr.f32.mxu0 %v852
      %1097 = vmatmul.mubr.f32.gmra.mrb[0].mxu0 %v851
      %v1098 = vpop.f32.mrb[0].mxu0
      %v1099 = vadd.f32 0.0, %v1098
      %v1100 = vpop.f32.mrb[0].mxu0
      %1101 = vmatprep.mubr.f32.mxu0 %v855
      %1102 = vmatmul.mubr.f32.gmra.mrb[0].mxu0 %v854
      %v1103 = vpop.f32.mrb[0].mxu0
      %v1104 = vadd.f32 0.0, %v1103
      %v1105 = vpop.f32.mrb[0].mxu0
      %1106 = vmatprep.mubr.f32.mxu0 %v858
      %1107 = vmatmul.mubr.f32.gmra.mrb[0].mxu0 %v857
      %v1108 = vpop.f32.mrb[0].mxu0
      %v1109 = vadd.f32 0.0, %v1108
      %v1110 = vpop.f32.mrb[0].mxu0
      %1111 = vmatprep.mubr.f32.mxu0 %v861
      %1112 = vmatmul.mubr.f32.gmra.mrb[0].mxu0 %v860
      %v1113 = vpop.f32.mrb[0].mxu0
      %v1114 = vadd.f32 0.0, %v1113
      %v1115 = vpop.f32.mrb[0].mxu0
      %1116 = vmatprep.mubr.f32.mxu0 %v864
      %1117 = vmatmul.mubr.f32.gmra.mrb[0].mxu0 %v863
      %v1118 = vpop.f32.mrb[0].mxu0
      %v1119 = vadd.f32 0.0, %v1118
      %v1120 = vpop.f32.mrb[0].mxu0
      %1121 = vmatprep.mubr.f32.mxu0 %v867
      %1122 = vmatmul.mubr.f32.gmra.mrb[0].mxu0 %v866
      %v1123 = vpop.f32.mrb[0].mxu0
      %v1124 = vadd.f32 0.0, %v1123
      %v1125 = vpop.f32.mrb[0].mxu0
      %1126 = vmatprep.mubr.f32.mxu0 %v870
      %1127 = vmatmul.mubr.f32.gmra.mrb[0].mxu0 %v869
      %v1128 = vpop.f32.mrb[0].mxu0
      %v1129 = vadd.f32 0.0, %v1128
      %v1130 = vpop.f32.mrb[0].mxu0
      %1131 = vmatprep.mubr.f32.mxu0 %v873
      %1132 = vmatmul.mubr.f32.gmra.mrb[0].mxu0 %v872
      %v1133 = vpop.f32.mrb[0].mxu0
      %v1134 = vadd.f32 0.0, %v1133
      %v1135 = vpop.f32.mrb[0].mxu0
      %1136 = vmatprep.mubr.f32.mxu0 %v876
      %1137 = vmatmul.mubr.f32.gmra.mrb[0].mxu0 %v875
      %v1138 = vpop.f32.mrb[0].mxu0
      %v1139 = vadd.f32 0.0, %v1138
      %v1140 = vpop.f32.mrb[0].mxu0
      %1141 = vmatprep.mubr.f32.mxu0 %v879
      %1142 = vmatmul.mubr.f32.gmra.mrb[0].mxu0 %v878
      %v1143 = vpop.f32.mrb[0].mxu0
      %v1144 = vadd.f32 0.0, %v1143
      %v1145 = vpop.f32.mrb[0].mxu0
      %1146 = vmatprep.mubr.f32.mxu0 %v882
      %1147 = vmatmul.mubr.f32.gmra.mrb[0].mxu0 %v881
      %v1148 = vpop.f32.mrb[0].mxu0
      %v1149 = vadd.f32 0.0, %v1148
      %v1150 = vpop.f32.mrb[0].mxu0
      %1151 = vmatprep.mubr.f32.mxu0 %v885
      %1152 = vmatmul.mubr.f32.gmra.mrb[0].mxu0 %v884
      %v1153 = vpop.f32.mrb[0].mxu0
      %v1154 = vadd.f32 0.0, %v1153
      %v1155 = vpop.f32.mrb[0].mxu0
      %1156 = vmatprep.mubr.f32.mxu0 %v888
      %1157 = vmatmul.mubr.f32.gmra.mrb[0].mxu0 %v887
      %v1158 = vpop.f32.mrb[0].mxu0
      %v1159 = vadd.f32 0.0, %v1158
      %v1160 = vpop.f32.mrb[0].mxu0
      %1161 = vmatprep.mubr.f32.mxu0 %v891
      %1162 = vmatmul.mubr.f32.gmra.mrb[0].mxu0 %v890
      %v1163 = vpop.f32.mrb[0].mxu0
      %v1164 = vadd.f32 0.0, %v1163
      %v1165 = vpop.f32.mrb[0].mxu0
      %1166 = vdwg.mxu0
      %1167 = vmatprep.subr.mxu0 0.0
      %1168 = vmatpush1.msra.mxu0 %v926
      %1169 = vmatprep.subr.mxu0 0.0
      %1170 = vmatpush1.msra.mxu0 %v927
      %1171 = vmatprep.subr.mxu0 0.0
      %1172 = vmatpush1.msra.mxu0 %v928
      %1173 = vmatprep.subr.mxu0 0.0
      %1174 = vmatpush1.msra.mxu0 %v929
      %1175 = vmatprep.subr.mxu0 0.0
      %1176 = vmatpush1.msra.mxu0 %v930
      %1177 = vmatprep.subr.mxu0 0.0
      %1178 = vmatpush1.msra.mxu0 %v931
      %1179 = vmatprep.subr.mxu0 0.0
      %1180 = vmatpush1.msra.mxu0 %v932
      %1181 = vmatprep.subr.mxu0 0.0
      %1182 = vmatpush1.msra.mxu0 %v933
      %1183 = vmatprep.subr.mxu0 0.0
      %1184 = vmatpush1.msra.mxu0 %v934
      %1185 = vmatprep.subr.mxu0 0.0
      %1186 = vmatpush1.msra.mxu0 %v935
      %1187 = vmatprep.subr.mxu0 0.0
      %1188 = vmatpush1.msra.mxu0 %v936
      %1189 = vmatprep.subr.mxu0 0.0
      %1190 = vmatpush1.msra.mxu0 %v937
      %1191 = vmatprep.subr.mxu0 0.0
      %1192 = vmatpush1.msra.mxu0 %v938
      %1193 = vmatprep.subr.mxu0 0.0
      %1194 = vmatpush1.msra.mxu0 %v939
      %1195 = vmatprep.subr.mxu0 0.0
      %1196 = vmatpush1.msra.mxu0 %v940
      %1197 = vmatprep.subr.mxu0 0.0
      %1198 = vmatpush1.msra.mxu0 %v941
      %1199 = vmatprep.subr.mxu0 0.0
      %1200 = vmatpush1.msra.mxu0 0.0
      %1201 = vmatprep.subr.mxu0 0.0
      %1202 = vmatpush1.msra.mxu0 0.0
      %1203 = vmatprep.subr.mxu0 0.0
      %1204 = vmatpush1.msra.mxu0 0.0
      %1205 = vmatprep.subr.mxu0 0.0
      %1206 = vmatpush1.msra.mxu0 0.0
      %1207 = vmatprep.subr.mxu0 0.0
      %1208 = vmatpush1.msra.mxu0 0.0
      %1209 = vmatprep.subr.mxu0 0.0
      %1210 = vmatpush1.msra.mxu0 0.0
      %1211 = vmatprep.subr.mxu0 0.0
      %1212 = vmatpush1.msra.mxu0 0.0
      %1213 = vmatprep.subr.mxu0 0.0
      %1214 = vmatpush1.msra.mxu0 0.0
      %1215 = vmatprep.subr.mxu0 0.0
      %1216 = vmatpush1.msra.mxu0 0.0
      %1217 = vmatprep.subr.mxu0 0.0
      %1218 = vmatpush1.msra.mxu0 0.0
      %1219 = vmatprep.subr.mxu0 0.0
      %1220 = vmatpush1.msra.mxu0 0.0
      %1221 = vmatprep.subr.mxu0 0.0
      %1222 = vmatpush1.msra.mxu0 0.0
      %1223 = vmatprep.subr.mxu0 0.0
      %1224 = vmatpush1.msra.mxu0 0.0
      %1225 = vmatprep.subr.mxu0 0.0
      %1226 = vmatpush1.msra.mxu0 0.0
      %1227 = vmatprep.subr.mxu0 0.0
      %1228 = vmatpush1.msra.mxu0 0.0
      %1229 = vmatprep.subr.mxu0 0.0
      %1230 = vmatpush1.msra.mxu0 0.0
      %1231 = vmatprep.mubr.f32.mxu0 0.0
      %1232 = vmatmul.mubr.f32.gmra.mrb[0].mxu0 %v799
      %v1233 = vpop.f32.mrb[0].mxu0
      %v1234 = vadd.f32 %v1009, %v1233
      %v1235 = vpop.f32.mrb[0].mxu0
      %1236 = vmatprep.mubr.f32.mxu0 0.0
      %1237 = vmatmul.mubr.f32.gmra.mrb[0].mxu0 %v802
      %v1238 = vpop.f32.mrb[0].mxu0
      %v1239 = vadd.f32 %v1014, %v1238
      %v1240 = vpop.f32.mrb[0].mxu0
      %1241 = vmatprep.mubr.f32.mxu0 0.0
      %1242 = vmatmul.mubr.f32.gmra.mrb[0].mxu0 %v805
      %v1243 = vpop.f32.mrb[0].mxu0
      %v1244 = vadd.f32 %v1019, %v1243
      %v1245 = vpop.f32.mrb[0].mxu0
      %1246 = vmatprep.mubr.f32.mxu0 0.0
      %1247 = vmatmul.mubr.f32.gmra.mrb[0].mxu0 %v808
      %v1248 = vpop.f32.mrb[0].mxu0
      %v1249 = vadd.f32 %v1024, %v1248
      %v1250 = vpop.f32.mrb[0].mxu0
      %1251 = vmatprep.mubr.f32.mxu0 0.0
      %1252 = vmatmul.mubr.f32.gmra.mrb[0].mxu0 %v811
      %v1253 = vpop.f32.mrb[0].mxu0
      %v1254 = vadd.f32 %v1029, %v1253
      %v1255 = vpop.f32.mrb[0].mxu0
      %1256 = vmatprep.mubr.f32.mxu0 0.0
      %1257 = vmatmul.mubr.f32.gmra.mrb[0].mxu0 %v814
      %v1258 = vpop.f32.mrb[0].mxu0
      %v1259 = vadd.f32 %v1034, %v1258
      %v1260 = vpop.f32.mrb[0].mxu0
      %1261 = vmatprep.mubr.f32.mxu0 0.0
      %1262 = vmatmul.mubr.f32.gmra.mrb[0].mxu0 %v817
      %v1263 = vpop.f32.mrb[0].mxu0
      %v1264 = vadd.f32 %v1039, %v1263
      %v1265 = vpop.f32.mrb[0].mxu0
      %1266 = vmatprep.mubr.f32.mxu0 0.0
      %1267 = vmatmul.mubr.f32.gmra.mrb[0].mxu0 %v820
      %v1268 = vpop.f32.mrb[0].mxu0
      %v1269 = vadd.f32 %v1044, %v1268
      %v1270 = vpop.f32.mrb[0].mxu0
      %1271 = vmatprep.mubr.f32.mxu0 0.0
      %1272 = vmatmul.mubr.f32.gmra.mrb[0].mxu0 %v823
      %v1273 = vpop.f32.mrb[0].mxu0
      %v1274 = vadd.f32 %v1049, %v1273
      %v1275 = vpop.f32.mrb[0].mxu0
      %1276 = vmatprep.mubr.f32.mxu0 0.0
      %1277 = vmatmul.mubr.f32.gmra.mrb[0].mxu0 %v826
      %v1278 = vpop.f32.mrb[0].mxu0
      %v1279 = vadd.f32 %v1054, %v1278
      %v1280 = vpop.f32.mrb[0].mxu0
      %1281 = vmatprep.mubr.f32.mxu0 0.0
      %1282 = vmatmul.mubr.f32.gmra.mrb[0].mxu0 %v829
      %v1283 = vpop.f32.mrb[0].mxu0
      %v1284 = vadd.f32 %v1059, %v1283
      %v1285 = vpop.f32.mrb[0].mxu0
      %1286 = vmatprep.mubr.f32.mxu0 0.0
      %1287 = vmatmul.mubr.f32.gmra.mrb[0].mxu0 %v832
      %v1288 = vpop.f32.mrb[0].mxu0
      %v1289 = vadd.f32 %v1064, %v1288
      %v1290 = vpop.f32.mrb[0].mxu0
      %1291 = vmatprep.mubr.f32.mxu0 0.0
      %1292 = vmatmul.mubr.f32.gmra.mrb[0].mxu0 %v835
      %v1293 = vpop.f32.mrb[0].mxu0
      %v1294 = vadd.f32 %v1069, %v1293
      %v1295 = vpop.f32.mrb[0].mxu0
      %1296 = vmatprep.mubr.f32.mxu0 0.0
      %1297 = vmatmul.mubr.f32.gmra.mrb[0].mxu0 %v838
      %v1298 = vpop.f32.mrb[0].mxu0
      %v1299 = vadd.f32 %v1074, %v1298
      %v1300 = vpop.f32.mrb[0].mxu0
      %1301 = vmatprep.mubr.f32.mxu0 0.0
      %1302 = vmatmul.mubr.f32.gmra.mrb[0].mxu0 %v841
      %v1303 = vpop.f32.mrb[0].mxu0
      %v1304 = vadd.f32 %v1079, %v1303
      %v1305 = vpop.f32.mrb[0].mxu0
      %1306 = vmatprep.mubr.f32.mxu0 0.0
      %1307 = vmatmul.mubr.f32.gmra.mrb[0].mxu0 %v844
      %v1308 = vpop.f32.mrb[0].mxu0
      %v1309 = vadd.f32 %v1084, %v1308
      %v1310 = vpop.f32.mrb[0].mxu0
      %1311 = vmatprep.mubr.f32.mxu0 0.0
      %1312 = vmatmul.mubr.f32.gmra.mrb[0].mxu0 %v847
      %v1313 = vpop.f32.mrb[0].mxu0
      %v1314 = vadd.f32 %v1089, %v1313
      %v1315 = vpop.f32.mrb[0].mxu0
      %1316 = vmatprep.mubr.f32.mxu0 0.0
      %1317 = vmatmul.mubr.f32.gmra.mrb[0].mxu0 %v850
      %v1318 = vpop.f32.mrb[0].mxu0
      %v1319 = vadd.f32 %v1094, %v1318
      %v1320 = vpop.f32.mrb[0].mxu0
      %1321 = vmatprep.mubr.f32.mxu0 0.0
      %1322 = vmatmul.mubr.f32.gmra.mrb[0].mxu0 %v853
      %v1323 = vpop.f32.mrb[0].mxu0
      %v1324 = vadd.f32 %v1099, %v1323
      %v1325 = vpop.f32.mrb[0].mxu0
      %1326 = vmatprep.mubr.f32.mxu0 0.0
      %1327 = vmatmul.mubr.f32.gmra.mrb[0].mxu0 %v856
      %v1328 = vpop.f32.mrb[0].mxu0
      %v1329 = vadd.f32 %v1104, %v1328
      %v1330 = vpop.f32.mrb[0].mxu0
      %1331 = vmatprep.mubr.f32.mxu0 0.0
      %1332 = vmatmul.mubr.f32.gmra.mrb[0].mxu0 %v859
      %v1333 = vpop.f32.mrb[0].mxu0
      %v1334 = vadd.f32 %v1109, %v1333
      %v1335 = vpop.f32.mrb[0].mxu0
      %1336 = vmatprep.mubr.f32.mxu0 0.0
      %1337 = vmatmul.mubr.f32.gmra.mrb[0].mxu0 %v862
      %v1338 = vpop.f32.mrb[0].mxu0
      %v1339 = vadd.f32 %v1114, %v1338
      %v1340 = vpop.f32.mrb[0].mxu0
      %1341 = vmatprep.mubr.f32.mxu0 0.0
      %1342 = vmatmul.mubr.f32.gmra.mrb[0].mxu0 %v865
      %v1343 = vpop.f32.mrb[0].mxu0
      %v1344 = vadd.f32 %v1119, %v1343
      %v1345 = vpop.f32.mrb[0].mxu0
      %1346 = vmatprep.mubr.f32.mxu0 0.0
      %1347 = vmatmul.mubr.f32.gmra.mrb[0].mxu0 %v868
      %v1348 = vpop.f32.mrb[0].mxu0
      %v1349 = vadd.f32 %v1124, %v1348
      %v1350 = vpop.f32.mrb[0].mxu0
      %1351 = vmatprep.mubr.f32.mxu0 0.0
      %1352 = vmatmul.mubr.f32.gmra.mrb[0].mxu0 %v871
      %v1353 = vpop.f32.mrb[0].mxu0
      %v1354 = vadd.f32 %v1129, %v1353
      %v1355 = vpop.f32.mrb[0].mxu0
      %1356 = vmatprep.mubr.f32.mxu0 0.0
      %1357 = vmatmul.mubr.f32.gmra.mrb[0].mxu0 %v874
      %v1358 = vpop.f32.mrb[0].mxu0
      %v1359 = vadd.f32 %v1134, %v1358
      %v1360 = vpop.f32.mrb[0].mxu0
      %1361 = vmatprep.mubr.f32.mxu0 0.0
      %1362 = vmatmul.mubr.f32.gmra.mrb[0].mxu0 %v877
      %v1363 = vpop.f32.mrb[0].mxu0
      %v1364 = vadd.f32 %v1139, %v1363
      %v1365 = vpop.f32.mrb[0].mxu0
      %1366 = vmatprep.mubr.f32.mxu0 0.0
      %1367 = vmatmul.mubr.f32.gmra.mrb[0].mxu0 %v880
      %v1368 = vpop.f32.mrb[0].mxu0
      %v1369 = vadd.f32 %v1144, %v1368
      %v1370 = vpop.f32.mrb[0].mxu0
      %1371 = vmatprep.mubr.f32.mxu0 0.0
      %1372 = vmatmul.mubr.f32.gmra.mrb[0].mxu0 %v883
      %v1373 = vpop.f32.mrb[0].mxu0
      %v1374 = vadd.f32 %v1149, %v1373
      %v1375 = vpop.f32.mrb[0].mxu0
      %1376 = vmatprep.mubr.f32.mxu0 0.0
      %1377 = vmatmul.mubr.f32.gmra.mrb[0].mxu0 %v886
      %v1378 = vpop.f32.mrb[0].mxu0
      %v1379 = vadd.f32 %v1154, %v1378
      %v1380 = vpop.f32.mrb[0].mxu0
      %1381 = vmatprep.mubr.f32.mxu0 0.0
      %1382 = vmatmul.mubr.f32.gmra.mrb[0].mxu0 %v889
      %v1383 = vpop.f32.mrb[0].mxu0
      %v1384 = vadd.f32 %v1159, %v1383
      %v1385 = vpop.f32.mrb[0].mxu0
      %1386 = vmatprep.mubr.f32.mxu0 0.0
      %1387 = vmatmul.mubr.f32.gmra.mrb[0].mxu0 %v892
      %v1388 = vpop.f32.mrb[0].mxu0
      %v1389 = vadd.f32 %v1164, %v1388
      %v1390 = vpop.f32.mrb[0].mxu0
      %1391 = vdwg.mxu0
      %v1392 = vld [vmem:[#allocation2] sm:$0xff]
      %v1393 = vld [vmem:[#allocation2 + $0x8] sm:$0xff]
      %v1394 = vld [vmem:[#allocation2 + $0x10] sm:$0xff]
      %v1395 = vld [vmem:[#allocation2 + $0x18] sm:$0xff]
      %v1396 = vld [vmem:[#allocation2 + $0x20] sm:$0xff]
      %v1397 = vld [vmem:[#allocation2 + $0x28] sm:$0xff]
      %v1398 = vld [vmem:[#allocation2 + $0x30] sm:$0xff]
      %v1399 = vld [vmem:[#allocation2 + $0x38] sm:$0xff]
      %v1400 = vld [vmem:[#allocation2 + $0x40] sm:$0xff]
      %v1401 = vld [vmem:[#allocation2 + $0x48] sm:$0xff]
      %v1402 = vld [vmem:[#allocation2 + $0x50] sm:$0xff]
      %v1403 = vld [vmem:[#allocation2 + $0x58] sm:$0xff]
      %v1404 = vld [vmem:[#allocation2 + $0x60] sm:$0xff]
      %v1405 = vld [vmem:[#allocation2 + $0x68] sm:$0xff]
      %v1406 = vld [vmem:[#allocation2 + $0x70] sm:$0xff]
      %v1407 = vld [vmem:[#allocation2 + $0x78] sm:$0xff]
      %v1408 = vld [vmem:[#allocation2 + $0x80] sm:$0xff]
      %v1409 = vld [vmem:[#allocation2 + $0x88] sm:$0xff]
      %v1410 = vld [vmem:[#allocation2 + $0x90] sm:$0xff]
      %v1411 = vld [vmem:[#allocation2 + $0x98] sm:$0xff]
      %v1412 = vld [vmem:[#allocation2 + $0xa0] sm:$0xff]
      %v1413 = vld [vmem:[#allocation2 + $0xa8] sm:$0xff]
      %v1414 = vld [vmem:[#allocation2 + $0xb0] sm:$0xff]
      %v1415 = vld [vmem:[#allocation2 + $0xb8] sm:$0xff]
      %v1416 = vld [vmem:[#allocation2 + $0xc0] sm:$0xff]
      %v1417 = vld [vmem:[#allocation2 + $0xc8] sm:$0xff]
      %v1418 = vld [vmem:[#allocation2 + $0xd0] sm:$0xff]
      %v1419 = vld [vmem:[#allocation2 + $0xd8] sm:$0xff]
      %v1420 = vld [vmem:[#allocation2 + $0xe0] sm:$0xff]
      %v1421 = vld [vmem:[#allocation2 + $0xe8] sm:$0xff]
      %v1422 = vld [vmem:[#allocation2 + $0xf0] sm:$0xff]
      %v1423 = vld [vmem:[#allocation2 + $0xf8] sm:$0xff]
      %v1424 = vadd.f32 %v1392, %v1234
      %v1425 = vadd.f32 %v1393, %v1239
      %v1426 = vadd.f32 %v1394, %v1244
      %v1427 = vadd.f32 %v1395, %v1249
      %v1428 = vadd.f32 %v1396, %v1254
      %v1429 = vadd.f32 %v1397, %v1259
      %v1430 = vadd.f32 %v1398, %v1264
      %v1431 = vadd.f32 %v1399, %v1269
      %v1432 = vadd.f32 %v1400, %v1274
      %v1433 = vadd.f32 %v1401, %v1279
      %v1434 = vadd.f32 %v1402, %v1284
      %v1435 = vadd.f32 %v1403, %v1289
      %v1436 = vadd.f32 %v1404, %v1294
      %v1437 = vadd.f32 %v1405, %v1299
      %v1438 = vadd.f32 %v1406, %v1304
      %v1439 = vadd.f32 %v1407, %v1309
      %v1440 = vadd.f32 %v1408, %v1314
      %v1441 = vadd.f32 %v1409, %v1319
      %v1442 = vadd.f32 %v1410, %v1324
      %v1443 = vadd.f32 %v1411, %v1329
      %v1444 = vadd.f32 %v1412, %v1334
      %v1445 = vadd.f32 %v1413, %v1339
      %v1446 = vadd.f32 %v1414, %v1344
      %v1447 = vadd.f32 %v1415, %v1349
      %v1448 = vadd.f32 %v1416, %v1354
      %v1449 = vadd.f32 %v1417, %v1359
      %v1450 = vadd.f32 %v1418, %v1364
      %v1451 = vadd.f32 %v1419, %v1369
      %v1452 = vadd.f32 %v1420, %v1374
      %v1453 = vadd.f32 %v1421, %v1379
      %v1454 = vadd.f32 %v1422, %v1384
      %v1455 = vadd.f32 %v1423, %v1389
      %1456 = vst [vmem:[#allocation2] sm:$0xff] %v1424
      %1457 = vst [vmem:[#allocation2 + $0x8] sm:$0xff] %v1425
      %1458 = vst [vmem:[#allocation2 + $0x10] sm:$0xff] %v1426
      %1459 = vst [vmem:[#allocation2 + $0x18] sm:$0xff] %v1427
      %1460 = vst [vmem:[#allocation2 + $0x20] sm:$0xff] %v1428
      %1461 = vst [vmem:[#allocation2 + $0x28] sm:$0xff] %v1429
      %1462 = vst [vmem:[#allocation2 + $0x30] sm:$0xff] %v1430
      %1463 = vst [vmem:[#allocation2 + $0x38] sm:$0xff] %v1431
      %1464 = vst [vmem:[#allocation2 + $0x40] sm:$0xff] %v1432
      %1465 = vst [vmem:[#allocation2 + $0x48] sm:$0xff] %v1433
      %1466 = vst [vmem:[#allocation2 + $0x50] sm:$0xff] %v1434
      %1467 = vst [vmem:[#allocation2 + $0x58] sm:$0xff] %v1435
      %1468 = vst [vmem:[#allocation2 + $0x60] sm:$0xff] %v1436
      %1469 = vst [vmem:[#allocation2 + $0x68] sm:$0xff] %v1437
      %1470 = vst [vmem:[#allocation2 + $0x70] sm:$0xff] %v1438
      %1471 = vst [vmem:[#allocation2 + $0x78] sm:$0xff] %v1439
      %1472 = vst [vmem:[#allocation2 + $0x80] sm:$0xff] %v1440
      %1473 = vst [vmem:[#allocation2 + $0x88] sm:$0xff] %v1441
      %1474 = vst [vmem:[#allocation2 + $0x90] sm:$0xff] %v1442
      %1475 = vst [vmem:[#allocation2 + $0x98] sm:$0xff] %v1443
      %1476 = vst [vmem:[#allocation2 + $0xa0] sm:$0xff] %v1444
      %1477 = vst [vmem:[#allocation2 + $0xa8] sm:$0xff] %v1445
      %1478 = vst [vmem:[#allocation2 + $0xb0] sm:$0xff] %v1446
      %1479 = vst [vmem:[#allocation2 + $0xb8] sm:$0xff] %v1447
      %1480 = vst [vmem:[#allocation2 + $0xc0] sm:$0xff] %v1448
      %1481 = vst [vmem:[#allocation2 + $0xc8] sm:$0xff] %v1449
      %1482 = vst [vmem:[#allocation2 + $0xd0] sm:$0xff] %v1450
      %1483 = vst [vmem:[#allocation2 + $0xd8] sm:$0xff] %v1451
      %1484 = vst [vmem:[#allocation2 + $0xe0] sm:$0xff] %v1452
      %1485 = vst [vmem:[#allocation2 + $0xe8] sm:$0xff] %v1453
      %1486 = vst [vmem:[#allocation2 + $0xf0] sm:$0xff] %v1454
      %1487 = vst [vmem:[#allocation2 + $0xf8] sm:$0xff] %v1455
      %v1488 = vld [vmem:[%s165 + $0x60] sm:$0xff]
      %v1489 = vld [vmem:[%s165 + $0x68] sm:$0xff]
      %v1490 = vld [vmem:[%s165 + $0x70] sm:$0xff]
      %v1491 = vld [vmem:[%s165 + $0x78] sm:$0xff]
      %v1492 = vld [vmem:[%s165 + $0x80] sm:$0xff]
      %v1493 = vld [vmem:[%s165 + $0x88] sm:$0xff]
      %v1494 = vld [vmem:[%s165 + $0x90] sm:$0xff]
      %v1495 = vld [vmem:[%s165 + $0x98] sm:$0xff]
      %v1496 = vld [vmem:[%s165 + $0xa0] sm:$0xff]
      %v1497 = vld [vmem:[%s165 + $0xa8] sm:$0xff]
      %v1498 = vld [vmem:[%s165 + $0xb0] sm:$0xff]
      %v1499 = vld [vmem:[%s165 + $0xb8] sm:$0xff]
      %v1500 = vld [vmem:[%s165 + $0xc0] sm:$0xff]
      %v1501 = vld [vmem:[%s165 + $0xc8] sm:$0xff]
      %v1502 = vld [vmem:[%s165 + $0xd0] sm:$0xff]
      %v1503 = vld [vmem:[%s165 + $0xd8] sm:$0xff]
      %v1504 = vld [vmem:[%s165 + $0xe0] sm:$0xff]
      %v1505 = vld [vmem:[%s165 + $0xe8] sm:$0xff]
      %v1506 = vld [vmem:[%s165 + $0xf0] sm:$0xff]
      %v1507 = vld [vmem:[%s165 + $0xf8] sm:$0xff]
      %v1508 = vld [vmem:[%s165 + $0x100] sm:$0xff]
      %v1509 = vld [vmem:[%s165 + $0x108] sm:$0xff]
      %v1510 = vld [vmem:[%s165 + $0x110] sm:$0xff]
      %v1511 = vld [vmem:[%s165 + $0x118] sm:$0xff]
      %v1512 = vld [vmem:[%s165 + $0x120] sm:$0xff]
      %v1513 = vld [vmem:[%s165 + $0x128] sm:$0xff]
      %v1514 = vld [vmem:[%s165 + $0x130] sm:$0xff]
      %v1515 = vld [vmem:[%s165 + $0x138] sm:$0xff]
      %v1516 = vld [vmem:[%s165 + $0x140] sm:$0xff]
      %v1517 = vld [vmem:[%s165 + $0x148] sm:$0xff]
      %v1518 = vld [vmem:[%s165 + $0x150] sm:$0xff]
      %v1519 = vld [vmem:[%s165 + $0x158] sm:$0xff]
      %v1520 = vld [vmem:[%s165 + $0x160] sm:$0xff]
      %v1521 = vld [vmem:[%s165 + $0x168] sm:$0xff]
      %v1522 = vld [vmem:[%s165 + $0x170] sm:$0xff]
      %v1523 = vld [vmem:[%s165 + $0x178] sm:$0xff]
      %v1524 = vld [vmem:[%s165 + $0x180] sm:$0xff]
      %v1525 = vld [vmem:[%s165 + $0x188] sm:$0xff]
      %v1526 = vld [vmem:[%s165 + $0x190] sm:$0xff]
      %v1527 = vld [vmem:[%s165 + $0x198] sm:$0xff]
      %v1528 = vld [vmem:[%s165 + $0x1a0] sm:$0xff]
      %v1529 = vld [vmem:[%s165 + $0x1a8] sm:$0xff]
      %v1530 = vld [vmem:[%s165 + $0x1b0] sm:$0xff]
      %v1531 = vld [vmem:[%s165 + $0x1b8] sm:$0xff]
      %v1532 = vld [vmem:[%s165 + $0x1c0] sm:$0xff]
      %v1533 = vld [vmem:[%s165 + $0x1c8] sm:$0xff]
      %v1534 = vld [vmem:[%s165 + $0x1d0] sm:$0xff]
      %v1535 = vld [vmem:[%s165 + $0x1d8] sm:$0xff]
      %v1536 = vld [vmem:[%s165 + $0x1e0] sm:$0xff]
      %v1537 = vld [vmem:[%s165 + $0x1e8] sm:$0xff]
      %v1538 = vld [vmem:[%s165 + $0x1f0] sm:$0xff]
      %v1539 = vld [vmem:[%s165 + $0x1f8] sm:$0xff]
      %v1540 = vld [vmem:[%s165 + $0x200] sm:$0xff]
      %v1541 = vld [vmem:[%s165 + $0x208] sm:$0xff]
      %v1542 = vld [vmem:[%s165 + $0x210] sm:$0xff]
      %v1543 = vld [vmem:[%s165 + $0x218] sm:$0xff]
      %v1544 = vld [vmem:[%s165 + $0x220] sm:$0xff]
      %v1545 = vld [vmem:[%s165 + $0x228] sm:$0xff]
      %v1546 = vld [vmem:[%s165 + $0x230] sm:$0xff]
      %v1547 = vld [vmem:[%s165 + $0x238] sm:$0xff]
      %v1548 = vld [vmem:[%s165 + $0x240] sm:$0xff]
      %v1549 = vld [vmem:[%s165 + $0x248] sm:$0xff]
      %v1550 = vld [vmem:[%s165 + $0x250] sm:$0xff]
      %v1551 = vld [vmem:[%s165 + $0x258] sm:$0xff]
      %v1552 = vld [vmem:[%s165 + $0x260] sm:$0xff]
      %v1553 = vld [vmem:[%s165 + $0x268] sm:$0xff]
      %v1554 = vld [vmem:[%s165 + $0x270] sm:$0xff]
      %v1555 = vld [vmem:[%s165 + $0x278] sm:$0xff]
      %v1556 = vld [vmem:[%s165 + $0x280] sm:$0xff]
      %v1557 = vld [vmem:[%s165 + $0x288] sm:$0xff]
      %v1558 = vld [vmem:[%s165 + $0x290] sm:$0xff]
      %v1559 = vld [vmem:[%s165 + $0x298] sm:$0xff]
      %v1560 = vld [vmem:[%s165 + $0x2a0] sm:$0xff]
      %v1561 = vld [vmem:[%s165 + $0x2a8] sm:$0xff]
      %v1562 = vld [vmem:[%s165 + $0x2b0] sm:$0xff]
      %v1563 = vld [vmem:[%s165 + $0x2b8] sm:$0xff]
      %v1564 = vld [vmem:[%s165 + $0x2c0] sm:$0xff]
      %v1565 = vld [vmem:[%s165 + $0x2c8] sm:$0xff]
      %v1566 = vld [vmem:[%s165 + $0x2d0] sm:$0xff]
      %v1567 = vld [vmem:[%s165 + $0x2d8] sm:$0xff]
      %v1568 = vld [vmem:[%s165 + $0x2e0] sm:$0xff]
      %v1569 = vld [vmem:[%s165 + $0x2e8] sm:$0xff]
      %v1570 = vld [vmem:[%s165 + $0x2f0] sm:$0xff]
      %v1571 = vld [vmem:[%s165 + $0x2f8] sm:$0xff]
      %v1572 = vld [vmem:[%s165 + $0x300] sm:$0xff]
      %v1573 = vld [vmem:[%s165 + $0x308] sm:$0xff]
      %v1574 = vld [vmem:[%s165 + $0x310] sm:$0xff]
      %v1575 = vld [vmem:[%s165 + $0x318] sm:$0xff]
      %v1576 = vld [vmem:[%s165 + $0x320] sm:$0xff]
      %v1577 = vld [vmem:[%s165 + $0x328] sm:$0xff]
      %v1578 = vld [vmem:[%s165 + $0x330] sm:$0xff]
      %v1579 = vld [vmem:[%s165 + $0x338] sm:$0xff]
      %v1580 = vld [vmem:[%s165 + $0x340] sm:$0xff]
      %v1581 = vld [vmem:[%s165 + $0x348] sm:$0xff]
      %v1582 = vld [vmem:[%s165 + $0x350] sm:$0xff]
      %v1583 = vld [vmem:[%s165 + $0x358] sm:$0xff]
      %s1584 = scalar_lea.vmem %s1, 768
      %v1585 = vld [vmem:[%s1584] sm:$0xff]
      %v1586 = vld [vmem:[%s1584 + $0x8] sm:$0xff]
      %v1587 = vld [vmem:[%s1584 + $0x10] sm:$0xff]
      %v1588 = vld [vmem:[%s1584 + $0x18] sm:$0xff]
      %v1589 = vld [vmem:[%s1584 + $0x20] sm:$0xff]
      %v1590 = vld [vmem:[%s1584 + $0x28] sm:$0xff]
      %v1591 = vld [vmem:[%s1584 + $0x30] sm:$0xff]
      %v1592 = vld [vmem:[%s1584 + $0x38] sm:$0xff]
      %v1593 = vld [vmem:[%s1584 + $0x40] sm:$0xff]
      %v1594 = vld [vmem:[%s1584 + $0x48] sm:$0xff]
      %v1595 = vld [vmem:[%s1584 + $0x50] sm:$0xff]
      %v1596 = vld [vmem:[%s1584 + $0x58] sm:$0xff]
      %v1597 = vld [vmem:[%s1584 + $0x60] sm:$0xff]
      %v1598 = vld [vmem:[%s1584 + $0x68] sm:$0xff]
      %v1599 = vld [vmem:[%s1584 + $0x70] sm:$0xff]
      %v1600 = vld [vmem:[%s1584 + $0x78] sm:$0xff]
      %v1601 = vld [vmem:[%s1584 + $0x80] sm:$0xff]
      %v1602 = vld [vmem:[%s1584 + $0x88] sm:$0xff]
      %v1603 = vld [vmem:[%s1584 + $0x90] sm:$0xff]
      %v1604 = vld [vmem:[%s1584 + $0x98] sm:$0xff]
      %v1605 = vld [vmem:[%s1584 + $0xa0] sm:$0xff]
      %v1606 = vld [vmem:[%s1584 + $0xa8] sm:$0xff]
      %v1607 = vld [vmem:[%s1584 + $0xb0] sm:$0xff]
      %v1608 = vld [vmem:[%s1584 + $0xb8] sm:$0xff]
      %v1609 = vld [vmem:[%s1584 + $0xc0] sm:$0xff]
      %v1610 = vld [vmem:[%s1584 + $0xc8] sm:$0xff]
      %v1611 = vld [vmem:[%s1584 + $0xd0] sm:$0xff]
      %v1612 = vld [vmem:[%s1584 + $0xd8] sm:$0xff]
      %v1613 = vld [vmem:[%s1584 + $0xe0] sm:$0xff]
      %v1614 = vld [vmem:[%s1584 + $0xe8] sm:$0xff]
      %v1615 = vld [vmem:[%s1584 + $0xf0] sm:$0xff]
      %v1616 = vld [vmem:[%s1584 + $0xf8] sm:$0xff]
      %v1617 = vld [vmem:[%s1584 + $0x100] sm:$0xff]
      %v1618 = vld [vmem:[%s1584 + $0x108] sm:$0xff]
      %v1619 = vld [vmem:[%s1584 + $0x110] sm:$0xff]
      %v1620 = vld [vmem:[%s1584 + $0x118] sm:$0xff]
      %v1621 = vld [vmem:[%s1584 + $0x120] sm:$0xff]
      %v1622 = vld [vmem:[%s1584 + $0x128] sm:$0xff]
      %v1623 = vld [vmem:[%s1584 + $0x130] sm:$0xff]
      %v1624 = vld [vmem:[%s1584 + $0x138] sm:$0xff]
      %v1625 = vld [vmem:[%s1584 + $0x140] sm:$0xff]
      %v1626 = vld [vmem:[%s1584 + $0x148] sm:$0xff]
      %v1627 = vld [vmem:[%s1584 + $0x150] sm:$0xff]
      %v1628 = vld [vmem:[%s1584 + $0x158] sm:$0xff]
      %v1629 = vld [vmem:[%s1584 + $0x160] sm:$0xff]
      %v1630 = vld [vmem:[%s1584 + $0x168] sm:$0xff]
      %v1631 = vld [vmem:[%s1584 + $0x170] sm:$0xff]
      %v1632 = vld [vmem:[%s1584 + $0x178] sm:$0xff]
      %1633 = vmatprep.subr.mxu0 0.0
      %1634 = vmatpush1.msra.mxu0 %v1585
      %1635 = vmatprep.subr.mxu0 0.0
      %1636 = vmatpush1.msra.mxu0 %v1586
      %1637 = vmatprep.subr.mxu0 0.0
      %1638 = vmatpush1.msra.mxu0 %v1587
      %1639 = vmatprep.subr.mxu0 0.0
      %1640 = vmatpush1.msra.mxu0 %v1588
      %1641 = vmatprep.subr.mxu0 0.0
      %1642 = vmatpush1.msra.mxu0 %v1589
      %1643 = vmatprep.subr.mxu0 0.0
      %1644 = vmatpush1.msra.mxu0 %v1590
      %1645 = vmatprep.subr.mxu0 0.0
      %1646 = vmatpush1.msra.mxu0 %v1591
      %1647 = vmatprep.subr.mxu0 0.0
      %1648 = vmatpush1.msra.mxu0 %v1592
      %1649 = vmatprep.subr.mxu0 0.0
      %1650 = vmatpush1.msra.mxu0 %v1593
      %1651 = vmatprep.subr.mxu0 0.0
      %1652 = vmatpush1.msra.mxu0 %v1594
      %1653 = vmatprep.subr.mxu0 0.0
      %1654 = vmatpush1.msra.mxu0 %v1595
      %1655 = vmatprep.subr.mxu0 0.0
      %1656 = vmatpush1.msra.mxu0 %v1596
      %1657 = vmatprep.subr.mxu0 0.0
      %1658 = vmatpush1.msra.mxu0 %v1597
      %1659 = vmatprep.subr.mxu0 0.0
      %1660 = vmatpush1.msra.mxu0 %v1598
      %1661 = vmatprep.subr.mxu0 0.0
      %1662 = vmatpush1.msra.mxu0 %v1599
      %1663 = vmatprep.subr.mxu0 0.0
      %1664 = vmatpush1.msra.mxu0 %v1600
      %1665 = vmatprep.subr.mxu0 0.0
      %1666 = vmatpush1.msra.mxu0 %v1601
      %1667 = vmatprep.subr.mxu0 0.0
      %1668 = vmatpush1.msra.mxu0 %v1602
      %1669 = vmatprep.subr.mxu0 0.0
      %1670 = vmatpush1.msra.mxu0 %v1603
      %1671 = vmatprep.subr.mxu0 0.0
      %1672 = vmatpush1.msra.mxu0 %v1604
      %1673 = vmatprep.subr.mxu0 0.0
      %1674 = vmatpush1.msra.mxu0 %v1605
      %1675 = vmatprep.subr.mxu0 0.0
      %1676 = vmatpush1.msra.mxu0 %v1606
      %1677 = vmatprep.subr.mxu0 0.0
      %1678 = vmatpush1.msra.mxu0 %v1607
      %1679 = vmatprep.subr.mxu0 0.0
      %1680 = vmatpush1.msra.mxu0 %v1608
      %1681 = vmatprep.subr.mxu0 0.0
      %1682 = vmatpush1.msra.mxu0 %v1609
      %1683 = vmatprep.subr.mxu0 0.0
      %1684 = vmatpush1.msra.mxu0 %v1610
      %1685 = vmatprep.subr.mxu0 0.0
      %1686 = vmatpush1.msra.mxu0 %v1611
      %1687 = vmatprep.subr.mxu0 0.0
      %1688 = vmatpush1.msra.mxu0 %v1612
      %1689 = vmatprep.subr.mxu0 0.0
      %1690 = vmatpush1.msra.mxu0 %v1613
      %1691 = vmatprep.subr.mxu0 0.0
      %1692 = vmatpush1.msra.mxu0 %v1614
      %1693 = vmatprep.subr.mxu0 0.0
      %1694 = vmatpush1.msra.mxu0 %v1615
      %1695 = vmatprep.subr.mxu0 0.0
      %1696 = vmatpush1.msra.mxu0 %v1616
      %1697 = vmatprep.mubr.f32.mxu0 %v1489
      %1698 = vmatmul.mubr.f32.gmra.mrb[0].mxu0 %v1488
      %v1699 = vpop.f32.mrb[0].mxu0
      %v1700 = vadd.f32 0.0, %v1699
      %v1701 = vpop.f32.mrb[0].mxu0
      %1702 = vmatprep.mubr.f32.mxu0 %v1492
      %1703 = vmatmul.mubr.f32.gmra.mrb[0].mxu0 %v1491
      %v1704 = vpop.f32.mrb[0].mxu0
      %v1705 = vadd.f32 0.0, %v1704
      %v1706 = vpop.f32.mrb[0].mxu0
      %1707 = vmatprep.mubr.f32.mxu0 %v1495
      %1708 = vmatmul.mubr.f32.gmra.mrb[0].mxu0 %v1494
      %v1709 = vpop.f32.mrb[0].mxu0
      %v1710 = vadd.f32 0.0, %v1709
      %v1711 = vpop.f32.mrb[0].mxu0
      %1712 = vmatprep.mubr.f32.mxu0 %v1498
      %1713 = vmatmul.mubr.f32.gmra.mrb[0].mxu0 %v1497
      %v1714 = vpop.f32.mrb[0].mxu0
      %v1715 = vadd.f32 0.0, %v1714
      %v1716 = vpop.f32.mrb[0].mxu0
      %1717 = vmatprep.mubr.f32.mxu0 %v1501
      %1718 = vmatmul.mubr.f32.gmra.mrb[0].mxu0 %v1500
      %v1719 = vpop.f32.mrb[0].mxu0
      %v1720 = vadd.f32 0.0, %v1719
      %v1721 = vpop.f32.mrb[0].mxu0
      %1722 = vmatprep.mubr.f32.mxu0 %v1504
      %1723 = vmatmul.mubr.f32.gmra.mrb[0].mxu0 %v1503
      %v1724 = vpop.f32.mrb[0].mxu0
      %v1725 = vadd.f32 0.0, %v1724
      %v1726 = vpop.f32.mrb[0].mxu0
      %1727 = vmatprep.mubr.f32.mxu0 %v1507
      %1728 = vmatmul.mubr.f32.gmra.mrb[0].mxu0 %v1506
      %v1729 = vpop.f32.mrb[0].mxu0
      %v1730 = vadd.f32 0.0, %v1729
      %v1731 = vpop.f32.mrb[0].mxu0
      %1732 = vmatprep.mubr.f32.mxu0 %v1510
      %1733 = vmatmul.mubr.f32.gmra.mrb[0].mxu0 %v1509
      %v1734 = vpop.f32.mrb[0].mxu0
      %v1735 = vadd.f32 0.0, %v1734
      %v1736 = vpop.f32.mrb[0].mxu0
      %1737 = vmatprep.mubr.f32.mxu0 %v1513
      %1738 = vmatmul.mubr.f32.gmra.mrb[0].mxu0 %v1512
      %v1739 = vpop.f32.mrb[0].mxu0
      %v1740 = vadd.f32 0.0, %v1739
      %v1741 = vpop.f32.mrb[0].mxu0
      %1742 = vmatprep.mubr.f32.mxu0 %v1516
      %1743 = vmatmul.mubr.f32.gmra.mrb[0].mxu0 %v1515
      %v1744 = vpop.f32.mrb[0].mxu0
      %v1745 = vadd.f32 0.0, %v1744
      %v1746 = vpop.f32.mrb[0].mxu0
      %1747 = vmatprep.mubr.f32.mxu0 %v1519
      %1748 = vmatmul.mubr.f32.gmra.mrb[0].mxu0 %v1518
      %v1749 = vpop.f32.mrb[0].mxu0
      %v1750 = vadd.f32 0.0, %v1749
      %v1751 = vpop.f32.mrb[0].mxu0
      %1752 = vmatprep.mubr.f32.mxu0 %v1522
      %1753 = vmatmul.mubr.f32.gmra.mrb[0].mxu0 %v1521
      %v1754 = vpop.f32.mrb[0].mxu0
      %v1755 = vadd.f32 0.0, %v1754
      %v1756 = vpop.f32.mrb[0].mxu0
      %1757 = vmatprep.mubr.f32.mxu0 %v1525
      %1758 = vmatmul.mubr.f32.gmra.mrb[0].mxu0 %v1524
      %v1759 = vpop.f32.mrb[0].mxu0
      %v1760 = vadd.f32 0.0, %v1759
      %v1761 = vpop.f32.mrb[0].mxu0
      %1762 = vmatprep.mubr.f32.mxu0 %v1528
      %1763 = vmatmul.mubr.f32.gmra.mrb[0].mxu0 %v1527
      %v1764 = vpop.f32.mrb[0].mxu0
      %v1765 = vadd.f32 0.0, %v1764
      %v1766 = vpop.f32.mrb[0].mxu0
      %1767 = vmatprep.mubr.f32.mxu0 %v1531
      %1768 = vmatmul.mubr.f32.gmra.mrb[0].mxu0 %v1530
      %v1769 = vpop.f32.mrb[0].mxu0
      %v1770 = vadd.f32 0.0, %v1769
      %v1771 = vpop.f32.mrb[0].mxu0
      %1772 = vmatprep.mubr.f32.mxu0 %v1534
      %1773 = vmatmul.mubr.f32.gmra.mrb[0].mxu0 %v1533
      %v1774 = vpop.f32.mrb[0].mxu0
      %v1775 = vadd.f32 0.0, %v1774
      %v1776 = vpop.f32.mrb[0].mxu0
      %1777 = vmatprep.mubr.f32.mxu0 %v1537
      %1778 = vmatmul.mubr.f32.gmra.mrb[0].mxu0 %v1536
      %v1779 = vpop.f32.mrb[0].mxu0
      %v1780 = vadd.f32 0.0, %v1779
      %v1781 = vpop.f32.mrb[0].mxu0
      %1782 = vmatprep.mubr.f32.mxu0 %v1540
      %1783 = vmatmul.mubr.f32.gmra.mrb[0].mxu0 %v1539
      %v1784 = vpop.f32.mrb[0].mxu0
      %v1785 = vadd.f32 0.0, %v1784
      %v1786 = vpop.f32.mrb[0].mxu0
      %1787 = vmatprep.mubr.f32.mxu0 %v1543
      %1788 = vmatmul.mubr.f32.gmra.mrb[0].mxu0 %v1542
      %v1789 = vpop.f32.mrb[0].mxu0
      %v1790 = vadd.f32 0.0, %v1789
      %v1791 = vpop.f32.mrb[0].mxu0
      %1792 = vmatprep.mubr.f32.mxu0 %v1546
      %1793 = vmatmul.mubr.f32.gmra.mrb[0].mxu0 %v1545
      %v1794 = vpop.f32.mrb[0].mxu0
      %v1795 = vadd.f32 0.0, %v1794
      %v1796 = vpop.f32.mrb[0].mxu0
      %1797 = vmatprep.mubr.f32.mxu0 %v1549
      %1798 = vmatmul.mubr.f32.gmra.mrb[0].mxu0 %v1548
      %v1799 = vpop.f32.mrb[0].mxu0
      %v1800 = vadd.f32 0.0, %v1799
      %v1801 = vpop.f32.mrb[0].mxu0
      %1802 = vmatprep.mubr.f32.mxu0 %v1552
      %1803 = vmatmul.mubr.f32.gmra.mrb[0].mxu0 %v1551
      %v1804 = vpop.f32.mrb[0].mxu0
      %v1805 = vadd.f32 0.0, %v1804
      %v1806 = vpop.f32.mrb[0].mxu0
      %1807 = vmatprep.mubr.f32.mxu0 %v1555
      %1808 = vmatmul.mubr.f32.gmra.mrb[0].mxu0 %v1554
      %v1809 = vpop.f32.mrb[0].mxu0
      %v1810 = vadd.f32 0.0, %v1809
      %v1811 = vpop.f32.mrb[0].mxu0
      %1812 = vmatprep.mubr.f32.mxu0 %v1558
      %1813 = vmatmul.mubr.f32.gmra.mrb[0].mxu0 %v1557
      %v1814 = vpop.f32.mrb[0].mxu0
      %v1815 = vadd.f32 0.0, %v1814
      %v1816 = vpop.f32.mrb[0].mxu0
      %1817 = vmatprep.mubr.f32.mxu0 %v1561
      %1818 = vmatmul.mubr.f32.gmra.mrb[0].mxu0 %v1560
      %v1819 = vpop.f32.mrb[0].mxu0
      %v1820 = vadd.f32 0.0, %v1819
      %v1821 = vpop.f32.mrb[0].mxu0
      %1822 = vmatprep.mubr.f32.mxu0 %v1564
      %1823 = vmatmul.mubr.f32.gmra.mrb[0].mxu0 %v1563
      %v1824 = vpop.f32.mrb[0].mxu0
      %v1825 = vadd.f32 0.0, %v1824
      %v1826 = vpop.f32.mrb[0].mxu0
      %1827 = vmatprep.mubr.f32.mxu0 %v1567
      %1828 = vmatmul.mubr.f32.gmra.mrb[0].mxu0 %v1566
      %v1829 = vpop.f32.mrb[0].mxu0
      %v1830 = vadd.f32 0.0, %v1829
      %v1831 = vpop.f32.mrb[0].mxu0
      %1832 = vmatprep.mubr.f32.mxu0 %v1570
      %1833 = vmatmul.mubr.f32.gmra.mrb[0].mxu0 %v1569
      %v1834 = vpop.f32.mrb[0].mxu0
      %v1835 = vadd.f32 0.0, %v1834
      %v1836 = vpop.f32.mrb[0].mxu0
      %1837 = vmatprep.mubr.f32.mxu0 %v1573
      %1838 = vmatmul.mubr.f32.gmra.mrb[0].mxu0 %v1572
      %v1839 = vpop.f32.mrb[0].mxu0
      %v1840 = vadd.f32 0.0, %v1839
      %v1841 = vpop.f32.mrb[0].mxu0
      %1842 = vmatprep.mubr.f32.mxu0 %v1576
      %1843 = vmatmul.mubr.f32.gmra.mrb[0].mxu0 %v1575
      %v1844 = vpop.f32.mrb[0].mxu0
      %v1845 = vadd.f32 0.0, %v1844
      %v1846 = vpop.f32.mrb[0].mxu0
      %1847 = vmatprep.mubr.f32.mxu0 %v1579
      %1848 = vmatmul.mubr.f32.gmra.mrb[0].mxu0 %v1578
      %v1849 = vpop.f32.mrb[0].mxu0
      %v1850 = vadd.f32 0.0, %v1849
      %v1851 = vpop.f32.mrb[0].mxu0
      %1852 = vmatprep.mubr.f32.mxu0 %v1582
      %1853 = vmatmul.mubr.f32.gmra.mrb[0].mxu0 %v1581
      %v1854 = vpop.f32.mrb[0].mxu0
      %v1855 = vadd.f32 0.0, %v1854
      %v1856 = vpop.f32.mrb[0].mxu0
      %1857 = vdwg.mxu0
      %1858 = vmatprep.subr.mxu0 0.0
      %1859 = vmatpush1.msra.mxu0 %v1617
      %1860 = vmatprep.subr.mxu0 0.0
      %1861 = vmatpush1.msra.mxu0 %v1618
      %1862 = vmatprep.subr.mxu0 0.0
      %1863 = vmatpush1.msra.mxu0 %v1619
      %1864 = vmatprep.subr.mxu0 0.0
      %1865 = vmatpush1.msra.mxu0 %v1620
      %1866 = vmatprep.subr.mxu0 0.0
      %1867 = vmatpush1.msra.mxu0 %v1621
      %1868 = vmatprep.subr.mxu0 0.0
      %1869 = vmatpush1.msra.mxu0 %v1622
      %1870 = vmatprep.subr.mxu0 0.0
      %1871 = vmatpush1.msra.mxu0 %v1623
      %1872 = vmatprep.subr.mxu0 0.0
      %1873 = vmatpush1.msra.mxu0 %v1624
      %1874 = vmatprep.subr.mxu0 0.0
      %1875 = vmatpush1.msra.mxu0 %v1625
      %1876 = vmatprep.subr.mxu0 0.0
      %1877 = vmatpush1.msra.mxu0 %v1626
      %1878 = vmatprep.subr.mxu0 0.0
      %1879 = vmatpush1.msra.mxu0 %v1627
      %1880 = vmatprep.subr.mxu0 0.0
      %1881 = vmatpush1.msra.mxu0 %v1628
      %1882 = vmatprep.subr.mxu0 0.0
      %1883 = vmatpush1.msra.mxu0 %v1629
      %1884 = vmatprep.subr.mxu0 0.0
      %1885 = vmatpush1.msra.mxu0 %v1630
      %1886 = vmatprep.subr.mxu0 0.0
      %1887 = vmatpush1.msra.mxu0 %v1631
      %1888 = vmatprep.subr.mxu0 0.0
      %1889 = vmatpush1.msra.mxu0 %v1632
      %1890 = vmatprep.subr.mxu0 0.0
      %1891 = vmatpush1.msra.mxu0 0.0
      %1892 = vmatprep.subr.mxu0 0.0
      %1893 = vmatpush1.msra.mxu0 0.0
      %1894 = vmatprep.subr.mxu0 0.0
      %1895 = vmatpush1.msra.mxu0 0.0
      %1896 = vmatprep.subr.mxu0 0.0
      %1897 = vmatpush1.msra.mxu0 0.0
      %1898 = vmatprep.subr.mxu0 0.0
      %1899 = vmatpush1.msra.mxu0 0.0
      %1900 = vmatprep.subr.mxu0 0.0
      %1901 = vmatpush1.msra.mxu0 0.0
      %1902 = vmatprep.subr.mxu0 0.0
      %1903 = vmatpush1.msra.mxu0 0.0
      %1904 = vmatprep.subr.mxu0 0.0
      %1905 = vmatpush1.msra.mxu0 0.0
      %1906 = vmatprep.subr.mxu0 0.0
      %1907 = vmatpush1.msra.mxu0 0.0
      %1908 = vmatprep.subr.mxu0 0.0
      %1909 = vmatpush1.msra.mxu0 0.0
      %1910 = vmatprep.subr.mxu0 0.0
      %1911 = vmatpush1.msra.mxu0 0.0
      %1912 = vmatprep.subr.mxu0 0.0
      %1913 = vmatpush1.msra.mxu0 0.0
      %1914 = vmatprep.subr.mxu0 0.0
      %1915 = vmatpush1.msra.mxu0 0.0
      %1916 = vmatprep.subr.mxu0 0.0
      %1917 = vmatpush1.msra.mxu0 0.0
      %1918 = vmatprep.subr.mxu0 0.0
      %1919 = vmatpush1.msra.mxu0 0.0
      %1920 = vmatprep.subr.mxu0 0.0
      %1921 = vmatpush1.msra.mxu0 0.0
      %1922 = vmatprep.mubr.f32.mxu0 0.0
      %1923 = vmatmul.mubr.f32.gmra.mrb[0].mxu0 %v1490
      %v1924 = vpop.f32.mrb[0].mxu0
      %v1925 = vadd.f32 %v1700, %v1924
      %v1926 = vpop.f32.mrb[0].mxu0
      %1927 = vmatprep.mubr.f32.mxu0 0.0
      %1928 = vmatmul.mubr.f32.gmra.mrb[0].mxu0 %v1493
      %v1929 = vpop.f32.mrb[0].mxu0
      %v1930 = vadd.f32 %v1705, %v1929
      %v1931 = vpop.f32.mrb[0].mxu0
      %1932 = vmatprep.mubr.f32.mxu0 0.0
      %1933 = vmatmul.mubr.f32.gmra.mrb[0].mxu0 %v1496
      %v1934 = vpop.f32.mrb[0].mxu0
      %v1935 = vadd.f32 %v1710, %v1934
      %v1936 = vpop.f32.mrb[0].mxu0
      %1937 = vmatprep.mubr.f32.mxu0 0.0
      %1938 = vmatmul.mubr.f32.gmra.mrb[0].mxu0 %v1499
      %v1939 = vpop.f32.mrb[0].mxu0
      %v1940 = vadd.f32 %v1715, %v1939
      %v1941 = vpop.f32.mrb[0].mxu0
      %1942 = vmatprep.mubr.f32.mxu0 0.0
      %1943 = vmatmul.mubr.f32.gmra.mrb[0].mxu0 %v1502
      %v1944 = vpop.f32.mrb[0].mxu0
      %v1945 = vadd.f32 %v1720, %v1944
      %v1946 = vpop.f32.mrb[0].mxu0
      %1947 = vmatprep.mubr.f32.mxu0 0.0
      %1948 = vmatmul.mubr.f32.gmra.mrb[0].mxu0 %v1505
      %v1949 = vpop.f32.mrb[0].mxu0
      %v1950 = vadd.f32 %v1725, %v1949
      %v1951 = vpop.f32.mrb[0].mxu0
      %1952 = vmatprep.mubr.f32.mxu0 0.0
      %1953 = vmatmul.mubr.f32.gmra.mrb[0].mxu0 %v1508
      %v1954 = vpop.f32.mrb[0].mxu0
      %v1955 = vadd.f32 %v1730, %v1954
      %v1956 = vpop.f32.mrb[0].mxu0
      %1957 = vmatprep.mubr.f32.mxu0 0.0
      %1958 = vmatmul.mubr.f32.gmra.mrb[0].mxu0 %v1511
      %v1959 = vpop.f32.mrb[0].mxu0
      %v1960 = vadd.f32 %v1735, %v1959
      %v1961 = vpop.f32.mrb[0].mxu0
      %1962 = vmatprep.mubr.f32.mxu0 0.0
      %1963 = vmatmul.mubr.f32.gmra.mrb[0].mxu0 %v1514
      %v1964 = vpop.f32.mrb[0].mxu0
      %v1965 = vadd.f32 %v1740, %v1964
      %v1966 = vpop.f32.mrb[0].mxu0
      %1967 = vmatprep.mubr.f32.mxu0 0.0
      %1968 = vmatmul.mubr.f32.gmra.mrb[0].mxu0 %v1517
      %v1969 = vpop.f32.mrb[0].mxu0
      %v1970 = vadd.f32 %v1745, %v1969
      %v1971 = vpop.f32.mrb[0].mxu0
      %1972 = vmatprep.mubr.f32.mxu0 0.0
      %1973 = vmatmul.mubr.f32.gmra.mrb[0].mxu0 %v1520
      %v1974 = vpop.f32.mrb[0].mxu0
      %v1975 = vadd.f32 %v1750, %v1974
      %v1976 = vpop.f32.mrb[0].mxu0
      %1977 = vmatprep.mubr.f32.mxu0 0.0
      %1978 = vmatmul.mubr.f32.gmra.mrb[0].mxu0 %v1523
      %v1979 = vpop.f32.mrb[0].mxu0
      %v1980 = vadd.f32 %v1755, %v1979
      %v1981 = vpop.f32.mrb[0].mxu0
      %1982 = vmatprep.mubr.f32.mxu0 0.0
      %1983 = vmatmul.mubr.f32.gmra.mrb[0].mxu0 %v1526
      %v1984 = vpop.f32.mrb[0].mxu0
      %v1985 = vadd.f32 %v1760, %v1984
      %v1986 = vpop.f32.mrb[0].mxu0
      %1987 = vmatprep.mubr.f32.mxu0 0.0
      %1988 = vmatmul.mubr.f32.gmra.mrb[0].mxu0 %v1529
      %v1989 = vpop.f32.mrb[0].mxu0
      %v1990 = vadd.f32 %v1765, %v1989
      %v1991 = vpop.f32.mrb[0].mxu0
      %1992 = vmatprep.mubr.f32.mxu0 0.0
      %1993 = vmatmul.mubr.f32.gmra.mrb[0].mxu0 %v1532
      %v1994 = vpop.f32.mrb[0].mxu0
      %v1995 = vadd.f32 %v1770, %v1994
      %v1996 = vpop.f32.mrb[0].mxu0
      %1997 = vmatprep.mubr.f32.mxu0 0.0
      %1998 = vmatmul.mubr.f32.gmra.mrb[0].mxu0 %v1535
      %v1999 = vpop.f32.mrb[0].mxu0
      %v2000 = vadd.f32 %v1775, %v1999
      %v2001 = vpop.f32.mrb[0].mxu0
      %2002 = vmatprep.mubr.f32.mxu0 0.0
      %2003 = vmatmul.mubr.f32.gmra.mrb[0].mxu0 %v1538
      %v2004 = vpop.f32.mrb[0].mxu0
      %v2005 = vadd.f32 %v1780, %v2004
      %v2006 = vpop.f32.mrb[0].mxu0
      %2007 = vmatprep.mubr.f32.mxu0 0.0
      %2008 = vmatmul.mubr.f32.gmra.mrb[0].mxu0 %v1541
      %v2009 = vpop.f32.mrb[0].mxu0
      %v2010 = vadd.f32 %v1785, %v2009
      %v2011 = vpop.f32.mrb[0].mxu0
      %2012 = vmatprep.mubr.f32.mxu0 0.0
      %2013 = vmatmul.mubr.f32.gmra.mrb[0].mxu0 %v1544
      %v2014 = vpop.f32.mrb[0].mxu0
      %v2015 = vadd.f32 %v1790, %v2014
      %v2016 = vpop.f32.mrb[0].mxu0
      %2017 = vmatprep.mubr.f32.mxu0 0.0
      %2018 = vmatmul.mubr.f32.gmra.mrb[0].mxu0 %v1547
      %v2019 = vpop.f32.mrb[0].mxu0
      %v2020 = vadd.f32 %v1795, %v2019
      %v2021 = vpop.f32.mrb[0].mxu0
      %2022 = vmatprep.mubr.f32.mxu0 0.0
      %2023 = vmatmul.mubr.f32.gmra.mrb[0].mxu0 %v1550
      %v2024 = vpop.f32.mrb[0].mxu0
      %v2025 = vadd.f32 %v1800, %v2024
      %v2026 = vpop.f32.mrb[0].mxu0
      %2027 = vmatprep.mubr.f32.mxu0 0.0
      %2028 = vmatmul.mubr.f32.gmra.mrb[0].mxu0 %v1553
      %v2029 = vpop.f32.mrb[0].mxu0
      %v2030 = vadd.f32 %v1805, %v2029
      %v2031 = vpop.f32.mrb[0].mxu0
      %2032 = vmatprep.mubr.f32.mxu0 0.0
      %2033 = vmatmul.mubr.f32.gmra.mrb[0].mxu0 %v1556
      %v2034 = vpop.f32.mrb[0].mxu0
      %v2035 = vadd.f32 %v1810, %v2034
      %v2036 = vpop.f32.mrb[0].mxu0
      %2037 = vmatprep.mubr.f32.mxu0 0.0
      %2038 = vmatmul.mubr.f32.gmra.mrb[0].mxu0 %v1559
      %v2039 = vpop.f32.mrb[0].mxu0
      %v2040 = vadd.f32 %v1815, %v2039
      %v2041 = vpop.f32.mrb[0].mxu0
      %2042 = vmatprep.mubr.f32.mxu0 0.0
      %2043 = vmatmul.mubr.f32.gmra.mrb[0].mxu0 %v1562
      %v2044 = vpop.f32.mrb[0].mxu0
      %v2045 = vadd.f32 %v1820, %v2044
      %v2046 = vpop.f32.mrb[0].mxu0
      %2047 = vmatprep.mubr.f32.mxu0 0.0
      %2048 = vmatmul.mubr.f32.gmra.mrb[0].mxu0 %v1565
      %v2049 = vpop.f32.mrb[0].mxu0
      %v2050 = vadd.f32 %v1825, %v2049
      %v2051 = vpop.f32.mrb[0].mxu0
      %2052 = vmatprep.mubr.f32.mxu0 0.0
      %2053 = vmatmul.mubr.f32.gmra.mrb[0].mxu0 %v1568
      %v2054 = vpop.f32.mrb[0].mxu0
      %v2055 = vadd.f32 %v1830, %v2054
      %v2056 = vpop.f32.mrb[0].mxu0
      %2057 = vmatprep.mubr.f32.mxu0 0.0
      %2058 = vmatmul.mubr.f32.gmra.mrb[0].mxu0 %v1571
      %v2059 = vpop.f32.mrb[0].mxu0
      %v2060 = vadd.f32 %v1835, %v2059
      %v2061 = vpop.f32.mrb[0].mxu0
      %2062 = vmatprep.mubr.f32.mxu0 0.0
      %2063 = vmatmul.mubr.f32.gmra.mrb[0].mxu0 %v1574
      %v2064 = vpop.f32.mrb[0].mxu0
      %v2065 = vadd.f32 %v1840, %v2064
      %v2066 = vpop.f32.mrb[0].mxu0
      %2067 = vmatprep.mubr.f32.mxu0 0.0
      %2068 = vmatmul.mubr.f32.gmra.mrb[0].mxu0 %v1577
      %v2069 = vpop.f32.mrb[0].mxu0
      %v2070 = vadd.f32 %v1845, %v2069
      %v2071 = vpop.f32.mrb[0].mxu0
      %2072 = vmatprep.mubr.f32.mxu0 0.0
      %2073 = vmatmul.mubr.f32.gmra.mrb[0].mxu0 %v1580
      %v2074 = vpop.f32.mrb[0].mxu0
      %v2075 = vadd.f32 %v1850, %v2074
      %v2076 = vpop.f32.mrb[0].mxu0
      %2077 = vmatprep.mubr.f32.mxu0 0.0
      %2078 = vmatmul.mubr.f32.gmra.mrb[0].mxu0 %v1583
      %v2079 = vpop.f32.mrb[0].mxu0
      %v2080 = vadd.f32 %v1855, %v2079
      %v2081 = vpop.f32.mrb[0].mxu0
      %2082 = vdwg.mxu0
      %v2083 = vld [vmem:[#allocation2] sm:$0xff]
      %v2084 = vld [vmem:[#allocation2 + $0x8] sm:$0xff]
      %v2085 = vld [vmem:[#allocation2 + $0x10] sm:$0xff]
      %v2086 = vld [vmem:[#allocation2 + $0x18] sm:$0xff]
      %v2087 = vld [vmem:[#allocation2 + $0x20] sm:$0xff]
      %v2088 = vld [vmem:[#allocation2 + $0x28] sm:$0xff]
      %v2089 = vld [vmem:[#allocation2 + $0x30] sm:$0xff]
      %v2090 = vld [vmem:[#allocation2 + $0x38] sm:$0xff]
      %v2091 = vld [vmem:[#allocation2 + $0x40] sm:$0xff]
      %v2092 = vld [vmem:[#allocation2 + $0x48] sm:$0xff]
      %v2093 = vld [vmem:[#allocation2 + $0x50] sm:$0xff]
      %v2094 = vld [vmem:[#allocation2 + $0x58] sm:$0xff]
      %v2095 = vld [vmem:[#allocation2 + $0x60] sm:$0xff]
      %v2096 = vld [vmem:[#allocation2 + $0x68] sm:$0xff]
      %v2097 = vld [vmem:[#allocation2 + $0x70] sm:$0xff]
      %v2098 = vld [vmem:[#allocation2 + $0x78] sm:$0xff]
      %v2099 = vld [vmem:[#allocation2 + $0x80] sm:$0xff]
      %v2100 = vld [vmem:[#allocation2 + $0x88] sm:$0xff]
      %v2101 = vld [vmem:[#allocation2 + $0x90] sm:$0xff]
      %v2102 = vld [vmem:[#allocation2 + $0x98] sm:$0xff]
      %v2103 = vld [vmem:[#allocation2 + $0xa0] sm:$0xff]
      %v2104 = vld [vmem:[#allocation2 + $0xa8] sm:$0xff]
      %v2105 = vld [vmem:[#allocation2 + $0xb0] sm:$0xff]
      %v2106 = vld [vmem:[#allocation2 + $0xb8] sm:$0xff]
      %v2107 = vld [vmem:[#allocation2 + $0xc0] sm:$0xff]
      %v2108 = vld [vmem:[#allocation2 + $0xc8] sm:$0xff]
      %v2109 = vld [vmem:[#allocation2 + $0xd0] sm:$0xff]
      %v2110 = vld [vmem:[#allocation2 + $0xd8] sm:$0xff]
      %v2111 = vld [vmem:[#allocation2 + $0xe0] sm:$0xff]
      %v2112 = vld [vmem:[#allocation2 + $0xe8] sm:$0xff]
      %v2113 = vld [vmem:[#allocation2 + $0xf0] sm:$0xff]
      %v2114 = vld [vmem:[#allocation2 + $0xf8] sm:$0xff]
      %v2115 = vadd.f32 %v2083, %v1925
      %v2116 = vadd.f32 %v2084, %v1930
      %v2117 = vadd.f32 %v2085, %v1935
      %v2118 = vadd.f32 %v2086, %v1940
      %v2119 = vadd.f32 %v2087, %v1945
      %v2120 = vadd.f32 %v2088, %v1950
      %v2121 = vadd.f32 %v2089, %v1955
      %v2122 = vadd.f32 %v2090, %v1960
      %v2123 = vadd.f32 %v2091, %v1965
      %v2124 = vadd.f32 %v2092, %v1970
      %v2125 = vadd.f32 %v2093, %v1975
      %v2126 = vadd.f32 %v2094, %v1980
      %v2127 = vadd.f32 %v2095, %v1985
      %v2128 = vadd.f32 %v2096, %v1990
      %v2129 = vadd.f32 %v2097, %v1995
      %v2130 = vadd.f32 %v2098, %v2000
      %v2131 = vadd.f32 %v2099, %v2005
      %v2132 = vadd.f32 %v2100, %v2010
      %v2133 = vadd.f32 %v2101, %v2015
      %v2134 = vadd.f32 %v2102, %v2020
      %v2135 = vadd.f32 %v2103, %v2025
      %v2136 = vadd.f32 %v2104, %v2030
      %v2137 = vadd.f32 %v2105, %v2035
      %v2138 = vadd.f32 %v2106, %v2040
      %v2139 = vadd.f32 %v2107, %v2045
      %v2140 = vadd.f32 %v2108, %v2050
      %v2141 = vadd.f32 %v2109, %v2055
      %v2142 = vadd.f32 %v2110, %v2060
      %v2143 = vadd.f32 %v2111, %v2065
      %v2144 = vadd.f32 %v2112, %v2070
      %v2145 = vadd.f32 %v2113, %v2075
      %v2146 = vadd.f32 %v2114, %v2080
      %2147 = vst [vmem:[#allocation2] sm:$0xff] %v2115
      %2148 = vst [vmem:[#allocation2 + $0x8] sm:$0xff] %v2116
      %2149 = vst [vmem:[#allocation2 + $0x10] sm:$0xff] %v2117
      %2150 = vst [vmem:[#allocation2 + $0x18] sm:$0xff] %v2118
      %2151 = vst [vmem:[#allocation2 + $0x20] sm:$0xff] %v2119
      %2152 = vst [vmem:[#allocation2 + $0x28] sm:$0xff] %v2120
      %2153 = vst [vmem:[#allocation2 + $0x30] sm:$0xff] %v2121
      %2154 = vst [vmem:[#allocation2 + $0x38] sm:$0xff] %v2122
      %2155 = vst [vmem:[#allocation2 + $0x40] sm:$0xff] %v2123
      %2156 = vst [vmem:[#allocation2 + $0x48] sm:$0xff] %v2124
      %2157 = vst [vmem:[#allocation2 + $0x50] sm:$0xff] %v2125
      %2158 = vst [vmem:[#allocation2 + $0x58] sm:$0xff] %v2126
      %2159 = vst [vmem:[#allocation2 + $0x60] sm:$0xff] %v2127
      %2160 = vst [vmem:[#allocation2 + $0x68] sm:$0xff] %v2128
      %2161 = vst [vmem:[#allocation2 + $0x70] sm:$0xff] %v2129
      %2162 = vst [vmem:[#allocation2 + $0x78] sm:$0xff] %v2130
      %2163 = vst [vmem:[#allocation2 + $0x80] sm:$0xff] %v2131
      %2164 = vst [vmem:[#allocation2 + $0x88] sm:$0xff] %v2132
      %2165 = vst [vmem:[#allocation2 + $0x90] sm:$0xff] %v2133
      %2166 = vst [vmem:[#allocation2 + $0x98] sm:$0xff] %v2134
      %2167 = vst [vmem:[#allocation2 + $0xa0] sm:$0xff] %v2135
      %2168 = vst [vmem:[#allocation2 + $0xa8] sm:$0xff] %v2136
      %2169 = vst [vmem:[#allocation2 + $0xb0] sm:$0xff] %v2137
      %2170 = vst [vmem:[#allocation2 + $0xb8] sm:$0xff] %v2138
      %2171 = vst [vmem:[#allocation2 + $0xc0] sm:$0xff] %v2139
      %2172 = vst [vmem:[#allocation2 + $0xc8] sm:$0xff] %v2140
      %2173 = vst [vmem:[#allocation2 + $0xd0] sm:$0xff] %v2141
      %2174 = vst [vmem:[#allocation2 + $0xd8] sm:$0xff] %v2142
      %2175 = vst [vmem:[#allocation2 + $0xe0] sm:$0xff] %v2143
      %2176 = vst [vmem:[#allocation2 + $0xe8] sm:$0xff] %v2144
      %2177 = vst [vmem:[#allocation2 + $0xf0] sm:$0xff] %v2145
      %2178 = vst [vmem:[#allocation2 + $0xf8] sm:$0xff] %v2146
      %v2179 = vld [vmem:[#allocation2] sm:$0xff]
      %v2180 = vld [vmem:[#allocation2 + $0x8] sm:$0xff]
      %v2181 = vld [vmem:[#allocation2 + $0x10] sm:$0xff]
      %v2182 = vld [vmem:[#allocation2 + $0x18] sm:$0xff]
      %v2183 = vld [vmem:[#allocation2 + $0x20] sm:$0xff]
      %v2184 = vld [vmem:[#allocation2 + $0x28] sm:$0xff]
      %v2185 = vld [vmem:[#allocation2 + $0x30] sm:$0xff]
      %v2186 = vld [vmem:[#allocation2 + $0x38] sm:$0xff]
      %v2187 = vld [vmem:[#allocation2 + $0x40] sm:$0xff]
      %v2188 = vld [vmem:[#allocation2 + $0x48] sm:$0xff]
      %v2189 = vld [vmem:[#allocation2 + $0x50] sm:$0xff]
      %v2190 = vld [vmem:[#allocation2 + $0x58] sm:$0xff]
      %v2191 = vld [vmem:[#allocation2 + $0x60] sm:$0xff]
      %v2192 = vld [vmem:[#allocation2 + $0x68] sm:$0xff]
      %v2193 = vld [vmem:[#allocation2 + $0x70] sm:$0xff]
      %v2194 = vld [vmem:[#allocation2 + $0x78] sm:$0xff]
      %v2195 = vld [vmem:[#allocation2 + $0x80] sm:$0xff]
      %v2196 = vld [vmem:[#allocation2 + $0x88] sm:$0xff]
      %v2197 = vld [vmem:[#allocation2 + $0x90] sm:$0xff]
      %v2198 = vld [vmem:[#allocation2 + $0x98] sm:$0xff]
      %v2199 = vld [vmem:[#allocation2 + $0xa0] sm:$0xff]
      %v2200 = vld [vmem:[#allocation2 + $0xa8] sm:$0xff]
      %v2201 = vld [vmem:[#allocation2 + $0xb0] sm:$0xff]
      %v2202 = vld [vmem:[#allocation2 + $0xb8] sm:$0xff]
      %v2203 = vld [vmem:[#allocation2 + $0xc0] sm:$0xff]
      %v2204 = vld [vmem:[#allocation2 + $0xc8] sm:$0xff]
      %v2205 = vld [vmem:[#allocation2 + $0xd0] sm:$0xff]
      %v2206 = vld [vmem:[#allocation2 + $0xd8] sm:$0xff]
      %v2207 = vld [vmem:[#allocation2 + $0xe0] sm:$0xff]
      %v2208 = vld [vmem:[#allocation2 + $0xe8] sm:$0xff]
      %v2209 = vld [vmem:[#allocation2 + $0xf0] sm:$0xff]
      %v2210 = vld [vmem:[#allocation2 + $0xf8] sm:$0xff]
      %v2211 = vld [vmem:[%s2] sm:$0x1]
      %v2213 = vlaneseq
      %v2214 = vshrl.u32 %v2213, 7
      %v2215 = vsub.s32 0, %v2214
      %v2216 = vrot.slane %v2211, %v2215
      %v2218 = vadd.f32 %v2179, %v2216
      %v2219 = vadd.f32 %v2180, %v2216
      %v2220 = vadd.f32 %v2181, %v2216
      %v2221 = vadd.f32 %v2182, %v2216
      %v2222 = vadd.f32 %v2183, %v2216
      %v2223 = vadd.f32 %v2184, %v2216
      %v2224 = vadd.f32 %v2185, %v2216
      %v2225 = vadd.f32 %v2186, %v2216
      %v2226 = vadd.f32 %v2187, %v2216
      %v2227 = vadd.f32 %v2188, %v2216
      %v2228 = vadd.f32 %v2189, %v2216
      %v2229 = vadd.f32 %v2190, %v2216
      %v2230 = vadd.f32 %v2191, %v2216
      %v2231 = vadd.f32 %v2192, %v2216
      %v2232 = vadd.f32 %v2193, %v2216
      %v2233 = vadd.f32 %v2194, %v2216
      %v2234 = vadd.f32 %v2195, %v2216
      %v2235 = vadd.f32 %v2196, %v2216
      %v2236 = vadd.f32 %v2197, %v2216
      %v2237 = vadd.f32 %v2198, %v2216
      %v2238 = vadd.f32 %v2199, %v2216
      %v2239 = vadd.f32 %v2200, %v2216
      %v2240 = vadd.f32 %v2201, %v2216
      %v2241 = vadd.f32 %v2202, %v2216
      %v2242 = vadd.f32 %v2203, %v2216
      %v2243 = vadd.f32 %v2204, %v2216
      %v2244 = vadd.f32 %v2205, %v2216
      %v2245 = vadd.f32 %v2206, %v2216
      %v2246 = vadd.f32 %v2207, %v2216
      %v2247 = vadd.f32 %v2208, %v2216
      %v2248 = vadd.f32 %v2209, %v2216
      %v2249 = vadd.f32 %v2210, %v2216
      %v2250 = vmax.f32 %v2218, 0.0
      %v2251 = vmax.f32 %v2219, 0.0
      %v2252 = vmax.f32 %v2220, 0.0
      %v2253 = vmax.f32 %v2221, 0.0
      %v2254 = vmax.f32 %v2222, 0.0
      %v2255 = vmax.f32 %v2223, 0.0
      %v2256 = vmax.f32 %v2224, 0.0
      %v2257 = vmax.f32 %v2225, 0.0
      %v2258 = vmax.f32 %v2226, 0.0
      %v2259 = vmax.f32 %v2227, 0.0
      %v2260 = vmax.f32 %v2228, 0.0
      %v2261 = vmax.f32 %v2229, 0.0
      %v2262 = vmax.f32 %v2230, 0.0
      %v2263 = vmax.f32 %v2231, 0.0
      %v2264 = vmax.f32 %v2232, 0.0
      %v2265 = vmax.f32 %v2233, 0.0
      %v2266 = vmax.f32 %v2234, 0.0
      %v2267 = vmax.f32 %v2235, 0.0
      %v2268 = vmax.f32 %v2236, 0.0
      %v2269 = vmax.f32 %v2237, 0.0
      %v2270 = vmax.f32 %v2238, 0.0
      %v2271 = vmax.f32 %v2239, 0.0
      %v2272 = vmax.f32 %v2240, 0.0
      %v2273 = vmax.f32 %v2241, 0.0
      %v2274 = vmax.f32 %v2242, 0.0
      %v2275 = vmax.f32 %v2243, 0.0
      %v2276 = vmax.f32 %v2244, 0.0
      %v2277 = vmax.f32 %v2245, 0.0
      %v2278 = vmax.f32 %v2246, 0.0
      %v2279 = vmax.f32 %v2247, 0.0
      %v2280 = vmax.f32 %v2248, 0.0
      %v2281 = vmax.f32 %v2249, 0.0
      %2282 = vst [vmem:[%s170] sm:$0xff] %v2250
      %2283 = vst [vmem:[%s170 + $0x8] sm:$0xff] %v2251
      %2284 = vst [vmem:[%s170 + $0x10] sm:$0xff] %v2252
      %2285 = vst [vmem:[%s170 + $0x18] sm:$0xff] %v2253
      %2286 = vst [vmem:[%s170 + $0x20] sm:$0xff] %v2254
      %2287 = vst [vmem:[%s170 + $0x28] sm:$0xff] %v2255
      %2288 = vst [vmem:[%s170 + $0x30] sm:$0xff] %v2256
      %2289 = vst [vmem:[%s170 + $0x38] sm:$0xff] %v2257
      %2290 = vst [vmem:[%s170 + $0x40] sm:$0xff] %v2258
      %2291 = vst [vmem:[%s170 + $0x48] sm:$0xff] %v2259
      %2292 = vst [vmem:[%s170 + $0x50] sm:$0xff] %v2260
      %2293 = vst [vmem:[%s170 + $0x58] sm:$0xff] %v2261
      %2294 = vst [vmem:[%s170 + $0x60] sm:$0xff] %v2262
      %2295 = vst [vmem:[%s170 + $0x68] sm:$0xff] %v2263
      %2296 = vst [vmem:[%s170 + $0x70] sm:$0xff] %v2264
      %2297 = vst [vmem:[%s170 + $0x78] sm:$0xff] %v2265
      %2298 = vst [vmem:[%s170 + $0x80] sm:$0xff] %v2266
      %2299 = vst [vmem:[%s170 + $0x88] sm:$0xff] %v2267
      %2300 = vst [vmem:[%s170 + $0x90] sm:$0xff] %v2268
      %2301 = vst [vmem:[%s170 + $0x98] sm:$0xff] %v2269
      %2302 = vst [vmem:[%s170 + $0xa0] sm:$0xff] %v2270
      %2303 = vst [vmem:[%s170 + $0xa8] sm:$0xff] %v2271
      %2304 = vst [vmem:[%s170 + $0xb0] sm:$0xff] %v2272
      %2305 = vst [vmem:[%s170 + $0xb8] sm:$0xff] %v2273
      %2306 = vst [vmem:[%s170 + $0xc0] sm:$0xff] %v2274
      %2307 = vst [vmem:[%s170 + $0xc8] sm:$0xff] %v2275
      %2308 = vst [vmem:[%s170 + $0xd0] sm:$0xff] %v2276
      %2309 = vst [vmem:[%s170 + $0xd8] sm:$0xff] %v2277
      %2310 = vst [vmem:[%s170 + $0xe0] sm:$0xff] %v2278
      %2311 = vst [vmem:[%s170 + $0xe8] sm:$0xff] %v2279
      %2312 = vst [vmem:[%s170 + $0xf0] sm:$0xff] %v2280
      %2313 = vst [vmem:[%s170 + $0xf8] sm:$0xff] %v2281
      %p2314 = scmp.lt.s32.totalorder %s14, 1
      %s2315 = scalar_select %p2314, %s14, 1
      %s2316 = smul.addr %s2315, 32
      %s2317 = smul.addr %s2316, 8
      %s2318 = scalar_lea.vmem %s3, %s2317
      // Predicated region
      $region33: #{conv_block_forward.3} parent=31 // pred_check
        %p2319 = pneg %p100
      $region34: #{conv_block_forward.3} parent=31 // pred_check_branch
        %2321 = sbr.rel (%p2319) target = $region36
      $region35: #{conv_block_forward.3} parent=31 // pred_region
        _
      $region36: #{conv_block_forward.3} parent=31 // pred_fallthru
        _
    $region32: #{conv_block_forward.3} parent=5 // pred_fallthru
      _
    %p2322 = scmp.le.s32.totalorder 2, %s9
    // Predicated region
    $region37: #{conv_block_forward.3} parent=5 // pred_check
      %p2323 = pneg %p2322
    $region38: #{conv_block_forward.3} parent=5 // pred_check_branch
      %2325 = sbr.rel (%p2323) target = $region40
    $region39: #{conv_block_forward.3} parent=5 // pred_region
      %s2326 = ssub.s32 %s9, 2
      // Predicated region
      $region41: #{conv_block_forward.3} parent=39 // pred_check
        %p2327 = pneg %p106
      $region42: #{conv_block_forward.3} parent=39 // pred_check_branch
        %2329 = sbr.rel (%p2327) target = $region44
      $region43: #{conv_block_forward.3} parent=39 // pred_region
        %p2330 = scmp.lt.s32.totalorder %s15, 1
        %s2331 = scalar_select %p2330, %s15, 1
        %s2332 = smul.addr %s2331, 32
        %s2333 = smul.addr %s2332, 8
        %s2334 = scalar_lea.vmem %s3, %s2333
      $region44: #{conv_block_forward.3} parent=39 // pred_fallthru
        _
    $region40: #{conv_block_forward.3} parent=5 // pred_fallthru
      _
  $region6: #{conv_block_forward.3} parent=0 // loop_footer
    %s13 = sadd.s32 1, %s9
  $region7: #{conv_block_forward.3} parent=0 // loop_footer_branch
    %8 = sbr.rel target = $region3
  $region8: #{conv_block_forward.3} parent=0 // loop_exit
    _

</llo_original>
